<compile_context>
chip_gen: v7x
topology: tpu7x:2x2x1
jax: 0.10.0
libtpu: 0.0.40
codegen_flags: <defaults>
</compile_context>

<pallas_src>
import functools

import jax
import jax.numpy as jnp
from jax.experimental import pallas as pl
from jax.experimental.pallas import tpu as pltpu


_CNUM = 64
# (cin, cout, kernel, stride, pad) for the 5 conv layers of LocalCritic.
_LAYER_CONFIGS = [
    (3, _CNUM, 5, 2, 2),
    (_CNUM, _CNUM * 2, 5, 2, 2),
    (_CNUM * 2, _CNUM * 4, 5, 2, 2),
    (_CNUM * 4, _CNUM * 8, 5, 2, 2),
    (_CNUM * 8, 1, 1, 1, 0),
]


def _round_up(x, m):
    return (x + m - 1) // m * m


def _pick_tk(kp):
    """Largest of {512, 256, 128} that divides kp (kp is a multiple of 128)."""
    for t in (512, 256, 128):
        if kp % t == 0:
            return t
    return 128


def _pick_tm(m):
    """M tile: multiple of 8, at most 512 (amortizes per-step overhead)."""
    return min(512, _round_up(m, 8))


def _vmem_limit(tile_bytes):
    """Footprint-derived VMEM limit with headroom, capped below v7x's 64 MiB."""
    return int(min(48 * 1024 * 1024, max(16 * 1024 * 1024, 8 * tile_bytes)))


# ---------------------------------------------------------------------------
# Kernels
# ---------------------------------------------------------------------------
def _mm_bias_act_kernel(x_ref, w_ref, b_ref, o_ref, acc_ref, *, negative_slope):
    """Tiled matmul, f32 accumulator; bias + LeakyReLU only when k == last."""
    @pl.when(pl.program_id(2) == 0)
    def _init():
        acc_ref[...] = jnp.zeros_like(acc_ref)

    acc_ref[...] += jnp.dot(x_ref[...], w_ref[...],
                            preferred_element_type=jnp.float32)

    @pl.when(pl.program_id(2) == pl.num_programs(2) - 1)
    def _finalize():
        acc = acc_ref[...] + b_ref[...]
        if negative_slope is not None:
            acc = jnp.where(acc >= 0.0, acc, negative_slope * acc)
        o_ref[...] = acc.astype(o_ref.dtype)


def _mm_fused_head_kernel(x_ref, w_ref, b_ref, w2_ref, b2_ref, o_ref, acc_ref,
                          *, negative_slope):
    """Layer-4 matmul; epilogue fuses LeakyReLU + the 1x1-conv head (layer 5)."""
    @pl.when(pl.program_id(1) == 0)
    def _init():
        acc_ref[...] = jnp.zeros_like(acc_ref)

    acc_ref[...] += jnp.dot(x_ref[...], w_ref[...],
                            preferred_element_type=jnp.float32)

    @pl.when(pl.program_id(1) == pl.num_programs(1) - 1)
    def _finalize():
        h = acc_ref[...] + b_ref[...]
        h = jnp.where(h >= 0.0, h, negative_slope * h)
        out = jnp.dot(h.astype(jnp.bfloat16), w2_ref[...],
                      preferred_element_type=jnp.float32)
        o_ref[...] = (out + b2_ref[...]).astype(o_ref.dtype)


# ---------------------------------------------------------------------------
# Pallas wrappers
# ---------------------------------------------------------------------------
def _matmul_bias_act(patches, wp, bp, *, negative_slope, out_dtype):
    """patches (M,K) bf16, wp (Kp,Np) bf16, bp (1,Np) f32 -> (M,Np) out_dtype."""
    m, k = patches.shape
    kp, np_ = wp.shape
    tm = _pick_tm(m)
    mp = _round_up(m, tm)
    tn = 256 if np_ % 256 == 0 else 128
    tk = _pick_tk(kp)
    if (mp, kp) != (m, k):
        patches = jnp.pad(patches, ((0, mp - m), (0, kp - k)))

    grid = (mp // tm, np_ // tn, kp // tk)
    xb = patches.dtype.itemsize
    wb = wp.dtype.itemsize
    ob = jnp.dtype(out_dtype).itemsize
    tile_bytes = (2 * tm * tk * xb + 2 * tk * tn * wb + 2 * tn * 4
                  + 2 * tm * tn * ob + tm * tn * 4)
    cost = pl.CostEstimate(
        flops=2 * mp * np_ * kp,
        transcendentals=0,
        bytes_accessed=mp * kp * xb + kp * np_ * wb + np_ * 4 + mp * np_ * ob)

    out = pl.pallas_call(
        functools.partial(_mm_bias_act_kernel, negative_slope=negative_slope),
        out_shape=jax.ShapeDtypeStruct((mp, np_), out_dtype),
        grid_spec=pltpu.PrefetchScalarGridSpec(
            num_scalar_prefetch=0,
            grid=grid,
            in_specs=[
                pl.BlockSpec((tm, tk), lambda i, j, kk: (i, kk)),
                pl.BlockSpec((tk, tn), lambda i, j, kk: (kk, j)),
                pl.BlockSpec((1, tn), lambda i, j, kk: (0, j)),
            ],
            out_specs=pl.BlockSpec((tm, tn), lambda i, j, kk: (i, j)),
            scratch_shapes=[pltpu.VMEM((tm, tn), jnp.float32)],
        ),
        compiler_params=pltpu.CompilerParams(
            dimension_semantics=("parallel", "parallel", "arbitrary"),
            vmem_limit_bytes=_vmem_limit(tile_bytes)),
        cost_estimate=cost,
    )(patches, wp, bp)
    return out[:m]


def _matmul_fused_head(patches, wp, bp, wp2, bp2, *, negative_slope):
    """Layer-4 matmul + bias + LeakyReLU, fused with the 1x1-conv head."""
    m, k = patches.shape
    kp, nh = wp.shape
    _, nf = wp2.shape
    tm = _pick_tm(m)
    mp = _round_up(m, tm)
    tk = _pick_tk(kp)
    if (mp, kp) != (m, k):
        patches = jnp.pad(patches, ((0, mp - m), (0, kp - k)))

    grid = (mp // tm, kp // tk)
    tile_bytes = (2 * tm * tk * 2 + 2 * tk * nh * 2 + 2 * nh * 4
                  + nh * nf * 2 + nf * 4 + 2 * tm * nf * 4 + tm * nh * 4)
    cost = pl.CostEstimate(
        flops=2 * mp * nh * kp + 2 * mp * nf * nh,
        transcendentals=0,
        bytes_accessed=mp * kp * 2 + kp * nh * 2 + nh * nf * 2 + mp * nf * 4)

    out = pl.pallas_call(
        functools.partial(_mm_fused_head_kernel, negative_slope=negative_slope),
        out_shape=jax.ShapeDtypeStruct((mp, nf), jnp.float32),
        grid_spec=pltpu.PrefetchScalarGridSpec(
            num_scalar_prefetch=0,
            grid=grid,
            in_specs=[
                pl.BlockSpec((tm, tk), lambda i, kk: (i, kk)),
                pl.BlockSpec((tk, nh), lambda i, kk: (kk, 0)),
                pl.BlockSpec((1, nh), lambda i, kk: (0, 0)),
                pl.BlockSpec((nh, nf), lambda i, kk: (0, 0)),
                pl.BlockSpec((1, nf), lambda i, kk: (0, 0)),
            ],
            out_specs=pl.BlockSpec((tm, nf), lambda i, kk: (i, 0)),
            scratch_shapes=[pltpu.VMEM((tm, nh), jnp.float32)],
        ),
        compiler_params=pltpu.CompilerParams(
            dimension_semantics=("parallel", "arbitrary"),
            vmem_limit_bytes=_vmem_limit(tile_bytes)),
        cost_estimate=cost,
    )(patches, wp, bp, wp2, bp2)
    return out[:m]


# ---------------------------------------------------------------------------
# Conv glue (im2col in bf16) + forward
# ---------------------------------------------------------------------------
def _im2col(x_nhwc, kh, kw, stride, pad):
    """(N,H,W,Cin) -> patches (N*OH*OW, kh*kw*Cin) ordered (ky, kx, cin)."""
    n, h, w, cin = x_nhwc.shape
    oh = (h + 2 * pad - kh) // stride + 1
    ow = (w + 2 * pad - kw) // stride + 1
    xp = x_nhwc if pad == 0 else jnp.pad(
        x_nhwc, ((0, 0), (pad, pad), (pad, pad), (0, 0)))
    cols = []
    for ky in range(kh):
        for kx in range(kw):
            cols.append(
                xp[:, ky:ky + stride * oh:stride, kx:kx + stride * ow:stride, :])
    patches = jnp.stack(cols, axis=3).reshape(n * oh * ow, kh * kw * cin)
    return patches, oh, ow


def _conv_block(x_nhwc, wp, bp, cfg, *, negative_slope):
    _, cout, k, stride, pad = cfg
    n = x_nhwc.shape[0]
    patches, oh, ow = _im2col(x_nhwc, k, k, stride, pad)
    out = _matmul_bias_act(patches, wp, bp, negative_slope=negative_slope,
                           out_dtype=jnp.bfloat16)
    return out[:, :cout].reshape(n, oh, ow, cout)


def _conv_block_fused_head(x_nhwc, wp4, bp4, wp5, bp5, cfg4, *, negative_slope):
    _, _, k, stride, pad = cfg4
    n = x_nhwc.shape[0]
    patches, oh, ow = _im2col(x_nhwc, k, k, stride, pad)
    out = _matmul_fused_head(patches, wp4, bp4, wp5, bp5,
                             negative_slope=negative_slope)
    return out[:, :1].reshape(n, oh, ow, 1)


def init_local_critic_params(key):
    """Deterministic init matching the PyTorch module's parameter shapes."""
    params = []
    for cin, cout, k, _, _ in _LAYER_CONFIGS:
        key, kw_, kb_ = jax.random.split(key, 3)
        fan_in = cin * k * k
        bound = 1.0 / jnp.sqrt(jnp.float32(fan_in))
        w = jax.random.uniform(kw_, (cout, cin, k, k), jnp.float32, -bound, bound)
        b = jax.random.uniform(kb_, (cout,), jnp.float32, -bound, bound)
        params.append((w, b))
    return params


def prepare_params(params):
    """One-time prep: transpose to (K,Cout), pad to lane multiples, cast bf16."""
    prepped = []
    for w, b in params:
        cout, cin, kh, kw = w.shape
        k = kh * kw * cin
        kp = _round_up(k, 128)
        np_ = _round_up(cout, 128)
        wmat = jnp.transpose(w, (2, 3, 1, 0)).reshape(k, cout).astype(jnp.bfloat16)
        wp = jnp.zeros((kp, np_), jnp.bfloat16).at[:k, :cout].set(wmat)
        bp = jnp.zeros((1, np_), jnp.float32).at[0, :cout].set(b)
        prepped.append((wp, bp))
    return prepped


@jax.jit
def local_critic_forward(x_nchw, prepped):
    """Input NCHW (PyTorch convention) -> output NCHW, matching LocalCritic."""
    x = jnp.transpose(x_nchw, (0, 2, 3, 1)).astype(jnp.bfloat16)  # NCHW -> NHWC
    for i in range(3):
        wp, bp = prepped[i]
        x = _conv_block(x, wp, bp, _LAYER_CONFIGS[i], negative_slope=0.2)
    wp4, bp4 = prepped[3]
    wp5, bp5 = prepped[4]
    x = _conv_block_fused_head(x, wp4, bp4, wp5, bp5, _LAYER_CONFIGS[3],
                               negative_slope=0.2)
    return jnp.transpose(x, (0, 3, 1, 2))  # NHWC -> NCHW, f32


def _reference_forward(x_nchw, params):
    """Pure-JAX (lax.conv, f32) reference for correctness checking."""
    x = x_nchw
    for i, (w, b) in enumerate(params):
        _, _, _, stride, pad = _LAYER_CONFIGS[i]
        x = jax.lax.conv_general_dilated(
            x, w, window_strides=(stride, stride),
            padding=((pad, pad), (pad, pad)),
            dimension_numbers=("NCHW", "OIHW", "NCHW"),
        ) + b[None, :, None, None]
        if i < 4:
            x = jnp.where(x >= 0.0, x, 0.2 * x)
    return x


if __name__ == "__main__":
    key = jax.random.PRNGKey(0)
    key, kx = jax.random.split(key)
    # Small input: batch=2, 3 channels, 32x32 spatial -> output (2, 1, 2, 2).
    x = jax.random.normal(kx, (2, 3, 32, 32), jnp.float32)

    params = init_local_critic_params(key)
    prepped = prepare_params(params)

    out = jax.block_until_ready(local_critic_forward(x, prepped))
    assert out.shape == (2, 1, 2, 2), out.shape

    ref = jax.block_until_ready(_reference_forward(x, params))
    # bf16 operands with f32 accumulation through 5 layers.
    assert jnp.allclose(out, ref, rtol=5e-2, atol=5e-2), (
        float(jnp.max(jnp.abs(out - ref))))

    print("KERNEL_OK")
</pallas_src>

<mosaic_0001>
module attributes {stable_mosaic.version = 11 : i64} {
  func.func @_mm_bias_act_kernel(%arg0: i32, %arg1: i32, %arg2: i32, %arg3: memref<512x128xbf16, #tpu.memory_space<vmem>>, %arg4: memref<128x128xbf16, #tpu.memory_space<vmem>>, %arg5: memref<1x128xf32, #tpu.memory_space<vmem>>, %arg6: memref<512x128xbf16, #tpu.memory_space<vmem>>, %arg7: memref<512x128xf32, #tpu.memory_space<vmem>>) attributes {dimension_semantics = [#tpu.dimension_semantics<parallel>, #tpu.dimension_semantics<parallel>, #tpu.dimension_semantics<arbitrary>], iteration_bounds = array<i64: 1, 1, 1>, scalar_prefetch = 0 : i64, scratch_operands = 1 : i64, tpu.core_type = #tpu.core_type<tc>, window_params = [{transform_indices = @transform_0, window_bounds = array<i64: 512, 128>}, {transform_indices = @transform_1, window_bounds = array<i64: 128, 128>}, {transform_indices = @transform_2, window_bounds = array<i64: 1, 128>}, {transform_indices = @transform_3, window_bounds = array<i64: 512, 128>}]} {
    %c0_i32 = arith.constant 0 : i32
    %0 = arith.cmpi eq, %arg2, %c0_i32 : i32
    %1 = arith.extui %0 : i1 to i32
    %c0_i32_0 = arith.constant 0 : i32
    %2 = arith.cmpi ne, %1, %c0_i32_0 : i32
    scf.if %2 {
      %cst_10 = arith.constant 0.000000e+00 : f32
      %12 = vector.broadcast %cst_10 : f32 to vector<512x128xf32>
      %c0_11 = arith.constant 0 : index
      %c0_12 = arith.constant 0 : index
      %13 = vector.load %arg7[%c0_11, %c0_12] : memref<512x128xf32, #tpu.memory_space<vmem>>, vector<512x128xf32>
      tpu.vector_store %arg7[%c0_11, %c0_12], %12 {strides = array<i32>} : memref<512x128xf32, #tpu.memory_space<vmem>>, vector<512x128xf32>,
    } else {
    }
    %c0 = arith.constant 0 : index
    %c0_1 = arith.constant 0 : index
    %3 = vector.load %arg7[%c0, %c0_1] : memref<512x128xf32, #tpu.memory_space<vmem>>, vector<512x128xf32>
    %c0_2 = arith.constant 0 : index
    %c0_3 = arith.constant 0 : index
    %4 = vector.load %arg3[%c0_2, %c0_3] : memref<512x128xbf16, #tpu.memory_space<vmem>>, vector<512x128xbf16>
    %c0_4 = arith.constant 0 : index
    %c0_5 = arith.constant 0 : index
    %5 = vector.load %arg4[%c0_4, %c0_5] : memref<128x128xbf16, #tpu.memory_space<vmem>>, vector<128x128xbf16>
    %cst = arith.constant dense<0.000000e+00> : vector<512x128xf32>
    %6 = tpu.matmul %4, %5, %cst {dimension_numbers = #tpu.dot_dimension_numbers<[1], [0], [0], [1], [0, 0, 1, 1], [], []>} : vector<512x128xbf16>, vector<128x128xbf16>, vector<512x128xf32> -> vector<512x128xf32>
    %7 = arith.addf %3, %6 : vector<512x128xf32>
    %c0_6 = arith.constant 0 : index
    %c0_7 = arith.constant 0 : index
    %8 = vector.load %arg7[%c0_6, %c0_7] : memref<512x128xf32, #tpu.memory_space<vmem>>, vector<512x128xf32>
    tpu.vector_store %arg7[%c0_6, %c0_7], %7 {strides = array<i32>} : memref<512x128xf32, #tpu.memory_space<vmem>>, vector<512x128xf32>,
    %c0_i32_8 = arith.constant 0 : i32
    %9 = arith.cmpi eq, %arg2, %c0_i32_8 : i32
    %10 = arith.extui %9 : i1 to i32
    %c0_i32_9 = arith.constant 0 : i32
    %11 = arith.cmpi ne, %10, %c0_i32_9 : i32
    scf.if %11 {
      %c0_10 = arith.constant 0 : index
      %c0_11 = arith.constant 0 : index
      %12 = vector.load %arg7[%c0_10, %c0_11] : memref<512x128xf32, #tpu.memory_space<vmem>>, vector<512x128xf32>
      %c0_12 = arith.constant 0 : index
      %c0_13 = arith.constant 0 : index
      %13 = vector.load %arg5[%c0_12, %c0_13] : memref<1x128xf32, #tpu.memory_space<vmem>>, vector<1x128xf32>
      %14 = vector.broadcast %13 : vector<1x128xf32> to vector<512x128xf32>
      %15 = arith.addf %12, %14 : vector<512x128xf32>
      %cst_14 = arith.constant 0.000000e+00 : f32
      %16 = vector.broadcast %cst_14 : f32 to vector<512x128xf32>
      %17 = arith.cmpf oge, %15, %16 : vector<512x128xf32>
      %cst_15 = arith.constant 2.000000e-01 : f32
      %18 = vector.broadcast %cst_15 : f32 to vector<512x128xf32>
      %19 = arith.mulf %18, %15 : vector<512x128xf32>
      %20 = arith.select %17, %15, %19 : vector<512x128xi1>, vector<512x128xf32>
      %21 = arith.truncf %20 : vector<512x128xf32> to vector<512x128xbf16>
      %c0_16 = arith.constant 0 : index
      %c0_17 = arith.constant 0 : index
      %22 = vector.load %arg6[%c0_16, %c0_17] : memref<512x128xbf16, #tpu.memory_space<vmem>>, vector<512x128xbf16>
      tpu.vector_store %arg6[%c0_16, %c0_17], %21 {strides = array<i32>} : memref<512x128xbf16, #tpu.memory_space<vmem>>, vector<512x128xbf16>,
    } else {
    }
    return
  }
  func.func @transform_0(%arg0: i32, %arg1: i32, %arg2: i32) -> (i32, i32) {
    %c0_i32 = arith.constant 0 : i32
    return %arg0, %arg2 : i32, i32
  }
  func.func @transform_1(%arg0: i32, %arg1: i32, %arg2: i32) -> (i32, i32) {
    %c0_i32 = arith.constant 0 : i32
    return %arg2, %arg1 : i32, i32
  }
  func.func @transform_2(%arg0: i32, %arg1: i32, %arg2: i32) -> (i32, i32) {
    %c0_i32 = arith.constant 0 : i32
    %c0_i32_0 = arith.constant 0 : i32
    return %c0_i32, %arg1 : i32, i32
  }
  func.func @transform_3(%arg0: i32, %arg1: i32, %arg2: i32) -> (i32, i32) {
    %c0_i32 = arith.constant 0 : i32
    return %arg0, %arg1 : i32, i32
  }
}

module attributes {stable_mosaic.version = 11 : i64} {
  func.func @_mm_bias_act_kernel(%arg0: i32, %arg1: i32, %arg2: i32, %arg3: memref<128x128xbf16, #tpu.memory_space<vmem>>, %arg4: memref<128x128xbf16, #tpu.memory_space<vmem>>, %arg5: memref<1x128xf32, #tpu.memory_space<vmem>>, %arg6: memref<128x128xbf16, #tpu.memory_space<vmem>>, %arg7: memref<128x128xf32, #tpu.memory_space<vmem>>) attributes {dimension_semantics = [#tpu.dimension_semantics<parallel>, #tpu.dimension_semantics<parallel>, #tpu.dimension_semantics<arbitrary>], iteration_bounds = array<i64: 1, 1, 13>, scalar_prefetch = 0 : i64, scratch_operands = 1 : i64, tpu.core_type = #tpu.core_type<tc>, window_params = [{transform_indices = @transform_0, window_bounds = array<i64: 128, 128>}, {transform_indices = @transform_1, window_bounds = array<i64: 128, 128>}, {transform_indices = @transform_2, window_bounds = array<i64: 1, 128>}, {transform_indices = @transform_3, window_bounds = array<i64: 128, 128>}]} {
    %c0_i32 = arith.constant 0 : i32
    %0 = arith.cmpi eq, %arg2, %c0_i32 : i32
    %1 = arith.extui %0 : i1 to i32
    %c0_i32_0 = arith.constant 0 : i32
    %2 = arith.cmpi ne, %1, %c0_i32_0 : i32
    scf.if %2 {
      %cst_9 = arith.constant 0.000000e+00 : f32
      %12 = vector.broadcast %cst_9 : f32 to vector<128x128xf32>
      %c0_10 = arith.constant 0 : index
      %c0_11 = arith.constant 0 : index
      %13 = vector.load %arg7[%c0_10, %c0_11] : memref<128x128xf32, #tpu.memory_space<vmem>>, vector<128x128xf32>
      tpu.vector_store %arg7[%c0_10, %c0_11], %12 {strides = array<i32>} : memref<128x128xf32, #tpu.memory_space<vmem>>, vector<128x128xf32>,
    } else {
    }
    %c0 = arith.constant 0 : index
    %c0_1 = arith.constant 0 : index
    %3 = vector.load %arg7[%c0, %c0_1] : memref<128x128xf32, #tpu.memory_space<vmem>>, vector<128x128xf32>
    %c0_2 = arith.constant 0 : index
    %c0_3 = arith.constant 0 : index
    %4 = vector.load %arg3[%c0_2, %c0_3] : memref<128x128xbf16, #tpu.memory_space<vmem>>, vector<128x128xbf16>
    %c0_4 = arith.constant 0 : index
    %c0_5 = arith.constant 0 : index
    %5 = vector.load %arg4[%c0_4, %c0_5] : memref<128x128xbf16, #tpu.memory_space<vmem>>, vector<128x128xbf16>
    %cst = arith.constant dense<0.000000e+00> : vector<128x128xf32>
    %6 = tpu.matmul %4, %5, %cst {dimension_numbers = #tpu.dot_dimension_numbers<[1], [0], [0], [1], [0, 0, 1, 1], [], []>} : vector<128x128xbf16>, vector<128x128xbf16>, vector<128x128xf32> -> vector<128x128xf32>
    %7 = arith.addf %3, %6 : vector<128x128xf32>
    %c0_6 = arith.constant 0 : index
    %c0_7 = arith.constant 0 : index
    %8 = vector.load %arg7[%c0_6, %c0_7] : memref<128x128xf32, #tpu.memory_space<vmem>>, vector<128x128xf32>
    tpu.vector_store %arg7[%c0_6, %c0_7], %7 {strides = array<i32>} : memref<128x128xf32, #tpu.memory_space<vmem>>, vector<128x128xf32>,
    %c12_i32 = arith.constant 12 : i32
    %9 = arith.cmpi eq, %arg2, %c12_i32 : i32
    %10 = arith.extui %9 : i1 to i32
    %c0_i32_8 = arith.constant 0 : i32
    %11 = arith.cmpi ne, %10, %c0_i32_8 : i32
    scf.if %11 {
      %c0_9 = arith.constant 0 : index
      %c0_10 = arith.constant 0 : index
      %12 = vector.load %arg7[%c0_9, %c0_10] : memref<128x128xf32, #tpu.memory_space<vmem>>, vector<128x128xf32>
      %c0_11 = arith.constant 0 : index
      %c0_12 = arith.constant 0 : index
      %13 = vector.load %arg5[%c0_11, %c0_12] : memref<1x128xf32, #tpu.memory_space<vmem>>, vector<1x128xf32>
      %14 = vector.broadcast %13 : vector<1x128xf32> to vector<128x128xf32>
      %15 = arith.addf %12, %14 : vector<128x128xf32>
      %cst_13 = arith.constant 0.000000e+00 : f32
      %16 = vector.broadcast %cst_13 : f32 to vector<128x128xf32>
      %17 = arith.cmpf oge, %15, %16 : vector<128x128xf32>
      %cst_14 = arith.constant 2.000000e-01 : f32
      %18 = vector.broadcast %cst_14 : f32 to vector<128x128xf32>
      %19 = arith.mulf %18, %15 : vector<128x128xf32>
      %20 = arith.select %17, %15, %19 : vector<128x128xi1>, vector<128x128xf32>
      %21 = arith.truncf %20 : vector<128x128xf32> to vector<128x128xbf16>
      %c0_15 = arith.constant 0 : index
      %c0_16 = arith.constant 0 : index
      %22 = vector.load %arg6[%c0_15, %c0_16] : memref<128x128xbf16, #tpu.memory_space<vmem>>, vector<128x128xbf16>
      tpu.vector_store %arg6[%c0_15, %c0_16], %21 {strides = array<i32>} : memref<128x128xbf16, #tpu.memory_space<vmem>>, vector<128x128xbf16>,
    } else {
    }
    return
  }
  func.func @transform_0(%arg0: i32, %arg1: i32, %arg2: i32) -> (i32, i32) {
    %c0_i32 = arith.constant 0 : i32
    return %arg0, %arg2 : i32, i32
  }
  func.func @transform_1(%arg0: i32, %arg1: i32, %arg2: i32) -> (i32, i32) {
    %c0_i32 = arith.constant 0 : i32
    return %arg2, %arg1 : i32, i32
  }
  func.func @transform_2(%arg0: i32, %arg1: i32, %arg2: i32) -> (i32, i32) {
    %c0_i32 = arith.constant 0 : i32
    %c0_i32_0 = arith.constant 0 : i32
    return %c0_i32, %arg1 : i32, i32
  }
  func.func @transform_3(%arg0: i32, %arg1: i32, %arg2: i32) -> (i32, i32) {
    %c0_i32 = arith.constant 0 : i32
    return %arg0, %arg1 : i32, i32
  }
}

module attributes {stable_mosaic.version = 11 : i64} {
  func.func @_mm_bias_act_kernel(%arg0: i32, %arg1: i32, %arg2: i32, %arg3: memref<32x128xbf16, #tpu.memory_space<vmem>>, %arg4: memref<128x256xbf16, #tpu.memory_space<vmem>>, %arg5: memref<1x256xf32, #tpu.memory_space<vmem>>, %arg6: memref<32x256xbf16, #tpu.memory_space<vmem>>, %arg7: memref<32x256xf32, #tpu.memory_space<vmem>>) attributes {dimension_semantics = [#tpu.dimension_semantics<parallel>, #tpu.dimension_semantics<parallel>, #tpu.dimension_semantics<arbitrary>], iteration_bounds = array<i64: 1, 1, 25>, scalar_prefetch = 0 : i64, scratch_operands = 1 : i64, tpu.core_type = #tpu.core_type<tc>, window_params = [{transform_indices = @transform_0, window_bounds = array<i64: 32, 128>}, {transform_indices = @transform_1, window_bounds = array<i64: 128, 256>}, {transform_indices = @transform_2, window_bounds = array<i64: 1, 256>}, {transform_indices = @transform_3, window_bounds = array<i64: 32, 256>}]} {
    %c0_i32 = arith.constant 0 : i32
    %0 = arith.cmpi eq, %arg2, %c0_i32 : i32
    %1 = arith.extui %0 : i1 to i32
    %c0_i32_0 = arith.constant 0 : i32
    %2 = arith.cmpi ne, %1, %c0_i32_0 : i32
    scf.if %2 {
      %cst_9 = arith.constant 0.000000e+00 : f32
      %12 = vector.broadcast %cst_9 : f32 to vector<32x256xf32>
      %c0_10 = arith.constant 0 : index
      %c0_11 = arith.constant 0 : index
      %13 = vector.load %arg7[%c0_10, %c0_11] : memref<32x256xf32, #tpu.memory_space<vmem>>, vector<32x256xf32>
      tpu.vector_store %arg7[%c0_10, %c0_11], %12 {strides = array<i32>} : memref<32x256xf32, #tpu.memory_space<vmem>>, vector<32x256xf32>,
    } else {
    }
    %c0 = arith.constant 0 : index
    %c0_1 = arith.constant 0 : index
    %3 = vector.load %arg7[%c0, %c0_1] : memref<32x256xf32, #tpu.memory_space<vmem>>, vector<32x256xf32>
    %c0_2 = arith.constant 0 : index
    %c0_3 = arith.constant 0 : index
    %4 = vector.load %arg3[%c0_2, %c0_3] : memref<32x128xbf16, #tpu.memory_space<vmem>>, vector<32x128xbf16>
    %c0_4 = arith.constant 0 : index
    %c0_5 = arith.constant 0 : index
    %5 = vector.load %arg4[%c0_4, %c0_5] : memref<128x256xbf16, #tpu.memory_space<vmem>>, vector<128x256xbf16>
    %cst = arith.constant dense<0.000000e+00> : vector<32x256xf32>
    %6 = tpu.matmul %4, %5, %cst {dimension_numbers = #tpu.dot_dimension_numbers<[1], [0], [0], [1], [0, 0, 1, 1], [], []>} : vector<32x128xbf16>, vector<128x256xbf16>, vector<32x256xf32> -> vector<32x256xf32>
    %7 = arith.addf %3, %6 : vector<32x256xf32>
    %c0_6 = arith.constant 0 : index
    %c0_7 = arith.constant 0 : index
    %8 = vector.load %arg7[%c0_6, %c0_7] : memref<32x256xf32, #tpu.memory_space<vmem>>, vector<32x256xf32>
    tpu.vector_store %arg7[%c0_6, %c0_7], %7 {strides = array<i32>} : memref<32x256xf32, #tpu.memory_space<vmem>>, vector<32x256xf32>,
    %c24_i32 = arith.constant 24 : i32
    %9 = arith.cmpi eq, %arg2, %c24_i32 : i32
    %10 = arith.extui %9 : i1 to i32
    %c0_i32_8 = arith.constant 0 : i32
    %11 = arith.cmpi ne, %10, %c0_i32_8 : i32
    scf.if %11 {
      %c0_9 = arith.constant 0 : index
      %c0_10 = arith.constant 0 : index
      %12 = vector.load %arg7[%c0_9, %c0_10] : memref<32x256xf32, #tpu.memory_space<vmem>>, vector<32x256xf32>
      %c0_11 = arith.constant 0 : index
      %c0_12 = arith.constant 0 : index
      %13 = vector.load %arg5[%c0_11, %c0_12] : memref<1x256xf32, #tpu.memory_space<vmem>>, vector<1x256xf32>
      %14 = vector.broadcast %13 : vector<1x256xf32> to vector<32x256xf32>
      %15 = arith.addf %12, %14 : vector<32x256xf32>
      %cst_13 = arith.constant 0.000000e+00 : f32
      %16 = vector.broadcast %cst_13 : f32 to vector<32x256xf32>
      %17 = arith.cmpf oge, %15, %16 : vector<32x256xf32>
      %cst_14 = arith.constant 2.000000e-01 : f32
      %18 = vector.broadcast %cst_14 : f32 to vector<32x256xf32>
      %19 = arith.mulf %18, %15 : vector<32x256xf32>
      %20 = arith.select %17, %15, %19 : vector<32x256xi1>, vector<32x256xf32>
      %21 = arith.truncf %20 : vector<32x256xf32> to vector<32x256xbf16>
      %c0_15 = arith.constant 0 : index
      %c0_16 = arith.constant 0 : index
      %22 = vector.load %arg6[%c0_15, %c0_16] : memref<32x256xbf16, #tpu.memory_space<vmem>>, vector<32x256xbf16>
      tpu.vector_store %arg6[%c0_15, %c0_16], %21 {strides = array<i32>} : memref<32x256xbf16, #tpu.memory_space<vmem>>, vector<32x256xbf16>,
    } else {
    }
    return
  }
  func.func @transform_0(%arg0: i32, %arg1: i32, %arg2: i32) -> (i32, i32) {
    %c0_i32 = arith.constant 0 : i32
    return %arg0, %arg2 : i32, i32
  }
  func.func @transform_1(%arg0: i32, %arg1: i32, %arg2: i32) -> (i32, i32) {
    %c0_i32 = arith.constant 0 : i32
    return %arg2, %arg1 : i32, i32
  }
  func.func @transform_2(%arg0: i32, %arg1: i32, %arg2: i32) -> (i32, i32) {
    %c0_i32 = arith.constant 0 : i32
    %c0_i32_0 = arith.constant 0 : i32
    return %c0_i32, %arg1 : i32, i32
  }
  func.func @transform_3(%arg0: i32, %arg1: i32, %arg2: i32) -> (i32, i32) {
    %c0_i32 = arith.constant 0 : i32
    return %arg0, %arg1 : i32, i32
  }
}

module attributes {stable_mosaic.version = 11 : i64} {
  func.func @_mm_fused_head_kernel(%arg0: i32, %arg1: i32, %arg2: memref<8x256xbf16, #tpu.memory_space<vmem>>, %arg3: memref<256x512xbf16, #tpu.memory_space<vmem>>, %arg4: memref<1x512xf32, #tpu.memory_space<vmem>>, %arg5: memref<512x128xbf16, #tpu.memory_space<vmem>>, %arg6: memref<1x128xf32, #tpu.memory_space<vmem>>, %arg7: memref<8x128xf32, #tpu.memory_space<vmem>>, %arg8: memref<8x512xf32, #tpu.memory_space<vmem>>) attributes {dimension_semantics = [#tpu.dimension_semantics<parallel>, #tpu.dimension_semantics<arbitrary>], iteration_bounds = array<i64: 1, 25>, scalar_prefetch = 0 : i64, scratch_operands = 1 : i64, tpu.core_type = #tpu.core_type<tc>, window_params = [{transform_indices = @transform_0, window_bounds = array<i64: 8, 256>}, {transform_indices = @transform_1, window_bounds = array<i64: 256, 512>}, {pipeline_mode = #tpu.pipeline_mode<synchronous>, transform_indices = @transform_2, window_bounds = array<i64: 1, 512>}, {pipeline_mode = #tpu.pipeline_mode<synchronous>, transform_indices = @transform_3, window_bounds = array<i64: 512, 128>}, {pipeline_mode = #tpu.pipeline_mode<synchronous>, transform_indices = @transform_4, window_bounds = array<i64: 1, 128>}, {transform_indices = @transform_5, window_bounds = array<i64: 8, 128>}]} {
    %c0_i32 = arith.constant 0 : i32
    %0 = arith.cmpi eq, %arg1, %c0_i32 : i32
    %1 = arith.extui %0 : i1 to i32
    %c0_i32_0 = arith.constant 0 : i32
    %2 = arith.cmpi ne, %1, %c0_i32_0 : i32
    scf.if %2 {
      %cst_9 = arith.constant 0.000000e+00 : f32
      %12 = vector.broadcast %cst_9 : f32 to vector<8x512xf32>
      %c0_10 = arith.constant 0 : index
      %c0_11 = arith.constant 0 : index
      %13 = vector.load %arg8[%c0_10, %c0_11] : memref<8x512xf32, #tpu.memory_space<vmem>>, vector<8x512xf32>
      tpu.vector_store %arg8[%c0_10, %c0_11], %12 {strides = array<i32>} : memref<8x512xf32, #tpu.memory_space<vmem>>, vector<8x512xf32>,
    } else {
    }
    %c0 = arith.constant 0 : index
    %c0_1 = arith.constant 0 : index
    %3 = vector.load %arg8[%c0, %c0_1] : memref<8x512xf32, #tpu.memory_space<vmem>>, vector<8x512xf32>
    %c0_2 = arith.constant 0 : index
    %c0_3 = arith.constant 0 : index
    %4 = vector.load %arg2[%c0_2, %c0_3] : memref<8x256xbf16, #tpu.memory_space<vmem>>, vector<8x256xbf16>
    %c0_4 = arith.constant 0 : index
    %c0_5 = arith.constant 0 : index
    %5 = vector.load %arg3[%c0_4, %c0_5] : memref<256x512xbf16, #tpu.memory_space<vmem>>, vector<256x512xbf16>
    %cst = arith.constant dense<0.000000e+00> : vector<8x512xf32>
    %6 = tpu.matmul %4, %5, %cst {dimension_numbers = #tpu.dot_dimension_numbers<[1], [0], [0], [1], [0, 0, 1, 1], [], []>} : vector<8x256xbf16>, vector<256x512xbf16>, vector<8x512xf32> -> vector<8x512xf32>
    %7 = arith.addf %3, %6 : vector<8x512xf32>
    %c0_6 = arith.constant 0 : index
    %c0_7 = arith.constant 0 : index
    %8 = vector.load %arg8[%c0_6, %c0_7] : memref<8x512xf32, #tpu.memory_space<vmem>>, vector<8x512xf32>
    tpu.vector_store %arg8[%c0_6, %c0_7], %7 {strides = array<i32>} : memref<8x512xf32, #tpu.memory_space<vmem>>, vector<8x512xf32>,
    %c24_i32 = arith.constant 24 : i32
    %9 = arith.cmpi eq, %arg1, %c24_i32 : i32
    %10 = arith.extui %9 : i1 to i32
    %c0_i32_8 = arith.constant 0 : i32
    %11 = arith.cmpi ne, %10, %c0_i32_8 : i32
    scf.if %11 {
      %c0_9 = arith.constant 0 : index
      %c0_10 = arith.constant 0 : index
      %12 = vector.load %arg8[%c0_9, %c0_10] : memref<8x512xf32, #tpu.memory_space<vmem>>, vector<8x512xf32>
      %c0_11 = arith.constant 0 : index
      %c0_12 = arith.constant 0 : index
      %13 = vector.load %arg4[%c0_11, %c0_12] : memref<1x512xf32, #tpu.memory_space<vmem>>, vector<1x512xf32>
      %14 = vector.broadcast %13 : vector<1x512xf32> to vector<8x512xf32>
      %15 = arith.addf %12, %14 : vector<8x512xf32>
      %cst_13 = arith.constant 0.000000e+00 : f32
      %16 = vector.broadcast %cst_13 : f32 to vector<8x512xf32>
      %17 = arith.cmpf oge, %15, %16 : vector<8x512xf32>
      %cst_14 = arith.constant 2.000000e-01 : f32
      %18 = vector.broadcast %cst_14 : f32 to vector<8x512xf32>
      %19 = arith.mulf %18, %15 : vector<8x512xf32>
      %20 = arith.select %17, %15, %19 : vector<8x512xi1>, vector<8x512xf32>
      %21 = arith.truncf %20 : vector<8x512xf32> to vector<8x512xbf16>
      %c0_15 = arith.constant 0 : index
      %c0_16 = arith.constant 0 : index
      %22 = vector.load %arg5[%c0_15, %c0_16] : memref<512x128xbf16, #tpu.memory_space<vmem>>, vector<512x128xbf16>
      %cst_17 = arith.constant dense<0.000000e+00> : vector<8x128xf32>
      %23 = tpu.matmul %21, %22, %cst_17 {dimension_numbers = #tpu.dot_dimension_numbers<[1], [0], [0], [1], [0, 0, 1, 1], [], []>} : vector<8x512xbf16>, vector<512x128xbf16>, vector<8x128xf32> -> vector<8x128xf32>
      %c0_18 = arith.constant 0 : index
      %c0_19 = arith.constant 0 : index
      %24 = vector.load %arg6[%c0_18, %c0_19] : memref<1x128xf32, #tpu.memory_space<vmem>>, vector<1x128xf32>
      %25 = vector.broadcast %24 : vector<1x128xf32> to vector<8x128xf32>
      %26 = arith.addf %23, %25 : vector<8x128xf32>
      %c0_20 = arith.constant 0 : index
      %c0_21 = arith.constant 0 : index
      %27 = vector.load %arg7[%c0_20, %c0_21] : memref<8x128xf32, #tpu.memory_space<vmem>>, vector<8x128xf32>
      tpu.vector_store %arg7[%c0_20, %c0_21], %26 {strides = array<i32>} : memref<8x128xf32, #tpu.memory_space<vmem>>, vector<8x128xf32>,
    } else {
    }
    return
  }
  func.func @transform_0(%arg0: i32, %arg1: i32) -> (i32, i32) {
    %c0_i32 = arith.constant 0 : i32
    return %arg0, %arg1 : i32, i32
  }
  func.func @transform_1(%arg0: i32, %arg1: i32) -> (i32, i32) {
    %c0_i32 = arith.constant 0 : i32
    %c0_i32_0 = arith.constant 0 : i32
    return %arg1, %c0_i32 : i32, i32
  }
  func.func @transform_2(%arg0: i32, %arg1: i32) -> (i32, i32) {
    %c0_i32 = arith.constant 0 : i32
    %c0_i32_0 = arith.constant 0 : i32
    %c0_i32_1 = arith.constant 0 : i32
    return %c0_i32, %c0_i32_0 : i32, i32
  }
  func.func @transform_3(%arg0: i32, %arg1: i32) -> (i32, i32) {
    %c0_i32 = arith.constant 0 : i32
    %c0_i32_0 = arith.constant 0 : i32
    %c0_i32_1 = arith.constant 0 : i32
    return %c0_i32, %c0_i32_0 : i32, i32
  }
  func.func @transform_4(%arg0: i32, %arg1: i32) -> (i32, i32) {
    %c0_i32 = arith.constant 0 : i32
    %c0_i32_0 = arith.constant 0 : i32
    %c0_i32_1 = arith.constant 0 : i32
    return %c0_i32, %c0_i32_0 : i32, i32
  }
  func.func @transform_5(%arg0: i32, %arg1: i32) -> (i32, i32) {
    %c0_i32 = arith.constant 0 : i32
    %c0_i32_0 = arith.constant 0 : i32
    return %arg0, %c0_i32 : i32, i32
  }
}

</mosaic_0001>

<llo_original>
// kernel: local_critic_forward.4
$region0: #{local_critic_forward.4}
  #allocation0 [shape = 'u32[]', space=smem, size = 0x4, offset = 0x4, fixed_abs, tag = 'smem constant byte address 0x4 - core index']
  #allocation1 [shape = 'u32[144,128]{1,0:T(1,128)}', space=vmem, size = 0x12000, scoped, tag = 'internal scratch']
  #allocation2 [shape = 'f32[512,128]{1,0:T(8,128)}', space=vmem, size = 0x40000, scoped, tag = 'scratch operand']
  %s0 = inlined_call_operand.vmem [shape: bf16[512,128], index: 0, kind: input, shape index: {}]
  %s1 = inlined_call_operand.hbm [shape: bf16[128,128], index: 1, kind: input, shape index: {}]
  %s2 = inlined_call_operand.hbm [shape: f32[1,128], index: 2, kind: input, shape index: {}]
  %s3 = inlined_call_operand.vmem [shape: bf16[512,128], index: 3, kind: output, shape index: {}]
  %s4 = sld [smem:[#allocation0]]
  $region38: #{local_critic_forward.4} parent=0
    _
  %s6 = ssub.s32 1, %s4
  %s7 = scalar_select 0, %s6, %s4
  $region1: #{local_critic_forward.4} parent=0
    #allocation3 [shape = 'u8[32768]{0}', space=vmem, size = 0x8000, scoped, tag = 'input window, operand 1, single buffered']
    #allocation4 [shape = 's32[1]{0}', space=sflag, size = 0x4, scoped, tag = 'scoped memory for local_critic_forward.4']
    #allocation5 [shape = 'u8[512]{0}', space=vmem, size = 0x400, scoped, tag = 'input window, operand 2, single buffered']
    #allocation6 [shape = 's32[1]{0}', space=sflag, size = 0x4, scoped, tag = 'scoped memory for local_critic_forward.4']
    %8 = vsyncpa [#allocation4], 0
    %9 = vsyncpa [#allocation6], 0
    // Predicated region
    $region2: #{local_critic_forward.4} parent=1 // pred_check
      _
    $region3: #{local_critic_forward.4} parent=1 // pred_check_branch
      %11 = sbr.rel (0) target = $region5
    $region4: #{local_critic_forward.4} parent=1 // pred_region
      _
    $region5: #{local_critic_forward.4} parent=1 // pred_fallthru
      _
    // Predicated region
    $region6: #{local_critic_forward.4} parent=1 // pred_check
      _
    $region7: #{local_critic_forward.4} parent=1 // pred_check_branch
      %13 = sbr.rel (0) target = $region9
    $region8: #{local_critic_forward.4} parent=1 // pred_region
      %s15 = ssub.s32 1024, 1024
      %16 = vsyncadd [#allocation4], %s15
      %s17 = sshll.u32 [#allocation3], 4
      %s18 = int_to_ptr.vmem [resolvable:$true] %s17
      %23 = dma.hbm_to_vmem [thread:$0]  %s1, 1024, %s18, [#allocation4], 64, 64, 4
    $region9: #{local_critic_forward.4} parent=1 // pred_fallthru
      _
    // Predicated region
    $region10: #{local_critic_forward.4} parent=1 // pred_check
      _
    $region11: #{local_critic_forward.4} parent=1 // pred_check_branch
      %25 = sbr.rel (0) target = $region13
    $region12: #{local_critic_forward.4} parent=1 // pred_region
      %s27 = ssub.s32 16, 16
      %28 = vsyncadd [#allocation6], %s27
      %s30 = sshll.u32 [#allocation5], 4
      %s31 = int_to_ptr.vmem [resolvable:$true] %s30
      %33 = dma.hbm_to_vmem [thread:$0]  %s2, 16, %s31, [#allocation6]
    $region13: #{local_critic_forward.4} parent=1 // pred_fallthru
      _
    // Predicated region
    $region14: #{local_critic_forward.4} parent=1 // pred_check
      _
    $region15: #{local_critic_forward.4} parent=1 // pred_check_branch
      %35 = sbr.rel (0) target = $region17
    $region16: #{local_critic_forward.4} parent=1 // pred_region
      %36 = dma.done [#allocation4], 1024
    $region17: #{local_critic_forward.4} parent=1 // pred_fallthru
      _
    // Predicated region
    $region18: #{local_critic_forward.4} parent=1 // pred_check
      _
    $region19: #{local_critic_forward.4} parent=1 // pred_check_branch
      %38 = sbr.rel (0) target = $region21
    $region20: #{local_critic_forward.4} parent=1 // pred_region
      %39 = dma.done [#allocation6], 16
    $region21: #{local_critic_forward.4} parent=1 // pred_fallthru
      _
    %p41 = scmp.eq.s32.totalorder 0, 0
    // Predicated region
    $region22: #{local_critic_forward.4} parent=1 // pred_check
      %p42 = pneg %p41
    $region23: #{local_critic_forward.4} parent=1 // pred_check_branch
      %44 = sbr.rel (%p42) target = $region25
    $region24: #{local_critic_forward.4} parent=1 // pred_region
      %45 = vst [vmem:[#allocation2] sm:$0xff] 0.0
      %46 = vst [vmem:[#allocation2 + $0x8] sm:$0xff] 0.0
      %47 = vst [vmem:[#allocation2 + $0x10] sm:$0xff] 0.0
      %48 = vst [vmem:[#allocation2 + $0x18] sm:$0xff] 0.0
      %49 = vst [vmem:[#allocation2 + $0x20] sm:$0xff] 0.0
      %50 = vst [vmem:[#allocation2 + $0x28] sm:$0xff] 0.0
      %51 = vst [vmem:[#allocation2 + $0x30] sm:$0xff] 0.0
      %52 = vst [vmem:[#allocation2 + $0x38] sm:$0xff] 0.0
      %53 = vst [vmem:[#allocation2 + $0x40] sm:$0xff] 0.0
      %54 = vst [vmem:[#allocation2 + $0x48] sm:$0xff] 0.0
      %55 = vst [vmem:[#allocation2 + $0x50] sm:$0xff] 0.0
      %56 = vst [vmem:[#allocation2 + $0x58] sm:$0xff] 0.0
      %57 = vst [vmem:[#allocation2 + $0x60] sm:$0xff] 0.0
      %58 = vst [vmem:[#allocation2 + $0x68] sm:$0xff] 0.0
      %59 = vst [vmem:[#allocation2 + $0x70] sm:$0xff] 0.0
      %60 = vst [vmem:[#allocation2 + $0x78] sm:$0xff] 0.0
      %61 = vst [vmem:[#allocation2 + $0x80] sm:$0xff] 0.0
      %62 = vst [vmem:[#allocation2 + $0x88] sm:$0xff] 0.0
      %63 = vst [vmem:[#allocation2 + $0x90] sm:$0xff] 0.0
      %64 = vst [vmem:[#allocation2 + $0x98] sm:$0xff] 0.0
      %65 = vst [vmem:[#allocation2 + $0xa0] sm:$0xff] 0.0
      %66 = vst [vmem:[#allocation2 + $0xa8] sm:$0xff] 0.0
      %67 = vst [vmem:[#allocation2 + $0xb0] sm:$0xff] 0.0
      %68 = vst [vmem:[#allocation2 + $0xb8] sm:$0xff] 0.0
      %69 = vst [vmem:[#allocation2 + $0xc0] sm:$0xff] 0.0
      %70 = vst [vmem:[#allocation2 + $0xc8] sm:$0xff] 0.0
      %71 = vst [vmem:[#allocation2 + $0xd0] sm:$0xff] 0.0
      %72 = vst [vmem:[#allocation2 + $0xd8] sm:$0xff] 0.0
      %73 = vst [vmem:[#allocation2 + $0xe0] sm:$0xff] 0.0
      %74 = vst [vmem:[#allocation2 + $0xe8] sm:$0xff] 0.0
      %75 = vst [vmem:[#allocation2 + $0xf0] sm:$0xff] 0.0
      %76 = vst [vmem:[#allocation2 + $0xf8] sm:$0xff] 0.0
      %77 = vst [vmem:[#allocation2 + $0x100] sm:$0xff] 0.0
      %78 = vst [vmem:[#allocation2 + $0x108] sm:$0xff] 0.0
      %79 = vst [vmem:[#allocation2 + $0x110] sm:$0xff] 0.0
      %80 = vst [vmem:[#allocation2 + $0x118] sm:$0xff] 0.0
      %81 = vst [vmem:[#allocation2 + $0x120] sm:$0xff] 0.0
      %82 = vst [vmem:[#allocation2 + $0x128] sm:$0xff] 0.0
      %83 = vst [vmem:[#allocation2 + $0x130] sm:$0xff] 0.0
      %84 = vst [vmem:[#allocation2 + $0x138] sm:$0xff] 0.0
      %85 = vst [vmem:[#allocation2 + $0x140] sm:$0xff] 0.0
      %86 = vst [vmem:[#allocation2 + $0x148] sm:$0xff] 0.0
      %87 = vst [vmem:[#allocation2 + $0x150] sm:$0xff] 0.0
      %88 = vst [vmem:[#allocation2 + $0x158] sm:$0xff] 0.0
      %89 = vst [vmem:[#allocation2 + $0x160] sm:$0xff] 0.0
      %90 = vst [vmem:[#allocation2 + $0x168] sm:$0xff] 0.0
      %91 = vst [vmem:[#allocation2 + $0x170] sm:$0xff] 0.0
      %92 = vst [vmem:[#allocation2 + $0x178] sm:$0xff] 0.0
      %93 = vst [vmem:[#allocation2 + $0x180] sm:$0xff] 0.0
      %94 = vst [vmem:[#allocation2 + $0x188] sm:$0xff] 0.0
      %95 = vst [vmem:[#allocation2 + $0x190] sm:$0xff] 0.0
      %96 = vst [vmem:[#allocation2 + $0x198] sm:$0xff] 0.0
      %97 = vst [vmem:[#allocation2 + $0x1a0] sm:$0xff] 0.0
      %98 = vst [vmem:[#allocation2 + $0x1a8] sm:$0xff] 0.0
      %99 = vst [vmem:[#allocation2 + $0x1b0] sm:$0xff] 0.0
      %100 = vst [vmem:[#allocation2 + $0x1b8] sm:$0xff] 0.0
      %101 = vst [vmem:[#allocation2 + $0x1c0] sm:$0xff] 0.0
      %102 = vst [vmem:[#allocation2 + $0x1c8] sm:$0xff] 0.0
      %103 = vst [vmem:[#allocation2 + $0x1d0] sm:$0xff] 0.0
      %104 = vst [vmem:[#allocation2 + $0x1d8] sm:$0xff] 0.0
      %105 = vst [vmem:[#allocation2 + $0x1e0] sm:$0xff] 0.0
      %106 = vst [vmem:[#allocation2 + $0x1e8] sm:$0xff] 0.0
      %107 = vst [vmem:[#allocation2 + $0x1f0] sm:$0xff] 0.0
      %108 = vst [vmem:[#allocation2 + $0x1f8] sm:$0xff] 0.0
    $region25: #{local_critic_forward.4} parent=1 // pred_fallthru
      _
    %v109 = vld [vmem:[#allocation2] sm:$0xff]
    %v110 = vld [vmem:[#allocation2 + $0x8] sm:$0xff]
    %v111 = vld [vmem:[#allocation2 + $0x10] sm:$0xff]
    %v112 = vld [vmem:[#allocation2 + $0x18] sm:$0xff]
    %v113 = vld [vmem:[#allocation2 + $0x20] sm:$0xff]
    %v114 = vld [vmem:[#allocation2 + $0x28] sm:$0xff]
    %v115 = vld [vmem:[#allocation2 + $0x30] sm:$0xff]
    %v116 = vld [vmem:[#allocation2 + $0x38] sm:$0xff]
    %v117 = vld [vmem:[#allocation2 + $0x40] sm:$0xff]
    %v118 = vld [vmem:[#allocation2 + $0x48] sm:$0xff]
    %v119 = vld [vmem:[#allocation2 + $0x50] sm:$0xff]
    %v120 = vld [vmem:[#allocation2 + $0x58] sm:$0xff]
    %v121 = vld [vmem:[#allocation2 + $0x60] sm:$0xff]
    %v122 = vld [vmem:[#allocation2 + $0x68] sm:$0xff]
    %v123 = vld [vmem:[#allocation2 + $0x70] sm:$0xff]
    %v124 = vld [vmem:[#allocation2 + $0x78] sm:$0xff]
    %v125 = vld [vmem:[#allocation2 + $0x80] sm:$0xff]
    %v126 = vld [vmem:[#allocation2 + $0x88] sm:$0xff]
    %v127 = vld [vmem:[#allocation2 + $0x90] sm:$0xff]
    %v128 = vld [vmem:[#allocation2 + $0x98] sm:$0xff]
    %v129 = vld [vmem:[#allocation2 + $0xa0] sm:$0xff]
    %v130 = vld [vmem:[#allocation2 + $0xa8] sm:$0xff]
    %v131 = vld [vmem:[#allocation2 + $0xb0] sm:$0xff]
    %v132 = vld [vmem:[#allocation2 + $0xb8] sm:$0xff]
    %v133 = vld [vmem:[#allocation2 + $0xc0] sm:$0xff]
    %v134 = vld [vmem:[#allocation2 + $0xc8] sm:$0xff]
    %v135 = vld [vmem:[#allocation2 + $0xd0] sm:$0xff]
    %v136 = vld [vmem:[#allocation2 + $0xd8] sm:$0xff]
    %v137 = vld [vmem:[#allocation2 + $0xe0] sm:$0xff]
    %v138 = vld [vmem:[#allocation2 + $0xe8] sm:$0xff]
    %v139 = vld [vmem:[#allocation2 + $0xf0] sm:$0xff]
    %v140 = vld [vmem:[#allocation2 + $0xf8] sm:$0xff]
    %v141 = vld [vmem:[#allocation2 + $0x100] sm:$0xff]
    %v142 = vld [vmem:[#allocation2 + $0x108] sm:$0xff]
    %v143 = vld [vmem:[#allocation2 + $0x110] sm:$0xff]
    %v144 = vld [vmem:[#allocation2 + $0x118] sm:$0xff]
    %v145 = vld [vmem:[#allocation2 + $0x120] sm:$0xff]
    %v146 = vld [vmem:[#allocation2 + $0x128] sm:$0xff]
    %v147 = vld [vmem:[#allocation2 + $0x130] sm:$0xff]
    %v148 = vld [vmem:[#allocation2 + $0x138] sm:$0xff]
    %v149 = vld [vmem:[#allocation2 + $0x140] sm:$0xff]
    %v150 = vld [vmem:[#allocation2 + $0x148] sm:$0xff]
    %v151 = vld [vmem:[#allocation2 + $0x150] sm:$0xff]
    %v152 = vld [vmem:[#allocation2 + $0x158] sm:$0xff]
    %v153 = vld [vmem:[#allocation2 + $0x160] sm:$0xff]
    %v154 = vld [vmem:[#allocation2 + $0x168] sm:$0xff]
    %v155 = vld [vmem:[#allocation2 + $0x170] sm:$0xff]
    %v156 = vld [vmem:[#allocation2 + $0x178] sm:$0xff]
    %v157 = vld [vmem:[#allocation2 + $0x180] sm:$0xff]
    %v158 = vld [vmem:[#allocation2 + $0x188] sm:$0xff]
    %v159 = vld [vmem:[#allocation2 + $0x190] sm:$0xff]
    %v160 = vld [vmem:[#allocation2 + $0x198] sm:$0xff]
    %v161 = vld [vmem:[#allocation2 + $0x1a0] sm:$0xff]
    %v162 = vld [vmem:[#allocation2 + $0x1a8] sm:$0xff]
    %v163 = vld [vmem:[#allocation2 + $0x1b0] sm:$0xff]
    %v164 = vld [vmem:[#allocation2 + $0x1b8] sm:$0xff]
    %v165 = vld [vmem:[#allocation2 + $0x1c0] sm:$0xff]
    %v166 = vld [vmem:[#allocation2 + $0x1c8] sm:$0xff]
    %v167 = vld [vmem:[#allocation2 + $0x1d0] sm:$0xff]
    %v168 = vld [vmem:[#allocation2 + $0x1d8] sm:$0xff]
    %v169 = vld [vmem:[#allocation2 + $0x1e0] sm:$0xff]
    %v170 = vld [vmem:[#allocation2 + $0x1e8] sm:$0xff]
    %v171 = vld [vmem:[#allocation2 + $0x1f0] sm:$0xff]
    %v172 = vld [vmem:[#allocation2 + $0x1f8] sm:$0xff]
    %v173 = vld [vmem:[%s0] sm:$0xf]
    %v174 = vld [vmem:[%s0 + $0x4] sm:$0xf]
    %v175 = vld [vmem:[%s0 + $0x8] sm:$0xf]
    %v176 = vld [vmem:[%s0 + $0xc] sm:$0xf]
    %v177 = vld [vmem:[%s0 + $0x10] sm:$0xf]
    %v178 = vld [vmem:[%s0 + $0x14] sm:$0xf]
    %v179 = vld [vmem:[%s0 + $0x18] sm:$0xf]
    %v180 = vld [vmem:[%s0 + $0x1c] sm:$0xf]
    %v181 = vld [vmem:[%s0 + $0x20] sm:$0xf]
    %v182 = vld [vmem:[%s0 + $0x24] sm:$0xf]
    %v183 = vld [vmem:[%s0 + $0x28] sm:$0xf]
    %v184 = vld [vmem:[%s0 + $0x2c] sm:$0xf]
    %v185 = vld [vmem:[%s0 + $0x30] sm:$0xf]
    %v186 = vld [vmem:[%s0 + $0x34] sm:$0xf]
    %v187 = vld [vmem:[%s0 + $0x38] sm:$0xf]
    %v188 = vld [vmem:[%s0 + $0x3c] sm:$0xf]
    %v189 = vld [vmem:[%s0 + $0x40] sm:$0xf]
    %v190 = vld [vmem:[%s0 + $0x44] sm:$0xf]
    %v191 = vld [vmem:[%s0 + $0x48] sm:$0xf]
    %v192 = vld [vmem:[%s0 + $0x4c] sm:$0xf]
    %v193 = vld [vmem:[%s0 + $0x50] sm:$0xf]
    %v194 = vld [vmem:[%s0 + $0x54] sm:$0xf]
    %v195 = vld [vmem:[%s0 + $0x58] sm:$0xf]
    %v196 = vld [vmem:[%s0 + $0x5c] sm:$0xf]
    %v197 = vld [vmem:[%s0 + $0x60] sm:$0xf]
    %v198 = vld [vmem:[%s0 + $0x64] sm:$0xf]
    %v199 = vld [vmem:[%s0 + $0x68] sm:$0xf]
    %v200 = vld [vmem:[%s0 + $0x6c] sm:$0xf]
    %v201 = vld [vmem:[%s0 + $0x70] sm:$0xf]
    %v202 = vld [vmem:[%s0 + $0x74] sm:$0xf]
    %v203 = vld [vmem:[%s0 + $0x78] sm:$0xf]
    %v204 = vld [vmem:[%s0 + $0x7c] sm:$0xf]
    %v205 = vld [vmem:[%s0 + $0x80] sm:$0xf]
    %v206 = vld [vmem:[%s0 + $0x84] sm:$0xf]
    %v207 = vld [vmem:[%s0 + $0x88] sm:$0xf]
    %v208 = vld [vmem:[%s0 + $0x8c] sm:$0xf]
    %v209 = vld [vmem:[%s0 + $0x90] sm:$0xf]
    %v210 = vld [vmem:[%s0 + $0x94] sm:$0xf]
    %v211 = vld [vmem:[%s0 + $0x98] sm:$0xf]
    %v212 = vld [vmem:[%s0 + $0x9c] sm:$0xf]
    %v213 = vld [vmem:[%s0 + $0xa0] sm:$0xf]
    %v214 = vld [vmem:[%s0 + $0xa4] sm:$0xf]
    %v215 = vld [vmem:[%s0 + $0xa8] sm:$0xf]
    %v216 = vld [vmem:[%s0 + $0xac] sm:$0xf]
    %v217 = vld [vmem:[%s0 + $0xb0] sm:$0xf]
    %v218 = vld [vmem:[%s0 + $0xb4] sm:$0xf]
    %v219 = vld [vmem:[%s0 + $0xb8] sm:$0xf]
    %v220 = vld [vmem:[%s0 + $0xbc] sm:$0xf]
    %v221 = vld [vmem:[%s0 + $0xc0] sm:$0xf]
    %v222 = vld [vmem:[%s0 + $0xc4] sm:$0xf]
    %v223 = vld [vmem:[%s0 + $0xc8] sm:$0xf]
    %v224 = vld [vmem:[%s0 + $0xcc] sm:$0xf]
    %v225 = vld [vmem:[%s0 + $0xd0] sm:$0xf]
    %v226 = vld [vmem:[%s0 + $0xd4] sm:$0xf]
    %v227 = vld [vmem:[%s0 + $0xd8] sm:$0xf]
    %v228 = vld [vmem:[%s0 + $0xdc] sm:$0xf]
    %v229 = vld [vmem:[%s0 + $0xe0] sm:$0xf]
    %v230 = vld [vmem:[%s0 + $0xe4] sm:$0xf]
    %v231 = vld [vmem:[%s0 + $0xe8] sm:$0xf]
    %v232 = vld [vmem:[%s0 + $0xec] sm:$0xf]
    %v233 = vld [vmem:[%s0 + $0xf0] sm:$0xf]
    %v234 = vld [vmem:[%s0 + $0xf4] sm:$0xf]
    %v235 = vld [vmem:[%s0 + $0xf8] sm:$0xf]
    %v236 = vld [vmem:[%s0 + $0xfc] sm:$0xf]
    %v237 = vld [vmem:[#allocation3] sm:$0xf]
    %v238 = vld [vmem:[#allocation3 + $0x4] sm:$0xf]
    %v239 = vld [vmem:[#allocation3 + $0x8] sm:$0xf]
    %v240 = vld [vmem:[#allocation3 + $0xc] sm:$0xf]
    %v241 = vld [vmem:[#allocation3 + $0x10] sm:$0xf]
    %v242 = vld [vmem:[#allocation3 + $0x14] sm:$0xf]
    %v243 = vld [vmem:[#allocation3 + $0x18] sm:$0xf]
    %v244 = vld [vmem:[#allocation3 + $0x1c] sm:$0xf]
    %v245 = vld [vmem:[#allocation3 + $0x20] sm:$0xf]
    %v246 = vld [vmem:[#allocation3 + $0x24] sm:$0xf]
    %v247 = vld [vmem:[#allocation3 + $0x28] sm:$0xf]
    %v248 = vld [vmem:[#allocation3 + $0x2c] sm:$0xf]
    %v249 = vld [vmem:[#allocation3 + $0x30] sm:$0xf]
    %v250 = vld [vmem:[#allocation3 + $0x34] sm:$0xf]
    %v251 = vld [vmem:[#allocation3 + $0x38] sm:$0xf]
    %v252 = vld [vmem:[#allocation3 + $0x3c] sm:$0xf]
    %v317 = vunpack.c.l.b16 %v173
    %v318 = vunpack.c.l.b16 %v174
    %v319 = vunpack.c.l.b16 %v175
    %v320 = vunpack.c.l.b16 %v176
    %v321 = vunpack.c.l.b16 %v177
    %v322 = vunpack.c.l.b16 %v178
    %v323 = vunpack.c.l.b16 %v179
    %v324 = vunpack.c.l.b16 %v180
    %v325 = vunpack.c.l.b16 %v181
    %v326 = vunpack.c.l.b16 %v182
    %v327 = vunpack.c.l.b16 %v183
    %v328 = vunpack.c.l.b16 %v184
    %v329 = vunpack.c.l.b16 %v185
    %v330 = vunpack.c.l.b16 %v186
    %v331 = vunpack.c.l.b16 %v187
    %v332 = vunpack.c.l.b16 %v188
    %v333 = vunpack.c.l.b16 %v189
    %v334 = vunpack.c.l.b16 %v190
    %v335 = vunpack.c.l.b16 %v191
    %v336 = vunpack.c.l.b16 %v192
    %v337 = vunpack.c.l.b16 %v193
    %v338 = vunpack.c.l.b16 %v194
    %v339 = vunpack.c.l.b16 %v195
    %v340 = vunpack.c.l.b16 %v196
    %v341 = vunpack.c.l.b16 %v197
    %v342 = vunpack.c.l.b16 %v198
    %v343 = vunpack.c.l.b16 %v199
    %v344 = vunpack.c.l.b16 %v200
    %v345 = vunpack.c.l.b16 %v201
    %v346 = vunpack.c.l.b16 %v202
    %v347 = vunpack.c.l.b16 %v203
    %v348 = vunpack.c.l.b16 %v204
    %v349 = vunpack.c.l.b16 %v205
    %v350 = vunpack.c.l.b16 %v206
    %v351 = vunpack.c.l.b16 %v207
    %v352 = vunpack.c.l.b16 %v208
    %v353 = vunpack.c.l.b16 %v209
    %v354 = vunpack.c.l.b16 %v210
    %v355 = vunpack.c.l.b16 %v211
    %v356 = vunpack.c.l.b16 %v212
    %v357 = vunpack.c.l.b16 %v213
    %v358 = vunpack.c.l.b16 %v214
    %v359 = vunpack.c.l.b16 %v215
    %v360 = vunpack.c.l.b16 %v216
    %v361 = vunpack.c.l.b16 %v217
    %v362 = vunpack.c.l.b16 %v218
    %v363 = vunpack.c.l.b16 %v219
    %v364 = vunpack.c.l.b16 %v220
    %v365 = vunpack.c.l.b16 %v221
    %v366 = vunpack.c.l.b16 %v222
    %v367 = vunpack.c.l.b16 %v223
    %v368 = vunpack.c.l.b16 %v224
    %v369 = vunpack.c.l.b16 %v225
    %v370 = vunpack.c.l.b16 %v226
    %v371 = vunpack.c.l.b16 %v227
    %v372 = vunpack.c.l.b16 %v228
    %v373 = vunpack.c.l.b16 %v229
    %v374 = vunpack.c.l.b16 %v230
    %v375 = vunpack.c.l.b16 %v231
    %v376 = vunpack.c.l.b16 %v232
    %v377 = vunpack.c.l.b16 %v233
    %v378 = vunpack.c.l.b16 %v234
    %v379 = vunpack.c.l.b16 %v235
    %v380 = vunpack.c.l.b16 %v236
    %v381 = vpack.c.b16 %v318, %v317
    %v382 = vpack.c.b16 %v320, %v319
    %v383 = vpack.c.b16 %v322, %v321
    %v384 = vpack.c.b16 %v324, %v323
    %v385 = vpack.c.b16 %v326, %v325
    %v386 = vpack.c.b16 %v328, %v327
    %v387 = vpack.c.b16 %v330, %v329
    %v388 = vpack.c.b16 %v332, %v331
    %v389 = vpack.c.b16 %v334, %v333
    %v390 = vpack.c.b16 %v336, %v335
    %v391 = vpack.c.b16 %v338, %v337
    %v392 = vpack.c.b16 %v340, %v339
    %v393 = vpack.c.b16 %v342, %v341
    %v394 = vpack.c.b16 %v344, %v343
    %v395 = vpack.c.b16 %v346, %v345
    %v396 = vpack.c.b16 %v348, %v347
    %v397 = vpack.c.b16 %v350, %v349
    %v398 = vpack.c.b16 %v352, %v351
    %v399 = vpack.c.b16 %v354, %v353
    %v400 = vpack.c.b16 %v356, %v355
    %v401 = vpack.c.b16 %v358, %v357
    %v402 = vpack.c.b16 %v360, %v359
    %v403 = vpack.c.b16 %v362, %v361
    %v404 = vpack.c.b16 %v364, %v363
    %v405 = vpack.c.b16 %v366, %v365
    %v406 = vpack.c.b16 %v368, %v367
    %v407 = vpack.c.b16 %v370, %v369
    %v408 = vpack.c.b16 %v372, %v371
    %v409 = vpack.c.b16 %v374, %v373
    %v410 = vpack.c.b16 %v376, %v375
    %v411 = vpack.c.b16 %v378, %v377
    %v412 = vpack.c.b16 %v380, %v379
    %v461 = vunpack.c.l.b16 %v237
    %v462 = vunpack.c.l.b16 %v238
    %v463 = vunpack.c.l.b16 %v239
    %v464 = vunpack.c.l.b16 %v240
    %v465 = vunpack.c.l.b16 %v241
    %v466 = vunpack.c.l.b16 %v242
    %v467 = vunpack.c.l.b16 %v243
    %v468 = vunpack.c.l.b16 %v244
    %v469 = vunpack.c.l.b16 %v245
    %v470 = vunpack.c.l.b16 %v246
    %v471 = vunpack.c.l.b16 %v247
    %v472 = vunpack.c.l.b16 %v248
    %v473 = vunpack.c.l.b16 %v249
    %v474 = vunpack.c.l.b16 %v250
    %v475 = vunpack.c.l.b16 %v251
    %v476 = vunpack.c.l.b16 %v252
    %v477 = vpack.c.b16 %v462, %v461
    %v478 = vpack.c.b16 %v464, %v463
    %v479 = vpack.c.b16 %v466, %v465
    %v480 = vpack.c.b16 %v468, %v467
    %v481 = vpack.c.b16 %v470, %v469
    %v482 = vpack.c.b16 %v472, %v471
    %v483 = vpack.c.b16 %v474, %v473
    %v484 = vpack.c.b16 %v476, %v475
    %493 = vmatprep.subr.bf16.mxu0 0
    %494 = vmatpush1.bf16.msra.mxu0 %v477
    %495 = vmatprep.subr.bf16.mxu0 0
    %496 = vmatpush1.bf16.msra.mxu0 %v478
    %497 = vmatprep.subr.bf16.mxu0 0
    %498 = vmatpush1.bf16.msra.mxu0 %v479
    %499 = vmatprep.subr.bf16.mxu0 0
    %500 = vmatpush1.bf16.msra.mxu0 %v480
    %501 = vmatprep.subr.bf16.mxu0 0
    %502 = vmatpush1.bf16.msra.mxu0 %v481
    %503 = vmatprep.subr.bf16.mxu0 0
    %504 = vmatpush1.bf16.msra.mxu0 %v482
    %505 = vmatprep.subr.bf16.mxu0 0
    %506 = vmatpush1.bf16.msra.mxu0 %v483
    %507 = vmatprep.subr.bf16.mxu0 0
    %508 = vmatpush1.bf16.msra.mxu0 %v484
    %509 = vmatprep.subr.bf16.mxu0 0
    %510 = vmatpush1.bf16.msra.mxu0 0
    %511 = vmatprep.subr.bf16.mxu0 0
    %512 = vmatpush1.bf16.msra.mxu0 0
    %513 = vmatprep.subr.bf16.mxu0 0
    %514 = vmatpush1.bf16.msra.mxu0 0
    %515 = vmatprep.subr.bf16.mxu0 0
    %516 = vmatpush1.bf16.msra.mxu0 0
    %517 = vmatprep.subr.bf16.mxu0 0
    %518 = vmatpush1.bf16.msra.mxu0 0
    %519 = vmatprep.subr.bf16.mxu0 0
    %520 = vmatpush1.bf16.msra.mxu0 0
    %521 = vmatprep.subr.bf16.mxu0 0
    %522 = vmatpush1.bf16.msra.mxu0 0
    %523 = vmatprep.subr.bf16.mxu0 0
    %524 = vmatpush1.bf16.msra.mxu0 0
    %525 = vmatprep.mubr.bf16.mxu0 0
    %526 = vmatmul.mubr.bf16.gmra.mrb[0].mxu0 %v381
    %v527 = vpop.f32.mrb[0].mxu0
    %v528 = vadd.f32 0.0, %v527
    %v529 = vpop.f32.mrb[0].mxu0
    %v530 = vpop.f32.mrb[0].mxu0
    %v531 = vadd.f32 0.0, %v530
    %v532 = vpop.f32.mrb[0].mxu0
    %533 = vmatprep.mubr.bf16.mxu0 0
    %534 = vmatmul.mubr.bf16.gmra.mrb[0].mxu0 %v382
    %v535 = vpop.f32.mrb[0].mxu0
    %v536 = vadd.f32 0.0, %v535
    %v537 = vpop.f32.mrb[0].mxu0
    %v538 = vpop.f32.mrb[0].mxu0
    %v539 = vadd.f32 0.0, %v538
    %v540 = vpop.f32.mrb[0].mxu0
    %541 = vmatprep.mubr.bf16.mxu0 0
    %542 = vmatmul.mubr.bf16.gmra.mrb[0].mxu0 %v383
    %v543 = vpop.f32.mrb[0].mxu0
    %v544 = vadd.f32 0.0, %v543
    %v545 = vpop.f32.mrb[0].mxu0
    %v546 = vpop.f32.mrb[0].mxu0
    %v547 = vadd.f32 0.0, %v546
    %v548 = vpop.f32.mrb[0].mxu0
    %549 = vmatprep.mubr.bf16.mxu0 0
    %550 = vmatmul.mubr.bf16.gmra.mrb[0].mxu0 %v384
    %v551 = vpop.f32.mrb[0].mxu0
    %v552 = vadd.f32 0.0, %v551
    %v553 = vpop.f32.mrb[0].mxu0
    %v554 = vpop.f32.mrb[0].mxu0
    %v555 = vadd.f32 0.0, %v554
    %v556 = vpop.f32.mrb[0].mxu0
    %557 = vmatprep.mubr.bf16.mxu0 0
    %558 = vmatmul.mubr.bf16.gmra.mrb[0].mxu0 %v385
    %v559 = vpop.f32.mrb[0].mxu0
    %v560 = vadd.f32 0.0, %v559
    %v561 = vpop.f32.mrb[0].mxu0
    %v562 = vpop.f32.mrb[0].mxu0
    %v563 = vadd.f32 0.0, %v562
    %v564 = vpop.f32.mrb[0].mxu0
    %565 = vmatprep.mubr.bf16.mxu0 0
    %566 = vmatmul.mubr.bf16.gmra.mrb[0].mxu0 %v386
    %v567 = vpop.f32.mrb[0].mxu0
    %v568 = vadd.f32 0.0, %v567
    %v569 = vpop.f32.mrb[0].mxu0
    %v570 = vpop.f32.mrb[0].mxu0
    %v571 = vadd.f32 0.0, %v570
    %v572 = vpop.f32.mrb[0].mxu0
    %573 = vmatprep.mubr.bf16.mxu0 0
    %574 = vmatmul.mubr.bf16.gmra.mrb[0].mxu0 %v387
    %v575 = vpop.f32.mrb[0].mxu0
    %v576 = vadd.f32 0.0, %v575
    %v577 = vpop.f32.mrb[0].mxu0
    %v578 = vpop.f32.mrb[0].mxu0
    %v579 = vadd.f32 0.0, %v578
    %v580 = vpop.f32.mrb[0].mxu0
    %581 = vmatprep.mubr.bf16.mxu0 0
    %582 = vmatmul.mubr.bf16.gmra.mrb[0].mxu0 %v388
    %v583 = vpop.f32.mrb[0].mxu0
    %v584 = vadd.f32 0.0, %v583
    %v585 = vpop.f32.mrb[0].mxu0
    %v586 = vpop.f32.mrb[0].mxu0
    %v587 = vadd.f32 0.0, %v586
    %v588 = vpop.f32.mrb[0].mxu0
    %589 = vmatprep.mubr.bf16.mxu0 0
    %590 = vmatmul.mubr.bf16.gmra.mrb[0].mxu0 %v389
    %v591 = vpop.f32.mrb[0].mxu0
    %v592 = vadd.f32 0.0, %v591
    %v593 = vpop.f32.mrb[0].mxu0
    %v594 = vpop.f32.mrb[0].mxu0
    %v595 = vadd.f32 0.0, %v594
    %v596 = vpop.f32.mrb[0].mxu0
    %597 = vmatprep.mubr.bf16.mxu0 0
    %598 = vmatmul.mubr.bf16.gmra.mrb[0].mxu0 %v390
    %v599 = vpop.f32.mrb[0].mxu0
    %v600 = vadd.f32 0.0, %v599
    %v601 = vpop.f32.mrb[0].mxu0
    %v602 = vpop.f32.mrb[0].mxu0
    %v603 = vadd.f32 0.0, %v602
    %v604 = vpop.f32.mrb[0].mxu0
    %605 = vmatprep.mubr.bf16.mxu0 0
    %606 = vmatmul.mubr.bf16.gmra.mrb[0].mxu0 %v391
    %v607 = vpop.f32.mrb[0].mxu0
    %v608 = vadd.f32 0.0, %v607
    %v609 = vpop.f32.mrb[0].mxu0
    %v610 = vpop.f32.mrb[0].mxu0
    %v611 = vadd.f32 0.0, %v610
    %v612 = vpop.f32.mrb[0].mxu0
    %613 = vmatprep.mubr.bf16.mxu0 0
    %614 = vmatmul.mubr.bf16.gmra.mrb[0].mxu0 %v392
    %v615 = vpop.f32.mrb[0].mxu0
    %v616 = vadd.f32 0.0, %v615
    %v617 = vpop.f32.mrb[0].mxu0
    %v618 = vpop.f32.mrb[0].mxu0
    %v619 = vadd.f32 0.0, %v618
    %v620 = vpop.f32.mrb[0].mxu0
    %621 = vmatprep.mubr.bf16.mxu0 0
    %622 = vmatmul.mubr.bf16.gmra.mrb[0].mxu0 %v393
    %v623 = vpop.f32.mrb[0].mxu0
    %v624 = vadd.f32 0.0, %v623
    %v625 = vpop.f32.mrb[0].mxu0
    %v626 = vpop.f32.mrb[0].mxu0
    %v627 = vadd.f32 0.0, %v626
    %v628 = vpop.f32.mrb[0].mxu0
    %629 = vmatprep.mubr.bf16.mxu0 0
    %630 = vmatmul.mubr.bf16.gmra.mrb[0].mxu0 %v394
    %v631 = vpop.f32.mrb[0].mxu0
    %v632 = vadd.f32 0.0, %v631
    %v633 = vpop.f32.mrb[0].mxu0
    %v634 = vpop.f32.mrb[0].mxu0
    %v635 = vadd.f32 0.0, %v634
    %v636 = vpop.f32.mrb[0].mxu0
    %637 = vmatprep.mubr.bf16.mxu0 0
    %638 = vmatmul.mubr.bf16.gmra.mrb[0].mxu0 %v395
    %v639 = vpop.f32.mrb[0].mxu0
    %v640 = vadd.f32 0.0, %v639
    %v641 = vpop.f32.mrb[0].mxu0
    %v642 = vpop.f32.mrb[0].mxu0
    %v643 = vadd.f32 0.0, %v642
    %v644 = vpop.f32.mrb[0].mxu0
    %645 = vmatprep.mubr.bf16.mxu0 0
    %646 = vmatmul.mubr.bf16.gmra.mrb[0].mxu0 %v396
    %v647 = vpop.f32.mrb[0].mxu0
    %v648 = vadd.f32 0.0, %v647
    %v649 = vpop.f32.mrb[0].mxu0
    %v650 = vpop.f32.mrb[0].mxu0
    %v651 = vadd.f32 0.0, %v650
    %v652 = vpop.f32.mrb[0].mxu0
    %653 = vmatprep.mubr.bf16.mxu0 0
    %654 = vmatmul.mubr.bf16.gmra.mrb[0].mxu0 %v397
    %v655 = vpop.f32.mrb[0].mxu0
    %v656 = vadd.f32 0.0, %v655
    %v657 = vpop.f32.mrb[0].mxu0
    %v658 = vpop.f32.mrb[0].mxu0
    %v659 = vadd.f32 0.0, %v658
    %v660 = vpop.f32.mrb[0].mxu0
    %661 = vmatprep.mubr.bf16.mxu0 0
    %662 = vmatmul.mubr.bf16.gmra.mrb[0].mxu0 %v398
    %v663 = vpop.f32.mrb[0].mxu0
    %v664 = vadd.f32 0.0, %v663
    %v665 = vpop.f32.mrb[0].mxu0
    %v666 = vpop.f32.mrb[0].mxu0
    %v667 = vadd.f32 0.0, %v666
    %v668 = vpop.f32.mrb[0].mxu0
    %669 = vmatprep.mubr.bf16.mxu0 0
    %670 = vmatmul.mubr.bf16.gmra.mrb[0].mxu0 %v399
    %v671 = vpop.f32.mrb[0].mxu0
    %v672 = vadd.f32 0.0, %v671
    %v673 = vpop.f32.mrb[0].mxu0
    %v674 = vpop.f32.mrb[0].mxu0
    %v675 = vadd.f32 0.0, %v674
    %v676 = vpop.f32.mrb[0].mxu0
    %677 = vmatprep.mubr.bf16.mxu0 0
    %678 = vmatmul.mubr.bf16.gmra.mrb[0].mxu0 %v400
    %v679 = vpop.f32.mrb[0].mxu0
    %v680 = vadd.f32 0.0, %v679
    %v681 = vpop.f32.mrb[0].mxu0
    %v682 = vpop.f32.mrb[0].mxu0
    %v683 = vadd.f32 0.0, %v682
    %v684 = vpop.f32.mrb[0].mxu0
    %685 = vmatprep.mubr.bf16.mxu0 0
    %686 = vmatmul.mubr.bf16.gmra.mrb[0].mxu0 %v401
    %v687 = vpop.f32.mrb[0].mxu0
    %v688 = vadd.f32 0.0, %v687
    %v689 = vpop.f32.mrb[0].mxu0
    %v690 = vpop.f32.mrb[0].mxu0
    %v691 = vadd.f32 0.0, %v690
    %v692 = vpop.f32.mrb[0].mxu0
    %693 = vmatprep.mubr.bf16.mxu0 0
    %694 = vmatmul.mubr.bf16.gmra.mrb[0].mxu0 %v402
    %v695 = vpop.f32.mrb[0].mxu0
    %v696 = vadd.f32 0.0, %v695
    %v697 = vpop.f32.mrb[0].mxu0
    %v698 = vpop.f32.mrb[0].mxu0
    %v699 = vadd.f32 0.0, %v698
    %v700 = vpop.f32.mrb[0].mxu0
    %701 = vmatprep.mubr.bf16.mxu0 0
    %702 = vmatmul.mubr.bf16.gmra.mrb[0].mxu0 %v403
    %v703 = vpop.f32.mrb[0].mxu0
    %v704 = vadd.f32 0.0, %v703
    %v705 = vpop.f32.mrb[0].mxu0
    %v706 = vpop.f32.mrb[0].mxu0
    %v707 = vadd.f32 0.0, %v706
    %v708 = vpop.f32.mrb[0].mxu0
    %709 = vmatprep.mubr.bf16.mxu0 0
    %710 = vmatmul.mubr.bf16.gmra.mrb[0].mxu0 %v404
    %v711 = vpop.f32.mrb[0].mxu0
    %v712 = vadd.f32 0.0, %v711
    %v713 = vpop.f32.mrb[0].mxu0
    %v714 = vpop.f32.mrb[0].mxu0
    %v715 = vadd.f32 0.0, %v714
    %v716 = vpop.f32.mrb[0].mxu0
    %717 = vmatprep.mubr.bf16.mxu0 0
    %718 = vmatmul.mubr.bf16.gmra.mrb[0].mxu0 %v405
    %v719 = vpop.f32.mrb[0].mxu0
    %v720 = vadd.f32 0.0, %v719
    %v721 = vpop.f32.mrb[0].mxu0
    %v722 = vpop.f32.mrb[0].mxu0
    %v723 = vadd.f32 0.0, %v722
    %v724 = vpop.f32.mrb[0].mxu0
    %725 = vmatprep.mubr.bf16.mxu0 0
    %726 = vmatmul.mubr.bf16.gmra.mrb[0].mxu0 %v406
    %v727 = vpop.f32.mrb[0].mxu0
    %v728 = vadd.f32 0.0, %v727
    %v729 = vpop.f32.mrb[0].mxu0
    %v730 = vpop.f32.mrb[0].mxu0
    %v731 = vadd.f32 0.0, %v730
    %v732 = vpop.f32.mrb[0].mxu0
    %733 = vmatprep.mubr.bf16.mxu0 0
    %734 = vmatmul.mubr.bf16.gmra.mrb[0].mxu0 %v407
    %v735 = vpop.f32.mrb[0].mxu0
    %v736 = vadd.f32 0.0, %v735
    %v737 = vpop.f32.mrb[0].mxu0
    %v738 = vpop.f32.mrb[0].mxu0
    %v739 = vadd.f32 0.0, %v738
    %v740 = vpop.f32.mrb[0].mxu0
    %741 = vmatprep.mubr.bf16.mxu0 0
    %742 = vmatmul.mubr.bf16.gmra.mrb[0].mxu0 %v408
    %v743 = vpop.f32.mrb[0].mxu0
    %v744 = vadd.f32 0.0, %v743
    %v745 = vpop.f32.mrb[0].mxu0
    %v746 = vpop.f32.mrb[0].mxu0
    %v747 = vadd.f32 0.0, %v746
    %v748 = vpop.f32.mrb[0].mxu0
    %749 = vmatprep.mubr.bf16.mxu0 0
    %750 = vmatmul.mubr.bf16.gmra.mrb[0].mxu0 %v409
    %v751 = vpop.f32.mrb[0].mxu0
    %v752 = vadd.f32 0.0, %v751
    %v753 = vpop.f32.mrb[0].mxu0
    %v754 = vpop.f32.mrb[0].mxu0
    %v755 = vadd.f32 0.0, %v754
    %v756 = vpop.f32.mrb[0].mxu0
    %757 = vmatprep.mubr.bf16.mxu0 0
    %758 = vmatmul.mubr.bf16.gmra.mrb[0].mxu0 %v410
    %v759 = vpop.f32.mrb[0].mxu0
    %v760 = vadd.f32 0.0, %v759
    %v761 = vpop.f32.mrb[0].mxu0
    %v762 = vpop.f32.mrb[0].mxu0
    %v763 = vadd.f32 0.0, %v762
    %v764 = vpop.f32.mrb[0].mxu0
    %765 = vmatprep.mubr.bf16.mxu0 0
    %766 = vmatmul.mubr.bf16.gmra.mrb[0].mxu0 %v411
    %v767 = vpop.f32.mrb[0].mxu0
    %v768 = vadd.f32 0.0, %v767
    %v769 = vpop.f32.mrb[0].mxu0
    %v770 = vpop.f32.mrb[0].mxu0
    %v771 = vadd.f32 0.0, %v770
    %v772 = vpop.f32.mrb[0].mxu0
    %773 = vmatprep.mubr.bf16.mxu0 0
    %774 = vmatmul.mubr.bf16.gmra.mrb[0].mxu0 %v412
    %v775 = vpop.f32.mrb[0].mxu0
    %v776 = vadd.f32 0.0, %v775
    %v777 = vpop.f32.mrb[0].mxu0
    %v778 = vpop.f32.mrb[0].mxu0
    %v779 = vadd.f32 0.0, %v778
    %v780 = vpop.f32.mrb[0].mxu0
    %781 = vdwg.mxu0
    %v782 = vadd.f32 %v109, %v528
    %v783 = vadd.f32 %v110, %v531
    %v784 = vadd.f32 %v111, %v536
    %v785 = vadd.f32 %v112, %v539
    %v786 = vadd.f32 %v113, %v544
    %v787 = vadd.f32 %v114, %v547
    %v788 = vadd.f32 %v115, %v552
    %v789 = vadd.f32 %v116, %v555
    %v790 = vadd.f32 %v117, %v560
    %v791 = vadd.f32 %v118, %v563
    %v792 = vadd.f32 %v119, %v568
    %v793 = vadd.f32 %v120, %v571
    %v794 = vadd.f32 %v121, %v576
    %v795 = vadd.f32 %v122, %v579
    %v796 = vadd.f32 %v123, %v584
    %v797 = vadd.f32 %v124, %v587
    %v798 = vadd.f32 %v125, %v592
    %v799 = vadd.f32 %v126, %v595
    %v800 = vadd.f32 %v127, %v600
    %v801 = vadd.f32 %v128, %v603
    %v802 = vadd.f32 %v129, %v608
    %v803 = vadd.f32 %v130, %v611
    %v804 = vadd.f32 %v131, %v616
    %v805 = vadd.f32 %v132, %v619
    %v806 = vadd.f32 %v133, %v624
    %v807 = vadd.f32 %v134, %v627
    %v808 = vadd.f32 %v135, %v632
    %v809 = vadd.f32 %v136, %v635
    %v810 = vadd.f32 %v137, %v640
    %v811 = vadd.f32 %v138, %v643
    %v812 = vadd.f32 %v139, %v648
    %v813 = vadd.f32 %v140, %v651
    %v814 = vadd.f32 %v141, %v656
    %v815 = vadd.f32 %v142, %v659
    %v816 = vadd.f32 %v143, %v664
    %v817 = vadd.f32 %v144, %v667
    %v818 = vadd.f32 %v145, %v672
    %v819 = vadd.f32 %v146, %v675
    %v820 = vadd.f32 %v147, %v680
    %v821 = vadd.f32 %v148, %v683
    %v822 = vadd.f32 %v149, %v688
    %v823 = vadd.f32 %v150, %v691
    %v824 = vadd.f32 %v151, %v696
    %v825 = vadd.f32 %v152, %v699
    %v826 = vadd.f32 %v153, %v704
    %v827 = vadd.f32 %v154, %v707
    %v828 = vadd.f32 %v155, %v712
    %v829 = vadd.f32 %v156, %v715
    %v830 = vadd.f32 %v157, %v720
    %v831 = vadd.f32 %v158, %v723
    %v832 = vadd.f32 %v159, %v728
    %v833 = vadd.f32 %v160, %v731
    %v834 = vadd.f32 %v161, %v736
    %v835 = vadd.f32 %v162, %v739
    %v836 = vadd.f32 %v163, %v744
    %v837 = vadd.f32 %v164, %v747
    %v838 = vadd.f32 %v165, %v752
    %v839 = vadd.f32 %v166, %v755
    %v840 = vadd.f32 %v167, %v760
    %v841 = vadd.f32 %v168, %v763
    %v842 = vadd.f32 %v169, %v768
    %v843 = vadd.f32 %v170, %v771
    %v844 = vadd.f32 %v171, %v776
    %v845 = vadd.f32 %v172, %v779
    %846 = vst [vmem:[#allocation2] sm:$0xff] %v782
    %847 = vst [vmem:[#allocation2 + $0x8] sm:$0xff] %v783
    %848 = vst [vmem:[#allocation2 + $0x10] sm:$0xff] %v784
    %849 = vst [vmem:[#allocation2 + $0x18] sm:$0xff] %v785
    %850 = vst [vmem:[#allocation2 + $0x20] sm:$0xff] %v786
    %851 = vst [vmem:[#allocation2 + $0x28] sm:$0xff] %v787
    %852 = vst [vmem:[#allocation2 + $0x30] sm:$0xff] %v788
    %853 = vst [vmem:[#allocation2 + $0x38] sm:$0xff] %v789
    %854 = vst [vmem:[#allocation2 + $0x40] sm:$0xff] %v790
    %855 = vst [vmem:[#allocation2 + $0x48] sm:$0xff] %v791
    %856 = vst [vmem:[#allocation2 + $0x50] sm:$0xff] %v792
    %857 = vst [vmem:[#allocation2 + $0x58] sm:$0xff] %v793
    %858 = vst [vmem:[#allocation2 + $0x60] sm:$0xff] %v794
    %859 = vst [vmem:[#allocation2 + $0x68] sm:$0xff] %v795
    %860 = vst [vmem:[#allocation2 + $0x70] sm:$0xff] %v796
    %861 = vst [vmem:[#allocation2 + $0x78] sm:$0xff] %v797
    %862 = vst [vmem:[#allocation2 + $0x80] sm:$0xff] %v798
    %863 = vst [vmem:[#allocation2 + $0x88] sm:$0xff] %v799
    %864 = vst [vmem:[#allocation2 + $0x90] sm:$0xff] %v800
    %865 = vst [vmem:[#allocation2 + $0x98] sm:$0xff] %v801
    %866 = vst [vmem:[#allocation2 + $0xa0] sm:$0xff] %v802
    %867 = vst [vmem:[#allocation2 + $0xa8] sm:$0xff] %v803
    %868 = vst [vmem:[#allocation2 + $0xb0] sm:$0xff] %v804
    %869 = vst [vmem:[#allocation2 + $0xb8] sm:$0xff] %v805
    %870 = vst [vmem:[#allocation2 + $0xc0] sm:$0xff] %v806
    %871 = vst [vmem:[#allocation2 + $0xc8] sm:$0xff] %v807
    %872 = vst [vmem:[#allocation2 + $0xd0] sm:$0xff] %v808
    %873 = vst [vmem:[#allocation2 + $0xd8] sm:$0xff] %v809
    %874 = vst [vmem:[#allocation2 + $0xe0] sm:$0xff] %v810
    %875 = vst [vmem:[#allocation2 + $0xe8] sm:$0xff] %v811
    %876 = vst [vmem:[#allocation2 + $0xf0] sm:$0xff] %v812
    %877 = vst [vmem:[#allocation2 + $0xf8] sm:$0xff] %v813
    %878 = vst [vmem:[#allocation2 + $0x100] sm:$0xff] %v814
    %879 = vst [vmem:[#allocation2 + $0x108] sm:$0xff] %v815
    %880 = vst [vmem:[#allocation2 + $0x110] sm:$0xff] %v816
    %881 = vst [vmem:[#allocation2 + $0x118] sm:$0xff] %v817
    %882 = vst [vmem:[#allocation2 + $0x120] sm:$0xff] %v818
    %883 = vst [vmem:[#allocation2 + $0x128] sm:$0xff] %v819
    %884 = vst [vmem:[#allocation2 + $0x130] sm:$0xff] %v820
    %885 = vst [vmem:[#allocation2 + $0x138] sm:$0xff] %v821
    %886 = vst [vmem:[#allocation2 + $0x140] sm:$0xff] %v822
    %887 = vst [vmem:[#allocation2 + $0x148] sm:$0xff] %v823
    %888 = vst [vmem:[#allocation2 + $0x150] sm:$0xff] %v824
    %889 = vst [vmem:[#allocation2 + $0x158] sm:$0xff] %v825
    %890 = vst [vmem:[#allocation2 + $0x160] sm:$0xff] %v826
    %891 = vst [vmem:[#allocation2 + $0x168] sm:$0xff] %v827
    %892 = vst [vmem:[#allocation2 + $0x170] sm:$0xff] %v828
    %893 = vst [vmem:[#allocation2 + $0x178] sm:$0xff] %v829
    %894 = vst [vmem:[#allocation2 + $0x180] sm:$0xff] %v830
    %895 = vst [vmem:[#allocation2 + $0x188] sm:$0xff] %v831
    %896 = vst [vmem:[#allocation2 + $0x190] sm:$0xff] %v832
    %897 = vst [vmem:[#allocation2 + $0x198] sm:$0xff] %v833
    %898 = vst [vmem:[#allocation2 + $0x1a0] sm:$0xff] %v834
    %899 = vst [vmem:[#allocation2 + $0x1a8] sm:$0xff] %v835
    %900 = vst [vmem:[#allocation2 + $0x1b0] sm:$0xff] %v836
    %901 = vst [vmem:[#allocation2 + $0x1b8] sm:$0xff] %v837
    %902 = vst [vmem:[#allocation2 + $0x1c0] sm:$0xff] %v838
    %903 = vst [vmem:[#allocation2 + $0x1c8] sm:$0xff] %v839
    %904 = vst [vmem:[#allocation2 + $0x1d0] sm:$0xff] %v840
    %905 = vst [vmem:[#allocation2 + $0x1d8] sm:$0xff] %v841
    %906 = vst [vmem:[#allocation2 + $0x1e0] sm:$0xff] %v842
    %907 = vst [vmem:[#allocation2 + $0x1e8] sm:$0xff] %v843
    %908 = vst [vmem:[#allocation2 + $0x1f0] sm:$0xff] %v844
    %909 = vst [vmem:[#allocation2 + $0x1f8] sm:$0xff] %v845
    // Predicated region
    $region26: #{local_critic_forward.4} parent=1 // pred_check
      %p910 = pneg %p41
    $region27: #{local_critic_forward.4} parent=1 // pred_check_branch
      %912 = sbr.rel (%p910) target = $region29
    $region28: #{local_critic_forward.4} parent=1 // pred_region
      %v913 = vld [vmem:[#allocation2] sm:$0xff]
      %v914 = vld [vmem:[#allocation2 + $0x8] sm:$0xff]
      %v915 = vld [vmem:[#allocation2 + $0x10] sm:$0xff]
      %v916 = vld [vmem:[#allocation2 + $0x18] sm:$0xff]
      %v917 = vld [vmem:[#allocation2 + $0x20] sm:$0xff]
      %v918 = vld [vmem:[#allocation2 + $0x28] sm:$0xff]
      %v919 = vld [vmem:[#allocation2 + $0x30] sm:$0xff]
      %v920 = vld [vmem:[#allocation2 + $0x38] sm:$0xff]
      %v921 = vld [vmem:[#allocation2 + $0x40] sm:$0xff]
      %v922 = vld [vmem:[#allocation2 + $0x48] sm:$0xff]
      %v923 = vld [vmem:[#allocation2 + $0x50] sm:$0xff]
      %v924 = vld [vmem:[#allocation2 + $0x58] sm:$0xff]
      %v925 = vld [vmem:[#allocation2 + $0x60] sm:$0xff]
      %v926 = vld [vmem:[#allocation2 + $0x68] sm:$0xff]
      %v927 = vld [vmem:[#allocation2 + $0x70] sm:$0xff]
      %v928 = vld [vmem:[#allocation2 + $0x78] sm:$0xff]
      %v929 = vld [vmem:[#allocation2 + $0x80] sm:$0xff]
      %v930 = vld [vmem:[#allocation2 + $0x88] sm:$0xff]
      %v931 = vld [vmem:[#allocation2 + $0x90] sm:$0xff]
      %v932 = vld [vmem:[#allocation2 + $0x98] sm:$0xff]
      %v933 = vld [vmem:[#allocation2 + $0xa0] sm:$0xff]
      %v934 = vld [vmem:[#allocation2 + $0xa8] sm:$0xff]
      %v935 = vld [vmem:[#allocation2 + $0xb0] sm:$0xff]
      %v936 = vld [vmem:[#allocation2 + $0xb8] sm:$0xff]
      %v937 = vld [vmem:[#allocation2 + $0xc0] sm:$0xff]
      %v938 = vld [vmem:[#allocation2 + $0xc8] sm:$0xff]
      %v939 = vld [vmem:[#allocation2 + $0xd0] sm:$0xff]
      %v940 = vld [vmem:[#allocation2 + $0xd8] sm:$0xff]
      %v941 = vld [vmem:[#allocation2 + $0xe0] sm:$0xff]
      %v942 = vld [vmem:[#allocation2 + $0xe8] sm:$0xff]
      %v943 = vld [vmem:[#allocation2 + $0xf0] sm:$0xff]
      %v944 = vld [vmem:[#allocation2 + $0xf8] sm:$0xff]
      %v945 = vld [vmem:[#allocation2 + $0x100] sm:$0xff]
      %v946 = vld [vmem:[#allocation2 + $0x108] sm:$0xff]
      %v947 = vld [vmem:[#allocation2 + $0x110] sm:$0xff]
      %v948 = vld [vmem:[#allocation2 + $0x118] sm:$0xff]
      %v949 = vld [vmem:[#allocation2 + $0x120] sm:$0xff]
      %v950 = vld [vmem:[#allocation2 + $0x128] sm:$0xff]
      %v951 = vld [vmem:[#allocation2 + $0x130] sm:$0xff]
      %v952 = vld [vmem:[#allocation2 + $0x138] sm:$0xff]
      %v953 = vld [vmem:[#allocation2 + $0x140] sm:$0xff]
      %v954 = vld [vmem:[#allocation2 + $0x148] sm:$0xff]
      %v955 = vld [vmem:[#allocation2 + $0x150] sm:$0xff]
      %v956 = vld [vmem:[#allocation2 + $0x158] sm:$0xff]
      %v957 = vld [vmem:[#allocation2 + $0x160] sm:$0xff]
      %v958 = vld [vmem:[#allocation2 + $0x168] sm:$0xff]
      %v959 = vld [vmem:[#allocation2 + $0x170] sm:$0xff]
      %v960 = vld [vmem:[#allocation2 + $0x178] sm:$0xff]
      %v961 = vld [vmem:[#allocation2 + $0x180] sm:$0xff]
      %v962 = vld [vmem:[#allocation2 + $0x188] sm:$0xff]
      %v963 = vld [vmem:[#allocation2 + $0x190] sm:$0xff]
      %v964 = vld [vmem:[#allocation2 + $0x198] sm:$0xff]
      %v965 = vld [vmem:[#allocation2 + $0x1a0] sm:$0xff]
      %v966 = vld [vmem:[#allocation2 + $0x1a8] sm:$0xff]
      %v967 = vld [vmem:[#allocation2 + $0x1b0] sm:$0xff]
      %v968 = vld [vmem:[#allocation2 + $0x1b8] sm:$0xff]
      %v969 = vld [vmem:[#allocation2 + $0x1c0] sm:$0xff]
      %v970 = vld [vmem:[#allocation2 + $0x1c8] sm:$0xff]
      %v971 = vld [vmem:[#allocation2 + $0x1d0] sm:$0xff]
      %v972 = vld [vmem:[#allocation2 + $0x1d8] sm:$0xff]
      %v973 = vld [vmem:[#allocation2 + $0x1e0] sm:$0xff]
      %v974 = vld [vmem:[#allocation2 + $0x1e8] sm:$0xff]
      %v975 = vld [vmem:[#allocation2 + $0x1f0] sm:$0xff]
      %v976 = vld [vmem:[#allocation2 + $0x1f8] sm:$0xff]
      %v977 = vld [vmem:[#allocation5] sm:$0x1]
      %v979 = vlaneseq
      %v980 = vshrl.u32 %v979, 7
      %v981 = vsub.s32 0, %v980
      %v982 = vrot.slane %v977, %v981
      %v984 = vadd.f32 %v913, %v982
      %v985 = vadd.f32 %v914, %v982
      %v986 = vadd.f32 %v915, %v982
      %v987 = vadd.f32 %v916, %v982
      %v988 = vadd.f32 %v917, %v982
      %v989 = vadd.f32 %v918, %v982
      %v990 = vadd.f32 %v919, %v982
      %v991 = vadd.f32 %v920, %v982
      %v992 = vadd.f32 %v921, %v982
      %v993 = vadd.f32 %v922, %v982
      %v994 = vadd.f32 %v923, %v982
      %v995 = vadd.f32 %v924, %v982
      %v996 = vadd.f32 %v925, %v982
      %v997 = vadd.f32 %v926, %v982
      %v998 = vadd.f32 %v927, %v982
      %v999 = vadd.f32 %v928, %v982
      %v1000 = vadd.f32 %v929, %v982
      %v1001 = vadd.f32 %v930, %v982
      %v1002 = vadd.f32 %v931, %v982
      %v1003 = vadd.f32 %v932, %v982
      %v1004 = vadd.f32 %v933, %v982
      %v1005 = vadd.f32 %v934, %v982
      %v1006 = vadd.f32 %v935, %v982
      %v1007 = vadd.f32 %v936, %v982
      %v1008 = vadd.f32 %v937, %v982
      %v1009 = vadd.f32 %v938, %v982
      %v1010 = vadd.f32 %v939, %v982
      %v1011 = vadd.f32 %v940, %v982
      %v1012 = vadd.f32 %v941, %v982
      %v1013 = vadd.f32 %v942, %v982
      %v1014 = vadd.f32 %v943, %v982
      %v1015 = vadd.f32 %v944, %v982
      %v1016 = vadd.f32 %v945, %v982
      %v1017 = vadd.f32 %v946, %v982
      %v1018 = vadd.f32 %v947, %v982
      %v1019 = vadd.f32 %v948, %v982
      %v1020 = vadd.f32 %v949, %v982
      %v1021 = vadd.f32 %v950, %v982
      %v1022 = vadd.f32 %v951, %v982
      %v1023 = vadd.f32 %v952, %v982
      %v1024 = vadd.f32 %v953, %v982
      %v1025 = vadd.f32 %v954, %v982
      %v1026 = vadd.f32 %v955, %v982
      %v1027 = vadd.f32 %v956, %v982
      %v1028 = vadd.f32 %v957, %v982
      %v1029 = vadd.f32 %v958, %v982
      %v1030 = vadd.f32 %v959, %v982
      %v1031 = vadd.f32 %v960, %v982
      %v1032 = vadd.f32 %v961, %v982
      %v1033 = vadd.f32 %v962, %v982
      %v1034 = vadd.f32 %v963, %v982
      %v1035 = vadd.f32 %v964, %v982
      %v1036 = vadd.f32 %v965, %v982
      %v1037 = vadd.f32 %v966, %v982
      %v1038 = vadd.f32 %v967, %v982
      %v1039 = vadd.f32 %v968, %v982
      %v1040 = vadd.f32 %v969, %v982
      %v1041 = vadd.f32 %v970, %v982
      %v1042 = vadd.f32 %v971, %v982
      %v1043 = vadd.f32 %v972, %v982
      %v1044 = vadd.f32 %v973, %v982
      %v1045 = vadd.f32 %v974, %v982
      %v1046 = vadd.f32 %v975, %v982
      %v1047 = vadd.f32 %v976, %v982
      %vm1048 = vcmp.ge.f32.partialorder %v984, 0.0
      %vm1049 = vcmp.ge.f32.partialorder %v985, 0.0
      %vm1050 = vcmp.ge.f32.partialorder %v986, 0.0
      %vm1051 = vcmp.ge.f32.partialorder %v987, 0.0
      %vm1052 = vcmp.ge.f32.partialorder %v988, 0.0
      %vm1053 = vcmp.ge.f32.partialorder %v989, 0.0
      %vm1054 = vcmp.ge.f32.partialorder %v990, 0.0
      %vm1055 = vcmp.ge.f32.partialorder %v991, 0.0
      %vm1056 = vcmp.ge.f32.partialorder %v992, 0.0
      %vm1057 = vcmp.ge.f32.partialorder %v993, 0.0
      %vm1058 = vcmp.ge.f32.partialorder %v994, 0.0
      %vm1059 = vcmp.ge.f32.partialorder %v995, 0.0
      %vm1060 = vcmp.ge.f32.partialorder %v996, 0.0
      %vm1061 = vcmp.ge.f32.partialorder %v997, 0.0
      %vm1062 = vcmp.ge.f32.partialorder %v998, 0.0
      %vm1063 = vcmp.ge.f32.partialorder %v999, 0.0
      %vm1064 = vcmp.ge.f32.partialorder %v1000, 0.0
      %vm1065 = vcmp.ge.f32.partialorder %v1001, 0.0
      %vm1066 = vcmp.ge.f32.partialorder %v1002, 0.0
      %vm1067 = vcmp.ge.f32.partialorder %v1003, 0.0
      %vm1068 = vcmp.ge.f32.partialorder %v1004, 0.0
      %vm1069 = vcmp.ge.f32.partialorder %v1005, 0.0
      %vm1070 = vcmp.ge.f32.partialorder %v1006, 0.0
      %vm1071 = vcmp.ge.f32.partialorder %v1007, 0.0
      %vm1072 = vcmp.ge.f32.partialorder %v1008, 0.0
      %vm1073 = vcmp.ge.f32.partialorder %v1009, 0.0
      %vm1074 = vcmp.ge.f32.partialorder %v1010, 0.0
      %vm1075 = vcmp.ge.f32.partialorder %v1011, 0.0
      %vm1076 = vcmp.ge.f32.partialorder %v1012, 0.0
      %vm1077 = vcmp.ge.f32.partialorder %v1013, 0.0
      %vm1078 = vcmp.ge.f32.partialorder %v1014, 0.0
      %vm1079 = vcmp.ge.f32.partialorder %v1015, 0.0
      %vm1080 = vcmp.ge.f32.partialorder %v1016, 0.0
      %vm1081 = vcmp.ge.f32.partialorder %v1017, 0.0
      %vm1082 = vcmp.ge.f32.partialorder %v1018, 0.0
      %vm1083 = vcmp.ge.f32.partialorder %v1019, 0.0
      %vm1084 = vcmp.ge.f32.partialorder %v1020, 0.0
      %vm1085 = vcmp.ge.f32.partialorder %v1021, 0.0
      %vm1086 = vcmp.ge.f32.partialorder %v1022, 0.0
      %vm1087 = vcmp.ge.f32.partialorder %v1023, 0.0
      %vm1088 = vcmp.ge.f32.partialorder %v1024, 0.0
      %vm1089 = vcmp.ge.f32.partialorder %v1025, 0.0
      %vm1090 = vcmp.ge.f32.partialorder %v1026, 0.0
      %vm1091 = vcmp.ge.f32.partialorder %v1027, 0.0
      %vm1092 = vcmp.ge.f32.partialorder %v1028, 0.0
      %vm1093 = vcmp.ge.f32.partialorder %v1029, 0.0
      %vm1094 = vcmp.ge.f32.partialorder %v1030, 0.0
      %vm1095 = vcmp.ge.f32.partialorder %v1031, 0.0
      %vm1096 = vcmp.ge.f32.partialorder %v1032, 0.0
      %vm1097 = vcmp.ge.f32.partialorder %v1033, 0.0
      %vm1098 = vcmp.ge.f32.partialorder %v1034, 0.0
      %vm1099 = vcmp.ge.f32.partialorder %v1035, 0.0
      %vm1100 = vcmp.ge.f32.partialorder %v1036, 0.0
      %vm1101 = vcmp.ge.f32.partialorder %v1037, 0.0
      %vm1102 = vcmp.ge.f32.partialorder %v1038, 0.0
      %vm1103 = vcmp.ge.f32.partialorder %v1039, 0.0
      %vm1104 = vcmp.ge.f32.partialorder %v1040, 0.0
      %vm1105 = vcmp.ge.f32.partialorder %v1041, 0.0
      %vm1106 = vcmp.ge.f32.partialorder %v1042, 0.0
      %vm1107 = vcmp.ge.f32.partialorder %v1043, 0.0
      %vm1108 = vcmp.ge.f32.partialorder %v1044, 0.0
      %vm1109 = vcmp.ge.f32.partialorder %v1045, 0.0
      %vm1110 = vcmp.ge.f32.partialorder %v1046, 0.0
      %vm1111 = vcmp.ge.f32.partialorder %v1047, 0.0
      %v1112 = vmul.f32 %v984, 0.2
      %v1113 = vmul.f32 %v985, 0.2
      %v1114 = vmul.f32 %v986, 0.2
      %v1115 = vmul.f32 %v987, 0.2
      %v1116 = vmul.f32 %v988, 0.2
      %v1117 = vmul.f32 %v989, 0.2
      %v1118 = vmul.f32 %v990, 0.2
      %v1119 = vmul.f32 %v991, 0.2
      %v1120 = vmul.f32 %v992, 0.2
      %v1121 = vmul.f32 %v993, 0.2
      %v1122 = vmul.f32 %v994, 0.2
      %v1123 = vmul.f32 %v995, 0.2
      %v1124 = vmul.f32 %v996, 0.2
      %v1125 = vmul.f32 %v997, 0.2
      %v1126 = vmul.f32 %v998, 0.2
      %v1127 = vmul.f32 %v999, 0.2
      %v1128 = vmul.f32 %v1000, 0.2
      %v1129 = vmul.f32 %v1001, 0.2
      %v1130 = vmul.f32 %v1002, 0.2
      %v1131 = vmul.f32 %v1003, 0.2
      %v1132 = vmul.f32 %v1004, 0.2
      %v1133 = vmul.f32 %v1005, 0.2
      %v1134 = vmul.f32 %v1006, 0.2
      %v1135 = vmul.f32 %v1007, 0.2
      %v1136 = vmul.f32 %v1008, 0.2
      %v1137 = vmul.f32 %v1009, 0.2
      %v1138 = vmul.f32 %v1010, 0.2
      %v1139 = vmul.f32 %v1011, 0.2
      %v1140 = vmul.f32 %v1012, 0.2
      %v1141 = vmul.f32 %v1013, 0.2
      %v1142 = vmul.f32 %v1014, 0.2
      %v1143 = vmul.f32 %v1015, 0.2
      %v1144 = vmul.f32 %v1016, 0.2
      %v1145 = vmul.f32 %v1017, 0.2
      %v1146 = vmul.f32 %v1018, 0.2
      %v1147 = vmul.f32 %v1019, 0.2
      %v1148 = vmul.f32 %v1020, 0.2
      %v1149 = vmul.f32 %v1021, 0.2
      %v1150 = vmul.f32 %v1022, 0.2
      %v1151 = vmul.f32 %v1023, 0.2
      %v1152 = vmul.f32 %v1024, 0.2
      %v1153 = vmul.f32 %v1025, 0.2
      %v1154 = vmul.f32 %v1026, 0.2
      %v1155 = vmul.f32 %v1027, 0.2
      %v1156 = vmul.f32 %v1028, 0.2
      %v1157 = vmul.f32 %v1029, 0.2
      %v1158 = vmul.f32 %v1030, 0.2
      %v1159 = vmul.f32 %v1031, 0.2
      %v1160 = vmul.f32 %v1032, 0.2
      %v1161 = vmul.f32 %v1033, 0.2
      %v1162 = vmul.f32 %v1034, 0.2
      %v1163 = vmul.f32 %v1035, 0.2
      %v1164 = vmul.f32 %v1036, 0.2
      %v1165 = vmul.f32 %v1037, 0.2
      %v1166 = vmul.f32 %v1038, 0.2
      %v1167 = vmul.f32 %v1039, 0.2
      %v1168 = vmul.f32 %v1040, 0.2
      %v1169 = vmul.f32 %v1041, 0.2
      %v1170 = vmul.f32 %v1042, 0.2
      %v1171 = vmul.f32 %v1043, 0.2
      %v1172 = vmul.f32 %v1044, 0.2
      %v1173 = vmul.f32 %v1045, 0.2
      %v1174 = vmul.f32 %v1046, 0.2
      %v1175 = vmul.f32 %v1047, 0.2
      %v1176 = vsel %vm1048, %v984, %v1112
      %v1177 = vsel %vm1049, %v985, %v1113
      %v1178 = vsel %vm1050, %v986, %v1114
      %v1179 = vsel %vm1051, %v987, %v1115
      %v1180 = vsel %vm1052, %v988, %v1116
      %v1181 = vsel %vm1053, %v989, %v1117
      %v1182 = vsel %vm1054, %v990, %v1118
      %v1183 = vsel %vm1055, %v991, %v1119
      %v1184 = vsel %vm1056, %v992, %v1120
      %v1185 = vsel %vm1057, %v993, %v1121
      %v1186 = vsel %vm1058, %v994, %v1122
      %v1187 = vsel %vm1059, %v995, %v1123
      %v1188 = vsel %vm1060, %v996, %v1124
      %v1189 = vsel %vm1061, %v997, %v1125
      %v1190 = vsel %vm1062, %v998, %v1126
      %v1191 = vsel %vm1063, %v999, %v1127
      %v1192 = vsel %vm1064, %v1000, %v1128
      %v1193 = vsel %vm1065, %v1001, %v1129
      %v1194 = vsel %vm1066, %v1002, %v1130
      %v1195 = vsel %vm1067, %v1003, %v1131
      %v1196 = vsel %vm1068, %v1004, %v1132
      %v1197 = vsel %vm1069, %v1005, %v1133
      %v1198 = vsel %vm1070, %v1006, %v1134
      %v1199 = vsel %vm1071, %v1007, %v1135
      %v1200 = vsel %vm1072, %v1008, %v1136
      %v1201 = vsel %vm1073, %v1009, %v1137
      %v1202 = vsel %vm1074, %v1010, %v1138
      %v1203 = vsel %vm1075, %v1011, %v1139
      %v1204 = vsel %vm1076, %v1012, %v1140
      %v1205 = vsel %vm1077, %v1013, %v1141
      %v1206 = vsel %vm1078, %v1014, %v1142
      %v1207 = vsel %vm1079, %v1015, %v1143
      %v1208 = vsel %vm1080, %v1016, %v1144
      %v1209 = vsel %vm1081, %v1017, %v1145
      %v1210 = vsel %vm1082, %v1018, %v1146
      %v1211 = vsel %vm1083, %v1019, %v1147
      %v1212 = vsel %vm1084, %v1020, %v1148
      %v1213 = vsel %vm1085, %v1021, %v1149
      %v1214 = vsel %vm1086, %v1022, %v1150
      %v1215 = vsel %vm1087, %v1023, %v1151
      %v1216 = vsel %vm1088, %v1024, %v1152
      %v1217 = vsel %vm1089, %v1025, %v1153
      %v1218 = vsel %vm1090, %v1026, %v1154
      %v1219 = vsel %vm1091, %v1027, %v1155
      %v1220 = vsel %vm1092, %v1028, %v1156
      %v1221 = vsel %vm1093, %v1029, %v1157
      %v1222 = vsel %vm1094, %v1030, %v1158
      %v1223 = vsel %vm1095, %v1031, %v1159
      %v1224 = vsel %vm1096, %v1032, %v1160
      %v1225 = vsel %vm1097, %v1033, %v1161
      %v1226 = vsel %vm1098, %v1034, %v1162
      %v1227 = vsel %vm1099, %v1035, %v1163
      %v1228 = vsel %vm1100, %v1036, %v1164
      %v1229 = vsel %vm1101, %v1037, %v1165
      %v1230 = vsel %vm1102, %v1038, %v1166
      %v1231 = vsel %vm1103, %v1039, %v1167
      %v1232 = vsel %vm1104, %v1040, %v1168
      %v1233 = vsel %vm1105, %v1041, %v1169
      %v1234 = vsel %vm1106, %v1042, %v1170
      %v1235 = vsel %vm1107, %v1043, %v1171
      %v1236 = vsel %vm1108, %v1044, %v1172
      %v1237 = vsel %vm1109, %v1045, %v1173
      %v1238 = vsel %vm1110, %v1046, %v1174
      %v1239 = vsel %vm1111, %v1047, %v1175
      %v1240 = vpack.c.bf16 %v1177, %v1176
      %v1241 = vpack.c.bf16 %v1179, %v1178
      %v1242 = vpack.c.bf16 %v1181, %v1180
      %v1243 = vpack.c.bf16 %v1183, %v1182
      %v1244 = vpack.c.bf16 %v1185, %v1184
      %v1245 = vpack.c.bf16 %v1187, %v1186
      %v1246 = vpack.c.bf16 %v1189, %v1188
      %v1247 = vpack.c.bf16 %v1191, %v1190
      %v1248 = vpack.c.bf16 %v1193, %v1192
      %v1249 = vpack.c.bf16 %v1195, %v1194
      %v1250 = vpack.c.bf16 %v1197, %v1196
      %v1251 = vpack.c.bf16 %v1199, %v1198
      %v1252 = vpack.c.bf16 %v1201, %v1200
      %v1253 = vpack.c.bf16 %v1203, %v1202
      %v1254 = vpack.c.bf16 %v1205, %v1204
      %v1255 = vpack.c.bf16 %v1207, %v1206
      %v1256 = vpack.c.bf16 %v1209, %v1208
      %v1257 = vpack.c.bf16 %v1211, %v1210
      %v1258 = vpack.c.bf16 %v1213, %v1212
      %v1259 = vpack.c.bf16 %v1215, %v1214
      %v1260 = vpack.c.bf16 %v1217, %v1216
      %v1261 = vpack.c.bf16 %v1219, %v1218
      %v1262 = vpack.c.bf16 %v1221, %v1220
      %v1263 = vpack.c.bf16 %v1223, %v1222
      %v1264 = vpack.c.bf16 %v1225, %v1224
      %v1265 = vpack.c.bf16 %v1227, %v1226
      %v1266 = vpack.c.bf16 %v1229, %v1228
      %v1267 = vpack.c.bf16 %v1231, %v1230
      %v1268 = vpack.c.bf16 %v1233, %v1232
      %v1269 = vpack.c.bf16 %v1235, %v1234
      %v1270 = vpack.c.bf16 %v1237, %v1236
      %v1271 = vpack.c.bf16 %v1239, %v1238
      %v1304 = vunpack.c.l.b16 %v1240
      %v1305 = vunpack.c.h.b16 %v1240
      %v1306 = vunpack.c.l.b16 %v1241
      %v1307 = vunpack.c.h.b16 %v1241
      %v1308 = vunpack.c.l.b16 %v1242
      %v1309 = vunpack.c.h.b16 %v1242
      %v1310 = vunpack.c.l.b16 %v1243
      %v1311 = vunpack.c.h.b16 %v1243
      %v1312 = vunpack.c.l.b16 %v1244
      %v1313 = vunpack.c.h.b16 %v1244
      %v1314 = vunpack.c.l.b16 %v1245
      %v1315 = vunpack.c.h.b16 %v1245
      %v1316 = vunpack.c.l.b16 %v1246
      %v1317 = vunpack.c.h.b16 %v1246
      %v1318 = vunpack.c.l.b16 %v1247
      %v1319 = vunpack.c.h.b16 %v1247
      %v1320 = vunpack.c.l.b16 %v1248
      %v1321 = vunpack.c.h.b16 %v1248
      %v1322 = vunpack.c.l.b16 %v1249
      %v1323 = vunpack.c.h.b16 %v1249
      %v1324 = vunpack.c.l.b16 %v1250
      %v1325 = vunpack.c.h.b16 %v1250
      %v1326 = vunpack.c.l.b16 %v1251
      %v1327 = vunpack.c.h.b16 %v1251
      %v1328 = vunpack.c.l.b16 %v1252
      %v1329 = vunpack.c.h.b16 %v1252
      %v1330 = vunpack.c.l.b16 %v1253
      %v1331 = vunpack.c.h.b16 %v1253
      %v1332 = vunpack.c.l.b16 %v1254
      %v1333 = vunpack.c.h.b16 %v1254
      %v1334 = vunpack.c.l.b16 %v1255
      %v1335 = vunpack.c.h.b16 %v1255
      %v1336 = vunpack.c.l.b16 %v1256
      %v1337 = vunpack.c.h.b16 %v1256
      %v1338 = vunpack.c.l.b16 %v1257
      %v1339 = vunpack.c.h.b16 %v1257
      %v1340 = vunpack.c.l.b16 %v1258
      %v1341 = vunpack.c.h.b16 %v1258
      %v1342 = vunpack.c.l.b16 %v1259
      %v1343 = vunpack.c.h.b16 %v1259
      %v1344 = vunpack.c.l.b16 %v1260
      %v1345 = vunpack.c.h.b16 %v1260
      %v1346 = vunpack.c.l.b16 %v1261
      %v1347 = vunpack.c.h.b16 %v1261
      %v1348 = vunpack.c.l.b16 %v1262
      %v1349 = vunpack.c.h.b16 %v1262
      %v1350 = vunpack.c.l.b16 %v1263
      %v1351 = vunpack.c.h.b16 %v1263
      %v1352 = vunpack.c.l.b16 %v1264
      %v1353 = vunpack.c.h.b16 %v1264
      %v1354 = vunpack.c.l.b16 %v1265
      %v1355 = vunpack.c.h.b16 %v1265
      %v1356 = vunpack.c.l.b16 %v1266
      %v1357 = vunpack.c.h.b16 %v1266
      %v1358 = vunpack.c.l.b16 %v1267
      %v1359 = vunpack.c.h.b16 %v1267
      %v1360 = vunpack.c.l.b16 %v1268
      %v1361 = vunpack.c.h.b16 %v1268
      %v1362 = vunpack.c.l.b16 %v1269
      %v1363 = vunpack.c.h.b16 %v1269
      %v1364 = vunpack.c.l.b16 %v1270
      %v1365 = vunpack.c.h.b16 %v1270
      %v1366 = vunpack.c.l.b16 %v1271
      %v1367 = vunpack.c.h.b16 %v1271
      %v1368 = vpack.c.b16 %v1304, %v1304
      %v1369 = vpack.c.b16 %v1305, %v1305
      %v1370 = vpack.c.b16 %v1306, %v1306
      %v1371 = vpack.c.b16 %v1307, %v1307
      %v1372 = vpack.c.b16 %v1308, %v1308
      %v1373 = vpack.c.b16 %v1309, %v1309
      %v1374 = vpack.c.b16 %v1310, %v1310
      %v1375 = vpack.c.b16 %v1311, %v1311
      %v1376 = vpack.c.b16 %v1312, %v1312
      %v1377 = vpack.c.b16 %v1313, %v1313
      %v1378 = vpack.c.b16 %v1314, %v1314
      %v1379 = vpack.c.b16 %v1315, %v1315
      %v1380 = vpack.c.b16 %v1316, %v1316
      %v1381 = vpack.c.b16 %v1317, %v1317
      %v1382 = vpack.c.b16 %v1318, %v1318
      %v1383 = vpack.c.b16 %v1319, %v1319
      %v1384 = vpack.c.b16 %v1320, %v1320
      %v1385 = vpack.c.b16 %v1321, %v1321
      %v1386 = vpack.c.b16 %v1322, %v1322
      %v1387 = vpack.c.b16 %v1323, %v1323
      %v1388 = vpack.c.b16 %v1324, %v1324
      %v1389 = vpack.c.b16 %v1325, %v1325
      %v1390 = vpack.c.b16 %v1326, %v1326
      %v1391 = vpack.c.b16 %v1327, %v1327
      %v1392 = vpack.c.b16 %v1328, %v1328
      %v1393 = vpack.c.b16 %v1329, %v1329
      %v1394 = vpack.c.b16 %v1330, %v1330
      %v1395 = vpack.c.b16 %v1331, %v1331
      %v1396 = vpack.c.b16 %v1332, %v1332
      %v1397 = vpack.c.b16 %v1333, %v1333
      %v1398 = vpack.c.b16 %v1334, %v1334
      %v1399 = vpack.c.b16 %v1335, %v1335
      %v1400 = vpack.c.b16 %v1336, %v1336
      %v1401 = vpack.c.b16 %v1337, %v1337
      %v1402 = vpack.c.b16 %v1338, %v1338
      %v1403 = vpack.c.b16 %v1339, %v1339
      %v1404 = vpack.c.b16 %v1340, %v1340
      %v1405 = vpack.c.b16 %v1341, %v1341
      %v1406 = vpack.c.b16 %v1342, %v1342
      %v1407 = vpack.c.b16 %v1343, %v1343
      %v1408 = vpack.c.b16 %v1344, %v1344
      %v1409 = vpack.c.b16 %v1345, %v1345
      %v1410 = vpack.c.b16 %v1346, %v1346
      %v1411 = vpack.c.b16 %v1347, %v1347
      %v1412 = vpack.c.b16 %v1348, %v1348
      %v1413 = vpack.c.b16 %v1349, %v1349
      %v1414 = vpack.c.b16 %v1350, %v1350
      %v1415 = vpack.c.b16 %v1351, %v1351
      %v1416 = vpack.c.b16 %v1352, %v1352
      %v1417 = vpack.c.b16 %v1353, %v1353
      %v1418 = vpack.c.b16 %v1354, %v1354
      %v1419 = vpack.c.b16 %v1355, %v1355
      %v1420 = vpack.c.b16 %v1356, %v1356
      %v1421 = vpack.c.b16 %v1357, %v1357
      %v1422 = vpack.c.b16 %v1358, %v1358
      %v1423 = vpack.c.b16 %v1359, %v1359
      %v1424 = vpack.c.b16 %v1360, %v1360
      %v1425 = vpack.c.b16 %v1361, %v1361
      %v1426 = vpack.c.b16 %v1362, %v1362
      %v1427 = vpack.c.b16 %v1363, %v1363
      %v1428 = vpack.c.b16 %v1364, %v1364
      %v1429 = vpack.c.b16 %v1365, %v1365
      %v1430 = vpack.c.b16 %v1366, %v1366
      %v1431 = vpack.c.b16 %v1367, %v1367
      %1496 = vst [vmem:[%s3] sm:$0xf] %v1368
      %1497 = vst [vmem:[%s3 + $0x4] sm:$0xf] %v1369
      %1498 = vst [vmem:[%s3 + $0x8] sm:$0xf] %v1370
      %1499 = vst [vmem:[%s3 + $0xc] sm:$0xf] %v1371
      %1500 = vst [vmem:[%s3 + $0x10] sm:$0xf] %v1372
      %1501 = vst [vmem:[%s3 + $0x14] sm:$0xf] %v1373
      %1502 = vst [vmem:[%s3 + $0x18] sm:$0xf] %v1374
      %1503 = vst [vmem:[%s3 + $0x1c] sm:$0xf] %v1375
      %1504 = vst [vmem:[%s3 + $0x20] sm:$0xf] %v1376
      %1505 = vst [vmem:[%s3 + $0x24] sm:$0xf] %v1377
      %1506 = vst [vmem:[%s3 + $0x28] sm:$0xf] %v1378
      %1507 = vst [vmem:[%s3 + $0x2c] sm:$0xf] %v1379
      %1508 = vst [vmem:[%s3 + $0x30] sm:$0xf] %v1380
      %1509 = vst [vmem:[%s3 + $0x34] sm:$0xf] %v1381
      %1510 = vst [vmem:[%s3 + $0x38] sm:$0xf] %v1382
      %1511 = vst [vmem:[%s3 + $0x3c] sm:$0xf] %v1383
      %1512 = vst [vmem:[%s3 + $0x40] sm:$0xf] %v1384
      %1513 = vst [vmem:[%s3 + $0x44] sm:$0xf] %v1385
      %1514 = vst [vmem:[%s3 + $0x48] sm:$0xf] %v1386
      %1515 = vst [vmem:[%s3 + $0x4c] sm:$0xf] %v1387
      %1516 = vst [vmem:[%s3 + $0x50] sm:$0xf] %v1388
      %1517 = vst [vmem:[%s3 + $0x54] sm:$0xf] %v1389
      %1518 = vst [vmem:[%s3 + $0x58] sm:$0xf] %v1390
      %1519 = vst [vmem:[%s3 + $0x5c] sm:$0xf] %v1391
      %1520 = vst [vmem:[%s3 + $0x60] sm:$0xf] %v1392
      %1521 = vst [vmem:[%s3 + $0x64] sm:$0xf] %v1393
      %1522 = vst [vmem:[%s3 + $0x68] sm:$0xf] %v1394
      %1523 = vst [vmem:[%s3 + $0x6c] sm:$0xf] %v1395
      %1524 = vst [vmem:[%s3 + $0x70] sm:$0xf] %v1396
      %1525 = vst [vmem:[%s3 + $0x74] sm:$0xf] %v1397
      %1526 = vst [vmem:[%s3 + $0x78] sm:$0xf] %v1398
      %1527 = vst [vmem:[%s3 + $0x7c] sm:$0xf] %v1399
      %1528 = vst [vmem:[%s3 + $0x80] sm:$0xf] %v1400
      %1529 = vst [vmem:[%s3 + $0x84] sm:$0xf] %v1401
      %1530 = vst [vmem:[%s3 + $0x88] sm:$0xf] %v1402
      %1531 = vst [vmem:[%s3 + $0x8c] sm:$0xf] %v1403
      %1532 = vst [vmem:[%s3 + $0x90] sm:$0xf] %v1404
      %1533 = vst [vmem:[%s3 + $0x94] sm:$0xf] %v1405
      %1534 = vst [vmem:[%s3 + $0x98] sm:$0xf] %v1406
      %1535 = vst [vmem:[%s3 + $0x9c] sm:$0xf] %v1407
      %1536 = vst [vmem:[%s3 + $0xa0] sm:$0xf] %v1408
      %1537 = vst [vmem:[%s3 + $0xa4] sm:$0xf] %v1409
      %1538 = vst [vmem:[%s3 + $0xa8] sm:$0xf] %v1410
      %1539 = vst [vmem:[%s3 + $0xac] sm:$0xf] %v1411
      %1540 = vst [vmem:[%s3 + $0xb0] sm:$0xf] %v1412
      %1541 = vst [vmem:[%s3 + $0xb4] sm:$0xf] %v1413
      %1542 = vst [vmem:[%s3 + $0xb8] sm:$0xf] %v1414
      %1543 = vst [vmem:[%s3 + $0xbc] sm:$0xf] %v1415
      %1544 = vst [vmem:[%s3 + $0xc0] sm:$0xf] %v1416
      %1545 = vst [vmem:[%s3 + $0xc4] sm:$0xf] %v1417
      %1546 = vst [vmem:[%s3 + $0xc8] sm:$0xf] %v1418
      %1547 = vst [vmem:[%s3 + $0xcc] sm:$0xf] %v1419
      %1548 = vst [vmem:[%s3 + $0xd0] sm:$0xf] %v1420
      %1549 = vst [vmem:[%s3 + $0xd4] sm:$0xf] %v1421
      %1550 = vst [vmem:[%s3 + $0xd8] sm:$0xf] %v1422
      %1551 = vst [vmem:[%s3 + $0xdc] sm:$0xf] %v1423
      %1552 = vst [vmem:[%s3 + $0xe0] sm:$0xf] %v1424
      %1553 = vst [vmem:[%s3 + $0xe4] sm:$0xf] %v1425
      %1554 = vst [vmem:[%s3 + $0xe8] sm:$0xf] %v1426
      %1555 = vst [vmem:[%s3 + $0xec] sm:$0xf] %v1427
      %1556 = vst [vmem:[%s3 + $0xf0] sm:$0xf] %v1428
      %1557 = vst [vmem:[%s3 + $0xf4] sm:$0xf] %v1429
      %1558 = vst [vmem:[%s3 + $0xf8] sm:$0xf] %v1430
      %1559 = vst [vmem:[%s3 + $0xfc] sm:$0xf] %v1431
    $region29: #{local_critic_forward.4} parent=1 // pred_fallthru
      _
    // Predicated region
    $region30: #{local_critic_forward.4} parent=1 // pred_check
      _
    $region31: #{local_critic_forward.4} parent=1 // pred_check_branch
      %1561 = sbr.rel (0) target = $region33
    $region32: #{local_critic_forward.4} parent=1 // pred_region
      _
    $region33: #{local_critic_forward.4} parent=1 // pred_fallthru
      _
    // Predicated region
    $region34: #{local_critic_forward.4} parent=1 // pred_check
      _
    $region35: #{local_critic_forward.4} parent=1 // pred_check_branch
      %1563 = sbr.rel (0) target = $region37
    $region36: #{local_critic_forward.4} parent=1 // pred_region
      _
    $region37: #{local_critic_forward.4} parent=1 // pred_fallthru
      _
    %1564 = vsyncpa [#allocation4], 1
    %1565 = vsyncpa [#allocation6], 1

// kernel: local_critic_forward.5
$region0: #{local_critic_forward.5}
  #allocation0 [shape = 'u32[]', space=smem, size = 0x4, offset = 0x4, fixed_abs, tag = 'smem constant byte address 0x4 - core index']
  #allocation1 [shape = 'u32[144,128]{1,0:T(1,128)}', space=vmem, size = 0x12000, scoped, tag = 'internal scratch']
  #allocation2 [shape = 'f32[128,128]{1,0:T(8,128)}', space=vmem, size = 0x10000, scoped, tag = 'scratch operand']
  %s0 = inlined_call_operand.vmem [shape: bf16[128,1664], index: 0, kind: input, shape index: {}]
  %s1 = inlined_call_operand.vmem [shape: bf16[1664,128], index: 1, kind: input, shape index: {}]
  %s2 = inlined_call_operand.vmem [shape: f32[1,128], index: 2, kind: input, shape index: {}]
  %s3 = inlined_call_operand.vmem [shape: bf16[128,128], index: 3, kind: output, shape index: {}]
  %s4 = sld [smem:[#allocation0]]
  $region94: #{local_critic_forward.5} parent=0
    _
  %s6 = ssub.s32 1, %s4
  %s7 = scalar_select 0, %s6, %s4
  $region1: #{local_critic_forward.5} parent=0
    #allocation3 [shape = 'u8[65536]{0}', space=vmem, size = 0x10000, scoped, tag = 'input window, operand 0']
    loop: start=0, step=1, limit=15
    $region2: #{local_critic_forward.5} parent=1 // loop_pre_header
      _
    $region3: #{local_critic_forward.5} parent=1 // loop_header
      %s9 = sphi 0, %s13
      %p10 = scmp.ge.s32.totalorder %s9, 15
      %s16 = sphi 0, %s35
      %s17 = sphi 0, %s31
      %s18 = sphi 0, %s27
      %s19 = sphi 0, %s16
      %s20 = sphi 0, %s17
      %s21 = sphi 0, %s18
      %s22 = sphi 0, %s19
      %s23 = sphi 0, %s20
      %s24 = sphi 0, %s21
      %s40 = sphi 0, %s42
      %s43 = sphi 0, %s40
      %s44 = sphi 0, %s43
      %s60 = sphi 0, %s44
      %s68 = sphi 0, %s70
      %s71 = sphi 0, %s68
      %s72 = sphi 0, %s71
      %s88 = sphi 0, %s72
      %s94 = sphi 0, %s96
      %s97 = sphi 0, %s94
      %s98 = sphi 0, %s97
      %s114 = sphi 0, %s98
      %s122 = sphi 0, %s124
      %s125 = sphi 0, %s122
      %s126 = sphi 0, %s125
      %s142 = sphi 0, %s126
    $region4: #{local_critic_forward.5} parent=1 // loop_header_branch
      %12 = sbr.rel (%p10) target = $region8
    $region5: #{local_critic_forward.5} parent=1 // loop_body
      %s14 = ssub.s32 %s9, 1
      %s15 = ssub.s32 %s9, 2
      %s25 = sadd.s32 1, %s18
      %p26 = scmp.ge.s32.totalorder %s25, 13
      %s27 = scalar_select %p26, 0, %s25
      %s28 = sadd.s32 1, %s17
      %s29 = scalar_select %p26, %s28, %s17
      %p30 = scmp.ge.s32.totalorder %s29, 1
      %s31 = scalar_select %p30, 0, %s29
      %s32 = sadd.s32 1, %s16
      %s33 = scalar_select %p30, %s32, %s16
      %p34 = scmp.ge.s32.totalorder %s33, 1
      %s35 = scalar_select %p34, 0, %s33
      %s36 = ssub.s32 %s16, %s35
      %s37 = ssub.s32 %s18, %s27
      %s38 = sor.u32 %s36, %s37
      %p39 = scmp.eq.s32.totalorder %s38, 0
      %s41 = sadd.s32 %s40, 1
      %s42 = scalar_select %p39, %s40, %s41
      %p45 = pneg %p39
      %p46 = scmp.eq.s32.totalorder %s9, 12
      %p47 = por %p45, %p46
      %p48 = scmp.ne.s32.totalorder %s40, %s43
      %p49 = scmp.eq.s32.totalorder %s9, 0
      %p50 = por %p48, %p49
      %p51 = scmp.ne.s32.totalorder %s40, %s43
      %p52 = scmp.eq.s32.totalorder %s14, 12
      %p53 = por %p51, %p52
      %p54 = scmp.ne.s32.totalorder %s43, %s44
      %p55 = scmp.eq.s32.totalorder %s14, 0
      %p56 = por %p54, %p55
      %p57 = scmp.ne.s32.totalorder %s43, %s44
      %p58 = scmp.eq.s32.totalorder %s15, 12
      %p59 = por %p57, %p58
      %p61 = scmp.ne.s32.totalorder %s44, %s60
      %p62 = scmp.eq.s32.totalorder %s15, 0
      %p63 = por %p61, %p62
      %s64 = ssub.s32 %s18, %s27
      %s65 = ssub.s32 %s17, %s31
      %s66 = sor.u32 %s64, %s65
      %p67 = scmp.eq.s32.totalorder %s66, 0
      %s69 = sadd.s32 %s68, 1
      %s70 = scalar_select %p67, %s68, %s69
      %p73 = pneg %p67
      %p74 = scmp.eq.s32.totalorder %s9, 12
      %p75 = por %p73, %p74
      %p76 = scmp.ne.s32.totalorder %s68, %s71
      %p77 = scmp.eq.s32.totalorder %s9, 0
      %p78 = por %p76, %p77
      %p79 = scmp.ne.s32.totalorder %s68, %s71
      %p80 = scmp.eq.s32.totalorder %s14, 12
      %p81 = por %p79, %p80
      %p82 = scmp.ne.s32.totalorder %s71, %s72
      %p83 = scmp.eq.s32.totalorder %s14, 0
      %p84 = por %p82, %p83
      %p85 = scmp.ne.s32.totalorder %s71, %s72
      %p86 = scmp.eq.s32.totalorder %s15, 12
      %p87 = por %p85, %p86
      %p89 = scmp.ne.s32.totalorder %s72, %s88
      %p90 = scmp.eq.s32.totalorder %s15, 0
      %p91 = por %p89, %p90
      %s92 = ssub.s32 %s17, %s31
      %p93 = scmp.eq.s32.totalorder %s92, 0
      %s95 = sadd.s32 %s94, 1
      %s96 = scalar_select %p93, %s94, %s95
      %p99 = pneg %p93
      %p100 = scmp.eq.s32.totalorder %s9, 12
      %p101 = por %p99, %p100
      %p102 = scmp.ne.s32.totalorder %s94, %s97
      %p103 = scmp.eq.s32.totalorder %s9, 0
      %p104 = por %p102, %p103
      %p105 = scmp.ne.s32.totalorder %s94, %s97
      %p106 = scmp.eq.s32.totalorder %s14, 12
      %p107 = por %p105, %p106
      %p108 = scmp.ne.s32.totalorder %s97, %s98
      %p109 = scmp.eq.s32.totalorder %s14, 0
      %p110 = por %p108, %p109
      %p111 = scmp.ne.s32.totalorder %s97, %s98
      %p112 = scmp.eq.s32.totalorder %s15, 12
      %p113 = por %p111, %p112
      %p115 = scmp.ne.s32.totalorder %s98, %s114
      %p116 = scmp.eq.s32.totalorder %s15, 0
      %p117 = por %p115, %p116
      %s118 = ssub.s32 %s16, %s35
      %s119 = ssub.s32 %s17, %s31
      %s120 = sor.u32 %s118, %s119
      %p121 = scmp.eq.s32.totalorder %s120, 0
      %s123 = sadd.s32 %s122, 1
      %s124 = scalar_select %p121, %s122, %s123
      %p127 = pneg %p121
      %p128 = scmp.eq.s32.totalorder %s9, 12
      %p129 = por %p127, %p128
      %p130 = scmp.ne.s32.totalorder %s122, %s125
      %p131 = scmp.eq.s32.totalorder %s9, 0
      %p132 = por %p130, %p131
      %p133 = scmp.ne.s32.totalorder %s122, %s125
      %p134 = scmp.eq.s32.totalorder %s14, 12
      %p135 = por %p133, %p134
      %p136 = scmp.ne.s32.totalorder %s125, %s126
      %p137 = scmp.eq.s32.totalorder %s14, 0
      %p138 = por %p136, %p137
      %p139 = scmp.ne.s32.totalorder %s125, %s126
      %p140 = scmp.eq.s32.totalorder %s15, 12
      %p141 = por %p139, %p140
      %p143 = scmp.ne.s32.totalorder %s126, %s142
      %p144 = scmp.eq.s32.totalorder %s15, 0
      %p145 = por %p143, %p144
      %p146 = scmp.le.s32.totalorder 1, %s9
      %p147 = scmp.lt.s32.totalorder %s9, 14
      %p148 = pnand %p146, %p147
      %p149 = pneg %p148
      // Predicated region
      $region9: #{local_critic_forward.5} parent=5 // pred_check
        _
      $region10: #{local_critic_forward.5} parent=5 // pred_check_branch
        %151 = sbr.rel (%p148) target = $region12
      $region11: #{local_critic_forward.5} parent=5 // pred_region
        %s152 = ssub.s32 %s9, 1
        // Predicated region
        $region13: #{local_critic_forward.5} parent=11 // pred_check
          %p153 = pneg %p110
        $region14: #{local_critic_forward.5} parent=11 // pred_check_branch
          %155 = sbr.rel (%p153) target = $region16
        $region15: #{local_critic_forward.5} parent=11 // pred_region
          %p156 = scmp.lt.s32.totalorder %s20, 0
          %s157 = scalar_select %p156, %s20, 0
          %s158 = scalar_lea.vmem %s2, %s157
        $region16: #{local_critic_forward.5} parent=11 // pred_fallthru
          _
      $region12: #{local_critic_forward.5} parent=5 // pred_fallthru
        _
      %p159 = scmp.lt.s32.totalorder %s9, 13
      // Predicated region
      $region17: #{local_critic_forward.5} parent=5 // pred_check
        %p160 = pneg %p159
      $region18: #{local_critic_forward.5} parent=5 // pred_check_branch
        %162 = sbr.rel (%p160) target = $region20
      $region19: #{local_critic_forward.5} parent=5 // pred_region
        // Predicated region
        $region21: #{local_critic_forward.5} parent=19 // pred_check
          %p163 = pneg %p50
        $region22: #{local_critic_forward.5} parent=19 // pred_check_branch
          %165 = sbr.rel (%p163) target = $region24
        $region23: #{local_critic_forward.5} parent=19 // pred_region
          %s166 = sand.u32 %s40, 1
          %s167 = sand.u32 %s40, 1
          %s168 = smul.addr %s167, 64
          %s169 = scalar_lea.vmem [#allocation3], %s168
          %s170 = smul.u32 16, %s16
          %s171 = smul.addr %s170, 13
          %s172 = sadd.s32 %s18, %s171
          %s173 = smul.addr %s172, 4
          %s174 = scalar_lea.vmem %s0, %s173
          // Predicated region
          $region25: #{local_critic_forward.5} parent=23 // pred_check
            _
          $region26: #{local_critic_forward.5} parent=23 // pred_check_branch
            %176 = sbr.rel (0) target = $region28
          $region27: #{local_critic_forward.5} parent=23 // pred_region
            // Predicated region
            $region29: #{local_critic_forward.5} parent=27 // pred_check
              _
            $region30: #{local_critic_forward.5} parent=27 // pred_check_branch
              %178 = sbr.rel target = $region32
            $region31: #{local_critic_forward.5} parent=27 // pred_region
              // Predicated region
              $region44: #{local_critic_forward.5} parent=31 // pred_check
                _
              $region45: #{local_critic_forward.5} parent=31 // pred_check_branch
                %223 = sbr.rel (0) target = $region47
              $region46: #{local_critic_forward.5} parent=31 // pred_region
                loop: start=0, step=1, limit=1
                $region48: #{local_critic_forward.5} parent=46 // loop_pre_header
                  _
                $region49: #{local_critic_forward.5} parent=46 // loop_header
                  %s225 = sphi 0, %s229
                  %p226 = scmp.ge.s32.totalorder %s225, 1
                  %s230 = sphi %s174, %s174
                  %s231 = sphi %s169, %s169
                $region50: #{local_critic_forward.5} parent=46 // loop_header_branch
                  %228 = sbr.rel (%p226) target = $region54
                $region51: #{local_critic_forward.5} parent=46 // loop_body
                  _
                $region52: #{local_critic_forward.5} parent=46 // loop_footer
                  %s229 = sadd.s32 1, %s225
                $region53: #{local_critic_forward.5} parent=46 // loop_footer_branch
                  %224 = sbr.rel target = $region49
                $region54: #{local_critic_forward.5} parent=46 // loop_exit
                  _
                loop: start=0, step=1, limit=1
                $region55: #{local_critic_forward.5} parent=46 // loop_pre_header
                  _
                $region56: #{local_critic_forward.5} parent=46 // loop_header
                  %s234 = sphi 0, %s238
                  %p235 = scmp.ge.s32.totalorder %s234, 1
                  %s239 = sphi %s174, %s174
                  %s240 = sphi %s169, %s169
                $region57: #{local_critic_forward.5} parent=46 // loop_header_branch
                  %237 = sbr.rel (%p235) target = $region61
                $region58: #{local_critic_forward.5} parent=46 // loop_body
                  %v241 = vld [vmem:[%s239] sm:$0xf]
                  %242 = vst [vmem:[%s240] sm:$0xf] %v241
                  %v243 = vld [vmem:[%s239 + $0x34] sm:$0xf]
                  %244 = vst [vmem:[%s240 + $0x4] sm:$0xf] %v243
                  %v245 = vld [vmem:[%s239 + $0x68] sm:$0xf]
                  %246 = vst [vmem:[%s240 + $0x8] sm:$0xf] %v245
                  %v247 = vld [vmem:[%s239 + $0x9c] sm:$0xf]
                  %248 = vst [vmem:[%s240 + $0xc] sm:$0xf] %v247
                  %v249 = vld [vmem:[%s239 + $0xd0] sm:$0xf]
                  %250 = vst [vmem:[%s240 + $0x10] sm:$0xf] %v249
                  %v251 = vld [vmem:[%s239 + $0x104] sm:$0xf]
                  %252 = vst [vmem:[%s240 + $0x14] sm:$0xf] %v251
                  %v253 = vld [vmem:[%s239 + $0x138] sm:$0xf]
                  %254 = vst [vmem:[%s240 + $0x18] sm:$0xf] %v253
                  %v255 = vld [vmem:[%s239 + $0x16c] sm:$0xf]
                  %256 = vst [vmem:[%s240 + $0x1c] sm:$0xf] %v255
                  %v257 = vld [vmem:[%s239 + $0x1a0] sm:$0xf]
                  %258 = vst [vmem:[%s240 + $0x20] sm:$0xf] %v257
                  %v259 = vld [vmem:[%s239 + $0x1d4] sm:$0xf]
                  %260 = vst [vmem:[%s240 + $0x24] sm:$0xf] %v259
                  %v261 = vld [vmem:[%s239 + $0x208] sm:$0xf]
                  %262 = vst [vmem:[%s240 + $0x28] sm:$0xf] %v261
                  %v263 = vld [vmem:[%s239 + $0x23c] sm:$0xf]
                  %264 = vst [vmem:[%s240 + $0x2c] sm:$0xf] %v263
                  %v265 = vld [vmem:[%s239 + $0x270] sm:$0xf]
                  %266 = vst [vmem:[%s240 + $0x30] sm:$0xf] %v265
                  %v267 = vld [vmem:[%s239 + $0x2a4] sm:$0xf]
                  %268 = vst [vmem:[%s240 + $0x34] sm:$0xf] %v267
                  %v269 = vld [vmem:[%s239 + $0x2d8] sm:$0xf]
                  %270 = vst [vmem:[%s240 + $0x38] sm:$0xf] %v269
                  %v271 = vld [vmem:[%s239 + $0x30c] sm:$0xf]
                  %272 = vst [vmem:[%s240 + $0x3c] sm:$0xf] %v271
                $region59: #{local_critic_forward.5} parent=46 // loop_footer
                  %s238 = sadd.s32 1, %s234
                $region60: #{local_critic_forward.5} parent=46 // loop_footer_branch
                  %233 = sbr.rel target = $region56
                $region61: #{local_critic_forward.5} parent=46 // loop_exit
                  _
              $region47: #{local_critic_forward.5} parent=31 // pred_fallthru
                _
            $region32: #{local_critic_forward.5} parent=27 // pred_fallthru
              _
            // Predicated region
            $region33: #{local_critic_forward.5} parent=27 // pred_check
              _
            $region34: #{local_critic_forward.5} parent=27 // pred_check_branch
              %180 = sbr.rel (0) target = $region36
            $region35: #{local_critic_forward.5} parent=27 // pred_region
              loop: start=0, step=1, limit=1
              $region37: #{local_critic_forward.5} parent=35 // loop_pre_header
                _
              $region38: #{local_critic_forward.5} parent=35 // loop_header
                %s183 = sphi 0, %s187
                %p184 = scmp.ge.s32.totalorder %s183, 1
                %s188 = sphi %s174, %s174
                %s189 = sphi %s169, %s169
              $region39: #{local_critic_forward.5} parent=35 // loop_header_branch
                %186 = sbr.rel (%p184) target = $region43
              $region40: #{local_critic_forward.5} parent=35 // loop_body
                %v190 = vld [vmem:[%s188] sm:$0xf]
                %191 = vst [vmem:[%s189] sm:$0xf] %v190
                %v192 = vld [vmem:[%s188 + $0x34] sm:$0xf]
                %193 = vst [vmem:[%s189 + $0x4] sm:$0xf] %v192
                %v194 = vld [vmem:[%s188 + $0x68] sm:$0xf]
                %195 = vst [vmem:[%s189 + $0x8] sm:$0xf] %v194
                %v196 = vld [vmem:[%s188 + $0x9c] sm:$0xf]
                %197 = vst [vmem:[%s189 + $0xc] sm:$0xf] %v196
                %v198 = vld [vmem:[%s188 + $0xd0] sm:$0xf]
                %199 = vst [vmem:[%s189 + $0x10] sm:$0xf] %v198
                %v200 = vld [vmem:[%s188 + $0x104] sm:$0xf]
                %201 = vst [vmem:[%s189 + $0x14] sm:$0xf] %v200
                %v202 = vld [vmem:[%s188 + $0x138] sm:$0xf]
                %203 = vst [vmem:[%s189 + $0x18] sm:$0xf] %v202
                %v204 = vld [vmem:[%s188 + $0x16c] sm:$0xf]
                %205 = vst [vmem:[%s189 + $0x1c] sm:$0xf] %v204
                %v206 = vld [vmem:[%s188 + $0x1a0] sm:$0xf]
                %207 = vst [vmem:[%s189 + $0x20] sm:$0xf] %v206
                %v208 = vld [vmem:[%s188 + $0x1d4] sm:$0xf]
                %209 = vst [vmem:[%s189 + $0x24] sm:$0xf] %v208
                %v210 = vld [vmem:[%s188 + $0x208] sm:$0xf]
                %211 = vst [vmem:[%s189 + $0x28] sm:$0xf] %v210
                %v212 = vld [vmem:[%s188 + $0x23c] sm:$0xf]
                %213 = vst [vmem:[%s189 + $0x2c] sm:$0xf] %v212
                %v214 = vld [vmem:[%s188 + $0x270] sm:$0xf]
                %215 = vst [vmem:[%s189 + $0x30] sm:$0xf] %v214
                %v216 = vld [vmem:[%s188 + $0x2a4] sm:$0xf]
                %217 = vst [vmem:[%s189 + $0x34] sm:$0xf] %v216
                %v218 = vld [vmem:[%s188 + $0x2d8] sm:$0xf]
                %219 = vst [vmem:[%s189 + $0x38] sm:$0xf] %v218
                %v220 = vld [vmem:[%s188 + $0x30c] sm:$0xf]
                %221 = vst [vmem:[%s189 + $0x3c] sm:$0xf] %v220
              $region41: #{local_critic_forward.5} parent=35 // loop_footer
                %s187 = sadd.s32 1, %s183
              $region42: #{local_critic_forward.5} parent=35 // loop_footer_branch
                %182 = sbr.rel target = $region38
              $region43: #{local_critic_forward.5} parent=35 // loop_exit
                _
            $region36: #{local_critic_forward.5} parent=27 // pred_fallthru
              _
          $region28: #{local_critic_forward.5} parent=23 // pred_fallthru
            _
          %273 = vnop
        $region24: #{local_critic_forward.5} parent=19 // pred_fallthru
          _
        // Predicated region
        $region62: #{local_critic_forward.5} parent=19 // pred_check
          %p274 = pneg %p78
        $region63: #{local_critic_forward.5} parent=19 // pred_check_branch
          %276 = sbr.rel (%p274) target = $region65
        $region64: #{local_critic_forward.5} parent=19 // pred_region
          %s277 = smul.u32 16, %s18
          %p278 = scmp.lt.s32.totalorder %s277, 207
          %s279 = scalar_select %p278, %s277, 207
          %p280 = scmp.lt.s32.totalorder %s17, 0
          %s281 = scalar_select %p280, %s17, 0
          %s282 = sadd.s32 %s281, %s279
          %s283 = smul.addr %s282, 4
          %s284 = scalar_lea.vmem %s1, %s283
          %s285 = smul.u32 16, %s18
        $region65: #{local_critic_forward.5} parent=19 // pred_fallthru
          _
      $region20: #{local_critic_forward.5} parent=5 // pred_fallthru
        _
      %p286 = scmp.le.s32.totalorder 1, %s9
      %p287 = scmp.lt.s32.totalorder %s9, 14
      %p288 = pnand %p286, %p287
      %p289 = pneg %p288
      // Predicated region
      $region66: #{local_critic_forward.5} parent=5 // pred_check
        _
      $region67: #{local_critic_forward.5} parent=5 // pred_check_branch
        %291 = sbr.rel (%p288) target = $region69
      $region68: #{local_critic_forward.5} parent=5 // pred_region
        %s292 = ssub.s32 %s9, 1
        %s293 = sand.u32 %s43, 1
        %s294 = sand.u32 %s43, 1
        %s295 = smul.addr %s294, 64
        %s296 = scalar_lea.vmem [#allocation3], %s295
        // Predicated region
        $region70: #{local_critic_forward.5} parent=68 // pred_check
          %p297 = pneg %p56
        $region71: #{local_critic_forward.5} parent=68 // pred_check_branch
          %299 = sbr.rel (%p297) target = $region73
        $region72: #{local_critic_forward.5} parent=68 // pred_region
          _
        $region73: #{local_critic_forward.5} parent=68 // pred_fallthru
          _
        %s300 = sand.u32 %s43, 1
        %s301 = sand.u32 %s43, 1
        %s302 = smul.addr %s301, 64
        %s303 = scalar_lea.vmem [#allocation3], %s302
        %p304 = pneg %p56
        %p305 = pneg %p53
        %s306 = smul.u32 16, %s21
        %p307 = scmp.lt.s32.totalorder %s306, 207
        %s308 = scalar_select %p307, %s306, 207
        %p309 = scmp.lt.s32.totalorder %s20, 0
        %s310 = scalar_select %p309, %s20, 0
        %s311 = sadd.s32 %s310, %s308
        %s312 = smul.addr %s311, 4
        %s313 = scalar_lea.vmem %s1, %s312
        %p314 = pneg %p84
        %p315 = pneg %p81
        %p316 = scmp.lt.s32.totalorder %s20, 0
        %s317 = scalar_select %p316, %s20, 0
        %s318 = scalar_lea.vmem %s2, %s317
        %p319 = pneg %p110
        %p320 = pneg %p107
        %p321 = pneg %p138
        %p322 = pneg %p135
        %s323 = smul.u32 16, %s19
        %p324 = scmp.lt.s32.totalorder %s323, 15
        %s325 = scalar_select %p324, %s323, 15
        %p326 = scmp.lt.s32.totalorder %s20, 0
        %s327 = scalar_select %p326, %s20, 0
        %s328 = sadd.s32 %s327, %s325
        %s329 = smul.addr %s328, 4
        %s330 = scalar_lea.vmem %s3, %s329
        %s331 = smul.u32 16, %s19
        %s332 = smul.u32 16, %s21
        %p333 = scmp.lt.s32.totalorder %s332, 207
        %s334 = scalar_select %p333, %s332, 207
        %p335 = scmp.lt.s32.totalorder %s20, 0
        %s336 = scalar_select %p335, %s20, 0
        %s337 = sadd.s32 %s336, %s334
        %s338 = smul.addr %s337, 4
        %s339 = scalar_lea.vmem %s1, %s338
        %s340 = smul.u32 16, %s21
        %p341 = scmp.lt.s32.totalorder %s20, 0
        %s342 = scalar_select %p341, %s20, 0
        %s343 = scalar_lea.vmem %s2, %s342
        %s344 = smul.u32 16, %s19
        %p345 = scmp.lt.s32.totalorder %s344, 15
        %s346 = scalar_select %p345, %s344, 15
        %p347 = scmp.lt.s32.totalorder %s20, 0
        %s348 = scalar_select %p347, %s20, 0
        %s349 = sadd.s32 %s348, %s346
        %s350 = smul.addr %s349, 4
        %s351 = scalar_lea.vmem %s3, %s350
        %s352 = smul.u32 16, %s19
        %p354 = scmp.eq.s32.totalorder %s21, 0
        // Predicated region
        $region74: #{local_critic_forward.5} parent=68 // pred_check
          %p355 = pneg %p354
        $region75: #{local_critic_forward.5} parent=68 // pred_check_branch
          %357 = sbr.rel (%p355) target = $region77
        $region76: #{local_critic_forward.5} parent=68 // pred_region
          %358 = vst [vmem:[#allocation2] sm:$0xff] 0.0
          %359 = vst [vmem:[#allocation2 + $0x8] sm:$0xff] 0.0
          %360 = vst [vmem:[#allocation2 + $0x10] sm:$0xff] 0.0
          %361 = vst [vmem:[#allocation2 + $0x18] sm:$0xff] 0.0
          %362 = vst [vmem:[#allocation2 + $0x20] sm:$0xff] 0.0
          %363 = vst [vmem:[#allocation2 + $0x28] sm:$0xff] 0.0
          %364 = vst [vmem:[#allocation2 + $0x30] sm:$0xff] 0.0
          %365 = vst [vmem:[#allocation2 + $0x38] sm:$0xff] 0.0
          %366 = vst [vmem:[#allocation2 + $0x40] sm:$0xff] 0.0
          %367 = vst [vmem:[#allocation2 + $0x48] sm:$0xff] 0.0
          %368 = vst [vmem:[#allocation2 + $0x50] sm:$0xff] 0.0
          %369 = vst [vmem:[#allocation2 + $0x58] sm:$0xff] 0.0
          %370 = vst [vmem:[#allocation2 + $0x60] sm:$0xff] 0.0
          %371 = vst [vmem:[#allocation2 + $0x68] sm:$0xff] 0.0
          %372 = vst [vmem:[#allocation2 + $0x70] sm:$0xff] 0.0
          %373 = vst [vmem:[#allocation2 + $0x78] sm:$0xff] 0.0
        $region77: #{local_critic_forward.5} parent=68 // pred_fallthru
          _
        %v374 = vld [vmem:[#allocation2] sm:$0xff]
        %v375 = vld [vmem:[#allocation2 + $0x8] sm:$0xff]
        %v376 = vld [vmem:[#allocation2 + $0x10] sm:$0xff]
        %v377 = vld [vmem:[#allocation2 + $0x18] sm:$0xff]
        %v378 = vld [vmem:[#allocation2 + $0x20] sm:$0xff]
        %v379 = vld [vmem:[#allocation2 + $0x28] sm:$0xff]
        %v380 = vld [vmem:[#allocation2 + $0x30] sm:$0xff]
        %v381 = vld [vmem:[#allocation2 + $0x38] sm:$0xff]
        %v382 = vld [vmem:[#allocation2 + $0x40] sm:$0xff]
        %v383 = vld [vmem:[#allocation2 + $0x48] sm:$0xff]
        %v384 = vld [vmem:[#allocation2 + $0x50] sm:$0xff]
        %v385 = vld [vmem:[#allocation2 + $0x58] sm:$0xff]
        %v386 = vld [vmem:[#allocation2 + $0x60] sm:$0xff]
        %v387 = vld [vmem:[#allocation2 + $0x68] sm:$0xff]
        %v388 = vld [vmem:[#allocation2 + $0x70] sm:$0xff]
        %v389 = vld [vmem:[#allocation2 + $0x78] sm:$0xff]
        %v390 = vld [vmem:[%s296] sm:$0xf]
        %v391 = vld [vmem:[%s296 + $0x4] sm:$0xf]
        %v392 = vld [vmem:[%s296 + $0x8] sm:$0xf]
        %v393 = vld [vmem:[%s296 + $0xc] sm:$0xf]
        %v394 = vld [vmem:[%s296 + $0x10] sm:$0xf]
        %v395 = vld [vmem:[%s296 + $0x14] sm:$0xf]
        %v396 = vld [vmem:[%s296 + $0x18] sm:$0xf]
        %v397 = vld [vmem:[%s296 + $0x1c] sm:$0xf]
        %v398 = vld [vmem:[%s296 + $0x20] sm:$0xf]
        %v399 = vld [vmem:[%s296 + $0x24] sm:$0xf]
        %v400 = vld [vmem:[%s296 + $0x28] sm:$0xf]
        %v401 = vld [vmem:[%s296 + $0x2c] sm:$0xf]
        %v402 = vld [vmem:[%s296 + $0x30] sm:$0xf]
        %v403 = vld [vmem:[%s296 + $0x34] sm:$0xf]
        %v404 = vld [vmem:[%s296 + $0x38] sm:$0xf]
        %v405 = vld [vmem:[%s296 + $0x3c] sm:$0xf]
        %v406 = vld [vmem:[%s339] sm:$0xf]
        %v407 = vld [vmem:[%s339 + $0x4] sm:$0xf]
        %v408 = vld [vmem:[%s339 + $0x8] sm:$0xf]
        %v409 = vld [vmem:[%s339 + $0xc] sm:$0xf]
        %v410 = vld [vmem:[%s339 + $0x10] sm:$0xf]
        %v411 = vld [vmem:[%s339 + $0x14] sm:$0xf]
        %v412 = vld [vmem:[%s339 + $0x18] sm:$0xf]
        %v413 = vld [vmem:[%s339 + $0x1c] sm:$0xf]
        %v414 = vld [vmem:[%s339 + $0x20] sm:$0xf]
        %v415 = vld [vmem:[%s339 + $0x24] sm:$0xf]
        %v416 = vld [vmem:[%s339 + $0x28] sm:$0xf]
        %v417 = vld [vmem:[%s339 + $0x2c] sm:$0xf]
        %v418 = vld [vmem:[%s339 + $0x30] sm:$0xf]
        %v419 = vld [vmem:[%s339 + $0x34] sm:$0xf]
        %v420 = vld [vmem:[%s339 + $0x38] sm:$0xf]
        %v421 = vld [vmem:[%s339 + $0x3c] sm:$0xf]
        %v438 = vunpack.c.l.b16 %v390
        %v439 = vunpack.c.l.b16 %v391
        %v440 = vunpack.c.l.b16 %v392
        %v441 = vunpack.c.l.b16 %v393
        %v442 = vunpack.c.l.b16 %v394
        %v443 = vunpack.c.l.b16 %v395
        %v444 = vunpack.c.l.b16 %v396
        %v445 = vunpack.c.l.b16 %v397
        %v446 = vunpack.c.l.b16 %v398
        %v447 = vunpack.c.l.b16 %v399
        %v448 = vunpack.c.l.b16 %v400
        %v449 = vunpack.c.l.b16 %v401
        %v450 = vunpack.c.l.b16 %v402
        %v451 = vunpack.c.l.b16 %v403
        %v452 = vunpack.c.l.b16 %v404
        %v453 = vunpack.c.l.b16 %v405
        %v454 = vpack.c.b16 %v439, %v438
        %v455 = vpack.c.b16 %v441, %v440
        %v456 = vpack.c.b16 %v443, %v442
        %v457 = vpack.c.b16 %v445, %v444
        %v458 = vpack.c.b16 %v447, %v446
        %v459 = vpack.c.b16 %v449, %v448
        %v460 = vpack.c.b16 %v451, %v450
        %v461 = vpack.c.b16 %v453, %v452
        %v486 = vunpack.c.l.b16 %v406
        %v487 = vunpack.c.l.b16 %v407
        %v488 = vunpack.c.l.b16 %v408
        %v489 = vunpack.c.l.b16 %v409
        %v490 = vunpack.c.l.b16 %v410
        %v491 = vunpack.c.l.b16 %v411
        %v492 = vunpack.c.l.b16 %v412
        %v493 = vunpack.c.l.b16 %v413
        %v494 = vunpack.c.l.b16 %v414
        %v495 = vunpack.c.l.b16 %v415
        %v496 = vunpack.c.l.b16 %v416
        %v497 = vunpack.c.l.b16 %v417
        %v498 = vunpack.c.l.b16 %v418
        %v499 = vunpack.c.l.b16 %v419
        %v500 = vunpack.c.l.b16 %v420
        %v501 = vunpack.c.l.b16 %v421
        %v502 = vpack.c.b16 %v487, %v486
        %v503 = vpack.c.b16 %v489, %v488
        %v504 = vpack.c.b16 %v491, %v490
        %v505 = vpack.c.b16 %v493, %v492
        %v506 = vpack.c.b16 %v495, %v494
        %v507 = vpack.c.b16 %v497, %v496
        %v508 = vpack.c.b16 %v499, %v498
        %v509 = vpack.c.b16 %v501, %v500
        %518 = vmatprep.subr.bf16.mxu0 0
        %519 = vmatpush1.bf16.msra.mxu0 %v502
        %520 = vmatprep.subr.bf16.mxu0 0
        %521 = vmatpush1.bf16.msra.mxu0 %v503
        %522 = vmatprep.subr.bf16.mxu0 0
        %523 = vmatpush1.bf16.msra.mxu0 %v504
        %524 = vmatprep.subr.bf16.mxu0 0
        %525 = vmatpush1.bf16.msra.mxu0 %v505
        %526 = vmatprep.subr.bf16.mxu0 0
        %527 = vmatpush1.bf16.msra.mxu0 %v506
        %528 = vmatprep.subr.bf16.mxu0 0
        %529 = vmatpush1.bf16.msra.mxu0 %v507
        %530 = vmatprep.subr.bf16.mxu0 0
        %531 = vmatpush1.bf16.msra.mxu0 %v508
        %532 = vmatprep.subr.bf16.mxu0 0
        %533 = vmatpush1.bf16.msra.mxu0 %v509
        %534 = vmatprep.subr.bf16.mxu0 0
        %535 = vmatpush1.bf16.msra.mxu0 0
        %536 = vmatprep.subr.bf16.mxu0 0
        %537 = vmatpush1.bf16.msra.mxu0 0
        %538 = vmatprep.subr.bf16.mxu0 0
        %539 = vmatpush1.bf16.msra.mxu0 0
        %540 = vmatprep.subr.bf16.mxu0 0
        %541 = vmatpush1.bf16.msra.mxu0 0
        %542 = vmatprep.subr.bf16.mxu0 0
        %543 = vmatpush1.bf16.msra.mxu0 0
        %544 = vmatprep.subr.bf16.mxu0 0
        %545 = vmatpush1.bf16.msra.mxu0 0
        %546 = vmatprep.subr.bf16.mxu0 0
        %547 = vmatpush1.bf16.msra.mxu0 0
        %548 = vmatprep.subr.bf16.mxu0 0
        %549 = vmatpush1.bf16.msra.mxu0 0
        %550 = vmatprep.mubr.bf16.mxu0 0
        %551 = vmatmul.mubr.bf16.gmra.mrb[0].mxu0 %v454
        %v552 = vpop.f32.mrb[0].mxu0
        %v553 = vadd.f32 0.0, %v552
        %v554 = vpop.f32.mrb[0].mxu0
        %v555 = vpop.f32.mrb[0].mxu0
        %v556 = vadd.f32 0.0, %v555
        %v557 = vpop.f32.mrb[0].mxu0
        %558 = vmatprep.mubr.bf16.mxu0 0
        %559 = vmatmul.mubr.bf16.gmra.mrb[0].mxu0 %v455
        %v560 = vpop.f32.mrb[0].mxu0
        %v561 = vadd.f32 0.0, %v560
        %v562 = vpop.f32.mrb[0].mxu0
        %v563 = vpop.f32.mrb[0].mxu0
        %v564 = vadd.f32 0.0, %v563
        %v565 = vpop.f32.mrb[0].mxu0
        %566 = vmatprep.mubr.bf16.mxu0 0
        %567 = vmatmul.mubr.bf16.gmra.mrb[0].mxu0 %v456
        %v568 = vpop.f32.mrb[0].mxu0
        %v569 = vadd.f32 0.0, %v568
        %v570 = vpop.f32.mrb[0].mxu0
        %v571 = vpop.f32.mrb[0].mxu0
        %v572 = vadd.f32 0.0, %v571
        %v573 = vpop.f32.mrb[0].mxu0
        %574 = vmatprep.mubr.bf16.mxu0 0
        %575 = vmatmul.mubr.bf16.gmra.mrb[0].mxu0 %v457
        %v576 = vpop.f32.mrb[0].mxu0
        %v577 = vadd.f32 0.0, %v576
        %v578 = vpop.f32.mrb[0].mxu0
        %v579 = vpop.f32.mrb[0].mxu0
        %v580 = vadd.f32 0.0, %v579
        %v581 = vpop.f32.mrb[0].mxu0
        %582 = vmatprep.mubr.bf16.mxu0 0
        %583 = vmatmul.mubr.bf16.gmra.mrb[0].mxu0 %v458
        %v584 = vpop.f32.mrb[0].mxu0
        %v585 = vadd.f32 0.0, %v584
        %v586 = vpop.f32.mrb[0].mxu0
        %v587 = vpop.f32.mrb[0].mxu0
        %v588 = vadd.f32 0.0, %v587
        %v589 = vpop.f32.mrb[0].mxu0
        %590 = vmatprep.mubr.bf16.mxu0 0
        %591 = vmatmul.mubr.bf16.gmra.mrb[0].mxu0 %v459
        %v592 = vpop.f32.mrb[0].mxu0
        %v593 = vadd.f32 0.0, %v592
        %v594 = vpop.f32.mrb[0].mxu0
        %v595 = vpop.f32.mrb[0].mxu0
        %v596 = vadd.f32 0.0, %v595
        %v597 = vpop.f32.mrb[0].mxu0
        %598 = vmatprep.mubr.bf16.mxu0 0
        %599 = vmatmul.mubr.bf16.gmra.mrb[0].mxu0 %v460
        %v600 = vpop.f32.mrb[0].mxu0
        %v601 = vadd.f32 0.0, %v600
        %v602 = vpop.f32.mrb[0].mxu0
        %v603 = vpop.f32.mrb[0].mxu0
        %v604 = vadd.f32 0.0, %v603
        %v605 = vpop.f32.mrb[0].mxu0
        %606 = vmatprep.mubr.bf16.mxu0 0
        %607 = vmatmul.mubr.bf16.gmra.mrb[0].mxu0 %v461
        %v608 = vpop.f32.mrb[0].mxu0
        %v609 = vadd.f32 0.0, %v608
        %v610 = vpop.f32.mrb[0].mxu0
        %v611 = vpop.f32.mrb[0].mxu0
        %v612 = vadd.f32 0.0, %v611
        %v613 = vpop.f32.mrb[0].mxu0
        %614 = vdwg.mxu0
        %v615 = vadd.f32 %v374, %v553
        %v616 = vadd.f32 %v375, %v556
        %v617 = vadd.f32 %v376, %v561
        %v618 = vadd.f32 %v377, %v564
        %v619 = vadd.f32 %v378, %v569
        %v620 = vadd.f32 %v379, %v572
        %v621 = vadd.f32 %v380, %v577
        %v622 = vadd.f32 %v381, %v580
        %v623 = vadd.f32 %v382, %v585
        %v624 = vadd.f32 %v383, %v588
        %v625 = vadd.f32 %v384, %v593
        %v626 = vadd.f32 %v385, %v596
        %v627 = vadd.f32 %v386, %v601
        %v628 = vadd.f32 %v387, %v604
        %v629 = vadd.f32 %v388, %v609
        %v630 = vadd.f32 %v389, %v612
        %631 = vst [vmem:[#allocation2] sm:$0xff] %v615
        %632 = vst [vmem:[#allocation2 + $0x8] sm:$0xff] %v616
        %633 = vst [vmem:[#allocation2 + $0x10] sm:$0xff] %v617
        %634 = vst [vmem:[#allocation2 + $0x18] sm:$0xff] %v618
        %635 = vst [vmem:[#allocation2 + $0x20] sm:$0xff] %v619
        %636 = vst [vmem:[#allocation2 + $0x28] sm:$0xff] %v620
        %637 = vst [vmem:[#allocation2 + $0x30] sm:$0xff] %v621
        %638 = vst [vmem:[#allocation2 + $0x38] sm:$0xff] %v622
        %639 = vst [vmem:[#allocation2 + $0x40] sm:$0xff] %v623
        %640 = vst [vmem:[#allocation2 + $0x48] sm:$0xff] %v624
        %641 = vst [vmem:[#allocation2 + $0x50] sm:$0xff] %v625
        %642 = vst [vmem:[#allocation2 + $0x58] sm:$0xff] %v626
        %643 = vst [vmem:[#allocation2 + $0x60] sm:$0xff] %v627
        %644 = vst [vmem:[#allocation2 + $0x68] sm:$0xff] %v628
        %645 = vst [vmem:[#allocation2 + $0x70] sm:$0xff] %v629
        %646 = vst [vmem:[#allocation2 + $0x78] sm:$0xff] %v630
        %p647 = scmp.eq.s32.totalorder %s21, 12
        // Predicated region
        $region78: #{local_critic_forward.5} parent=68 // pred_check
          %p648 = pneg %p647
        $region79: #{local_critic_forward.5} parent=68 // pred_check_branch
          %650 = sbr.rel (%p648) target = $region81
        $region80: #{local_critic_forward.5} parent=68 // pred_region
          %v651 = vld [vmem:[#allocation2] sm:$0xff]
          %v652 = vld [vmem:[#allocation2 + $0x8] sm:$0xff]
          %v653 = vld [vmem:[#allocation2 + $0x10] sm:$0xff]
          %v654 = vld [vmem:[#allocation2 + $0x18] sm:$0xff]
          %v655 = vld [vmem:[#allocation2 + $0x20] sm:$0xff]
          %v656 = vld [vmem:[#allocation2 + $0x28] sm:$0xff]
          %v657 = vld [vmem:[#allocation2 + $0x30] sm:$0xff]
          %v658 = vld [vmem:[#allocation2 + $0x38] sm:$0xff]
          %v659 = vld [vmem:[#allocation2 + $0x40] sm:$0xff]
          %v660 = vld [vmem:[#allocation2 + $0x48] sm:$0xff]
          %v661 = vld [vmem:[#allocation2 + $0x50] sm:$0xff]
          %v662 = vld [vmem:[#allocation2 + $0x58] sm:$0xff]
          %v663 = vld [vmem:[#allocation2 + $0x60] sm:$0xff]
          %v664 = vld [vmem:[#allocation2 + $0x68] sm:$0xff]
          %v665 = vld [vmem:[#allocation2 + $0x70] sm:$0xff]
          %v666 = vld [vmem:[#allocation2 + $0x78] sm:$0xff]
          %v667 = vld [vmem:[%s343] sm:$0x1]
          %v669 = vlaneseq
          %v670 = vshrl.u32 %v669, 7
          %v671 = vsub.s32 0, %v670
          %v672 = vrot.slane %v667, %v671
          %v674 = vadd.f32 %v651, %v672
          %v675 = vadd.f32 %v652, %v672
          %v676 = vadd.f32 %v653, %v672
          %v677 = vadd.f32 %v654, %v672
          %v678 = vadd.f32 %v655, %v672
          %v679 = vadd.f32 %v656, %v672
          %v680 = vadd.f32 %v657, %v672
          %v681 = vadd.f32 %v658, %v672
          %v682 = vadd.f32 %v659, %v672
          %v683 = vadd.f32 %v660, %v672
          %v684 = vadd.f32 %v661, %v672
          %v685 = vadd.f32 %v662, %v672
          %v686 = vadd.f32 %v663, %v672
          %v687 = vadd.f32 %v664, %v672
          %v688 = vadd.f32 %v665, %v672
          %v689 = vadd.f32 %v666, %v672
          %vm690 = vcmp.ge.f32.partialorder %v674, 0.0
          %vm691 = vcmp.ge.f32.partialorder %v675, 0.0
          %vm692 = vcmp.ge.f32.partialorder %v676, 0.0
          %vm693 = vcmp.ge.f32.partialorder %v677, 0.0
          %vm694 = vcmp.ge.f32.partialorder %v678, 0.0
          %vm695 = vcmp.ge.f32.partialorder %v679, 0.0
          %vm696 = vcmp.ge.f32.partialorder %v680, 0.0
          %vm697 = vcmp.ge.f32.partialorder %v681, 0.0
          %vm698 = vcmp.ge.f32.partialorder %v682, 0.0
          %vm699 = vcmp.ge.f32.partialorder %v683, 0.0
          %vm700 = vcmp.ge.f32.partialorder %v684, 0.0
          %vm701 = vcmp.ge.f32.partialorder %v685, 0.0
          %vm702 = vcmp.ge.f32.partialorder %v686, 0.0
          %vm703 = vcmp.ge.f32.partialorder %v687, 0.0
          %vm704 = vcmp.ge.f32.partialorder %v688, 0.0
          %vm705 = vcmp.ge.f32.partialorder %v689, 0.0
          %v706 = vmul.f32 %v674, 0.2
          %v707 = vmul.f32 %v675, 0.2
          %v708 = vmul.f32 %v676, 0.2
          %v709 = vmul.f32 %v677, 0.2
          %v710 = vmul.f32 %v678, 0.2
          %v711 = vmul.f32 %v679, 0.2
          %v712 = vmul.f32 %v680, 0.2
          %v713 = vmul.f32 %v681, 0.2
          %v714 = vmul.f32 %v682, 0.2
          %v715 = vmul.f32 %v683, 0.2
          %v716 = vmul.f32 %v684, 0.2
          %v717 = vmul.f32 %v685, 0.2
          %v718 = vmul.f32 %v686, 0.2
          %v719 = vmul.f32 %v687, 0.2
          %v720 = vmul.f32 %v688, 0.2
          %v721 = vmul.f32 %v689, 0.2
          %v722 = vsel %vm690, %v674, %v706
          %v723 = vsel %vm691, %v675, %v707
          %v724 = vsel %vm692, %v676, %v708
          %v725 = vsel %vm693, %v677, %v709
          %v726 = vsel %vm694, %v678, %v710
          %v727 = vsel %vm695, %v679, %v711
          %v728 = vsel %vm696, %v680, %v712
          %v729 = vsel %vm697, %v681, %v713
          %v730 = vsel %vm698, %v682, %v714
          %v731 = vsel %vm699, %v683, %v715
          %v732 = vsel %vm700, %v684, %v716
          %v733 = vsel %vm701, %v685, %v717
          %v734 = vsel %vm702, %v686, %v718
          %v735 = vsel %vm703, %v687, %v719
          %v736 = vsel %vm704, %v688, %v720
          %v737 = vsel %vm705, %v689, %v721
          %v738 = vpack.c.bf16 %v723, %v722
          %v739 = vpack.c.bf16 %v725, %v724
          %v740 = vpack.c.bf16 %v727, %v726
          %v741 = vpack.c.bf16 %v729, %v728
          %v742 = vpack.c.bf16 %v731, %v730
          %v743 = vpack.c.bf16 %v733, %v732
          %v744 = vpack.c.bf16 %v735, %v734
          %v745 = vpack.c.bf16 %v737, %v736
          %v754 = vunpack.c.l.b16 %v738
          %v755 = vunpack.c.h.b16 %v738
          %v756 = vunpack.c.l.b16 %v739
          %v757 = vunpack.c.h.b16 %v739
          %v758 = vunpack.c.l.b16 %v740
          %v759 = vunpack.c.h.b16 %v740
          %v760 = vunpack.c.l.b16 %v741
          %v761 = vunpack.c.h.b16 %v741
          %v762 = vunpack.c.l.b16 %v742
          %v763 = vunpack.c.h.b16 %v742
          %v764 = vunpack.c.l.b16 %v743
          %v765 = vunpack.c.h.b16 %v743
          %v766 = vunpack.c.l.b16 %v744
          %v767 = vunpack.c.h.b16 %v744
          %v768 = vunpack.c.l.b16 %v745
          %v769 = vunpack.c.h.b16 %v745
          %v770 = vpack.c.b16 %v754, %v754
          %v771 = vpack.c.b16 %v755, %v755
          %v772 = vpack.c.b16 %v756, %v756
          %v773 = vpack.c.b16 %v757, %v757
          %v774 = vpack.c.b16 %v758, %v758
          %v775 = vpack.c.b16 %v759, %v759
          %v776 = vpack.c.b16 %v760, %v760
          %v777 = vpack.c.b16 %v761, %v761
          %v778 = vpack.c.b16 %v762, %v762
          %v779 = vpack.c.b16 %v763, %v763
          %v780 = vpack.c.b16 %v764, %v764
          %v781 = vpack.c.b16 %v765, %v765
          %v782 = vpack.c.b16 %v766, %v766
          %v783 = vpack.c.b16 %v767, %v767
          %v784 = vpack.c.b16 %v768, %v768
          %v785 = vpack.c.b16 %v769, %v769
          %802 = vst [vmem:[%s351] sm:$0xf] %v770
          %803 = vst [vmem:[%s351 + $0x4] sm:$0xf] %v771
          %804 = vst [vmem:[%s351 + $0x8] sm:$0xf] %v772
          %805 = vst [vmem:[%s351 + $0xc] sm:$0xf] %v773
          %806 = vst [vmem:[%s351 + $0x10] sm:$0xf] %v774
          %807 = vst [vmem:[%s351 + $0x14] sm:$0xf] %v775
          %808 = vst [vmem:[%s351 + $0x18] sm:$0xf] %v776
          %809 = vst [vmem:[%s351 + $0x1c] sm:$0xf] %v777
          %810 = vst [vmem:[%s351 + $0x20] sm:$0xf] %v778
          %811 = vst [vmem:[%s351 + $0x24] sm:$0xf] %v779
          %812 = vst [vmem:[%s351 + $0x28] sm:$0xf] %v780
          %813 = vst [vmem:[%s351 + $0x2c] sm:$0xf] %v781
          %814 = vst [vmem:[%s351 + $0x30] sm:$0xf] %v782
          %815 = vst [vmem:[%s351 + $0x34] sm:$0xf] %v783
          %816 = vst [vmem:[%s351 + $0x38] sm:$0xf] %v784
          %817 = vst [vmem:[%s351 + $0x3c] sm:$0xf] %v785
        $region81: #{local_critic_forward.5} parent=68 // pred_fallthru
          _
        %s818 = smul.u32 16, %s19
        %p819 = scmp.lt.s32.totalorder %s818, 15
        %s820 = scalar_select %p819, %s818, 15
        %p821 = scmp.lt.s32.totalorder %s20, 0
        %s822 = scalar_select %p821, %s20, 0
        %s823 = sadd.s32 %s822, %s820
        %s824 = smul.addr %s823, 4
        %s825 = scalar_lea.vmem %s3, %s824
        // Predicated region
        $region82: #{local_critic_forward.5} parent=68 // pred_check
          %p826 = pneg %p135
        $region83: #{local_critic_forward.5} parent=68 // pred_check_branch
          %828 = sbr.rel (%p826) target = $region85
        $region84: #{local_critic_forward.5} parent=68 // pred_region
          %s829 = smul.u32 16, %s19
        $region85: #{local_critic_forward.5} parent=68 // pred_fallthru
          _
        // Predicated region
        $region86: #{local_critic_forward.5} parent=68 // pred_check
          %p830 = pneg %p135
        $region87: #{local_critic_forward.5} parent=68 // pred_check_branch
          %832 = sbr.rel (%p830) target = $region89
        $region88: #{local_critic_forward.5} parent=68 // pred_region
          %s833 = smul.u32 16, %s19
          %p834 = scmp.lt.s32.totalorder %s833, 15
          %s835 = scalar_select %p834, %s833, 15
          %p836 = scmp.lt.s32.totalorder %s20, 0
          %s837 = scalar_select %p836, %s20, 0
          %s838 = sadd.s32 %s837, %s835
          %s839 = smul.addr %s838, 4
          %s840 = scalar_lea.vmem %s3, %s839
        $region89: #{local_critic_forward.5} parent=68 // pred_fallthru
          _
      $region69: #{local_critic_forward.5} parent=5 // pred_fallthru
        _
      %p841 = scmp.le.s32.totalorder 2, %s9
      // Predicated region
      $region90: #{local_critic_forward.5} parent=5 // pred_check
        %p842 = pneg %p841
      $region91: #{local_critic_forward.5} parent=5 // pred_check_branch
        %844 = sbr.rel (%p842) target = $region93
      $region92: #{local_critic_forward.5} parent=5 // pred_region
        %s845 = ssub.s32 %s9, 2
      $region93: #{local_critic_forward.5} parent=5 // pred_fallthru
        _
    $region6: #{local_critic_forward.5} parent=1 // loop_footer
      %s13 = sadd.s32 1, %s9
    $region7: #{local_critic_forward.5} parent=1 // loop_footer_branch
      %8 = sbr.rel target = $region3
    $region8: #{local_critic_forward.5} parent=1 // loop_exit
      _

// kernel: local_critic_forward.6
$region0: #{local_critic_forward.6}
  #allocation0 [shape = 'u32[]', space=smem, size = 0x4, offset = 0x4, fixed_abs, tag = 'smem constant byte address 0x4 - core index']
  #allocation1 [shape = 'u32[144,128]{1,0:T(1,128)}', space=vmem, size = 0x12000, scoped, tag = 'internal scratch']
  #allocation2 [shape = 'f32[32,256]{1,0:T(8,128)}', space=vmem, size = 0x8000, scoped, tag = 'scratch operand']
  %s0 = inlined_call_operand.vmem [shape: bf16[32,3200], index: 0, kind: input, shape index: {}]
  %s1 = inlined_call_operand.vmem [shape: bf16[3200,256], index: 1, kind: input, shape index: {}]
  %s2 = inlined_call_operand.vmem [shape: f32[1,256], index: 2, kind: input, shape index: {}]
  %s3 = inlined_call_operand.vmem [shape: bf16[32,256], index: 3, kind: output, shape index: {}]
  %s4 = sld [smem:[#allocation0]]
  $region94: #{local_critic_forward.6} parent=0
    _
  %s6 = ssub.s32 1, %s4
  %s7 = scalar_select 0, %s6, %s4
  $region1: #{local_critic_forward.6} parent=0
    #allocation3 [shape = 'u8[16384]{0}', space=vmem, size = 0x4000, scoped, tag = 'input window, operand 0']
    loop: start=0, step=1, limit=27
    $region2: #{local_critic_forward.6} parent=1 // loop_pre_header
      _
    $region3: #{local_critic_forward.6} parent=1 // loop_header
      %s9 = sphi 0, %s13
      %p10 = scmp.ge.s32.totalorder %s9, 27
      %s16 = sphi 0, %s35
      %s17 = sphi 0, %s31
      %s18 = sphi 0, %s27
      %s19 = sphi 0, %s16
      %s20 = sphi 0, %s17
      %s21 = sphi 0, %s18
      %s22 = sphi 0, %s19
      %s23 = sphi 0, %s20
      %s24 = sphi 0, %s21
      %s40 = sphi 0, %s42
      %s43 = sphi 0, %s40
      %s44 = sphi 0, %s43
      %s60 = sphi 0, %s44
      %s68 = sphi 0, %s70
      %s71 = sphi 0, %s68
      %s72 = sphi 0, %s71
      %s88 = sphi 0, %s72
      %s94 = sphi 0, %s96
      %s97 = sphi 0, %s94
      %s98 = sphi 0, %s97
      %s114 = sphi 0, %s98
      %s122 = sphi 0, %s124
      %s125 = sphi 0, %s122
      %s126 = sphi 0, %s125
      %s142 = sphi 0, %s126
    $region4: #{local_critic_forward.6} parent=1 // loop_header_branch
      %12 = sbr.rel (%p10) target = $region8
    $region5: #{local_critic_forward.6} parent=1 // loop_body
      %s14 = ssub.s32 %s9, 1
      %s15 = ssub.s32 %s9, 2
      %s25 = sadd.s32 1, %s18
      %p26 = scmp.ge.s32.totalorder %s25, 25
      %s27 = scalar_select %p26, 0, %s25
      %s28 = sadd.s32 1, %s17
      %s29 = scalar_select %p26, %s28, %s17
      %p30 = scmp.ge.s32.totalorder %s29, 1
      %s31 = scalar_select %p30, 0, %s29
      %s32 = sadd.s32 1, %s16
      %s33 = scalar_select %p30, %s32, %s16
      %p34 = scmp.ge.s32.totalorder %s33, 1
      %s35 = scalar_select %p34, 0, %s33
      %s36 = ssub.s32 %s16, %s35
      %s37 = ssub.s32 %s18, %s27
      %s38 = sor.u32 %s36, %s37
      %p39 = scmp.eq.s32.totalorder %s38, 0
      %s41 = sadd.s32 %s40, 1
      %s42 = scalar_select %p39, %s40, %s41
      %p45 = pneg %p39
      %p46 = scmp.eq.s32.totalorder %s9, 24
      %p47 = por %p45, %p46
      %p48 = scmp.ne.s32.totalorder %s40, %s43
      %p49 = scmp.eq.s32.totalorder %s9, 0
      %p50 = por %p48, %p49
      %p51 = scmp.ne.s32.totalorder %s40, %s43
      %p52 = scmp.eq.s32.totalorder %s14, 24
      %p53 = por %p51, %p52
      %p54 = scmp.ne.s32.totalorder %s43, %s44
      %p55 = scmp.eq.s32.totalorder %s14, 0
      %p56 = por %p54, %p55
      %p57 = scmp.ne.s32.totalorder %s43, %s44
      %p58 = scmp.eq.s32.totalorder %s15, 24
      %p59 = por %p57, %p58
      %p61 = scmp.ne.s32.totalorder %s44, %s60
      %p62 = scmp.eq.s32.totalorder %s15, 0
      %p63 = por %p61, %p62
      %s64 = ssub.s32 %s18, %s27
      %s65 = ssub.s32 %s17, %s31
      %s66 = sor.u32 %s64, %s65
      %p67 = scmp.eq.s32.totalorder %s66, 0
      %s69 = sadd.s32 %s68, 1
      %s70 = scalar_select %p67, %s68, %s69
      %p73 = pneg %p67
      %p74 = scmp.eq.s32.totalorder %s9, 24
      %p75 = por %p73, %p74
      %p76 = scmp.ne.s32.totalorder %s68, %s71
      %p77 = scmp.eq.s32.totalorder %s9, 0
      %p78 = por %p76, %p77
      %p79 = scmp.ne.s32.totalorder %s68, %s71
      %p80 = scmp.eq.s32.totalorder %s14, 24
      %p81 = por %p79, %p80
      %p82 = scmp.ne.s32.totalorder %s71, %s72
      %p83 = scmp.eq.s32.totalorder %s14, 0
      %p84 = por %p82, %p83
      %p85 = scmp.ne.s32.totalorder %s71, %s72
      %p86 = scmp.eq.s32.totalorder %s15, 24
      %p87 = por %p85, %p86
      %p89 = scmp.ne.s32.totalorder %s72, %s88
      %p90 = scmp.eq.s32.totalorder %s15, 0
      %p91 = por %p89, %p90
      %s92 = ssub.s32 %s17, %s31
      %p93 = scmp.eq.s32.totalorder %s92, 0
      %s95 = sadd.s32 %s94, 1
      %s96 = scalar_select %p93, %s94, %s95
      %p99 = pneg %p93
      %p100 = scmp.eq.s32.totalorder %s9, 24
      %p101 = por %p99, %p100
      %p102 = scmp.ne.s32.totalorder %s94, %s97
      %p103 = scmp.eq.s32.totalorder %s9, 0
      %p104 = por %p102, %p103
      %p105 = scmp.ne.s32.totalorder %s94, %s97
      %p106 = scmp.eq.s32.totalorder %s14, 24
      %p107 = por %p105, %p106
      %p108 = scmp.ne.s32.totalorder %s97, %s98
      %p109 = scmp.eq.s32.totalorder %s14, 0
      %p110 = por %p108, %p109
      %p111 = scmp.ne.s32.totalorder %s97, %s98
      %p112 = scmp.eq.s32.totalorder %s15, 24
      %p113 = por %p111, %p112
      %p115 = scmp.ne.s32.totalorder %s98, %s114
      %p116 = scmp.eq.s32.totalorder %s15, 0
      %p117 = por %p115, %p116
      %s118 = ssub.s32 %s16, %s35
      %s119 = ssub.s32 %s17, %s31
      %s120 = sor.u32 %s118, %s119
      %p121 = scmp.eq.s32.totalorder %s120, 0
      %s123 = sadd.s32 %s122, 1
      %s124 = scalar_select %p121, %s122, %s123
      %p127 = pneg %p121
      %p128 = scmp.eq.s32.totalorder %s9, 24
      %p129 = por %p127, %p128
      %p130 = scmp.ne.s32.totalorder %s122, %s125
      %p131 = scmp.eq.s32.totalorder %s9, 0
      %p132 = por %p130, %p131
      %p133 = scmp.ne.s32.totalorder %s122, %s125
      %p134 = scmp.eq.s32.totalorder %s14, 24
      %p135 = por %p133, %p134
      %p136 = scmp.ne.s32.totalorder %s125, %s126
      %p137 = scmp.eq.s32.totalorder %s14, 0
      %p138 = por %p136, %p137
      %p139 = scmp.ne.s32.totalorder %s125, %s126
      %p140 = scmp.eq.s32.totalorder %s15, 24
      %p141 = por %p139, %p140
      %p143 = scmp.ne.s32.totalorder %s126, %s142
      %p144 = scmp.eq.s32.totalorder %s15, 0
      %p145 = por %p143, %p144
      %p146 = scmp.le.s32.totalorder 1, %s9
      %p147 = scmp.lt.s32.totalorder %s9, 26
      %p148 = pnand %p146, %p147
      %p149 = pneg %p148
      // Predicated region
      $region9: #{local_critic_forward.6} parent=5 // pred_check
        _
      $region10: #{local_critic_forward.6} parent=5 // pred_check_branch
        %151 = sbr.rel (%p148) target = $region12
      $region11: #{local_critic_forward.6} parent=5 // pred_region
        %s152 = ssub.s32 %s9, 1
        // Predicated region
        $region13: #{local_critic_forward.6} parent=11 // pred_check
          %p153 = pneg %p110
        $region14: #{local_critic_forward.6} parent=11 // pred_check_branch
          %155 = sbr.rel (%p153) target = $region16
        $region15: #{local_critic_forward.6} parent=11 // pred_region
          %s156 = smul.u32 2, %s20
          %p157 = scmp.lt.s32.totalorder %s156, 1
          %s158 = scalar_select %p157, %s156, 1
          %s159 = scalar_lea.vmem %s2, %s158
          %s160 = smul.u32 2, %s20
        $region16: #{local_critic_forward.6} parent=11 // pred_fallthru
          _
      $region12: #{local_critic_forward.6} parent=5 // pred_fallthru
        _
      %p161 = scmp.lt.s32.totalorder %s9, 25
      // Predicated region
      $region17: #{local_critic_forward.6} parent=5 // pred_check
        %p162 = pneg %p161
      $region18: #{local_critic_forward.6} parent=5 // pred_check_branch
        %164 = sbr.rel (%p162) target = $region20
      $region19: #{local_critic_forward.6} parent=5 // pred_region
        // Predicated region
        $region21: #{local_critic_forward.6} parent=19 // pred_check
          %p165 = pneg %p50
        $region22: #{local_critic_forward.6} parent=19 // pred_check_branch
          %167 = sbr.rel (%p165) target = $region24
        $region23: #{local_critic_forward.6} parent=19 // pred_region
          %s168 = sand.u32 %s40, 1
          %s169 = sand.u32 %s40, 1
          %s170 = smul.addr %s169, 16
          %s171 = scalar_lea.vmem [#allocation3], %s170
          %s172 = smul.u32 4, %s16
          %s173 = smul.addr %s172, 25
          %s174 = sadd.s32 %s18, %s173
          %s175 = smul.addr %s174, 4
          %s176 = scalar_lea.vmem %s0, %s175
          // Predicated region
          $region25: #{local_critic_forward.6} parent=23 // pred_check
            _
          $region26: #{local_critic_forward.6} parent=23 // pred_check_branch
            %178 = sbr.rel (0) target = $region28
          $region27: #{local_critic_forward.6} parent=23 // pred_region
            // Predicated region
            $region29: #{local_critic_forward.6} parent=27 // pred_check
              _
            $region30: #{local_critic_forward.6} parent=27 // pred_check_branch
              %180 = sbr.rel target = $region32
            $region31: #{local_critic_forward.6} parent=27 // pred_region
              // Predicated region
              $region44: #{local_critic_forward.6} parent=31 // pred_check
                _
              $region45: #{local_critic_forward.6} parent=31 // pred_check_branch
                %201 = sbr.rel (0) target = $region47
              $region46: #{local_critic_forward.6} parent=31 // pred_region
                loop: start=0, step=1, limit=1
                $region48: #{local_critic_forward.6} parent=46 // loop_pre_header
                  _
                $region49: #{local_critic_forward.6} parent=46 // loop_header
                  %s203 = sphi 0, %s207
                  %p204 = scmp.ge.s32.totalorder %s203, 1
                  %s208 = sphi %s176, %s176
                  %s209 = sphi %s171, %s171
                $region50: #{local_critic_forward.6} parent=46 // loop_header_branch
                  %206 = sbr.rel (%p204) target = $region54
                $region51: #{local_critic_forward.6} parent=46 // loop_body
                  _
                $region52: #{local_critic_forward.6} parent=46 // loop_footer
                  %s207 = sadd.s32 1, %s203
                $region53: #{local_critic_forward.6} parent=46 // loop_footer_branch
                  %202 = sbr.rel target = $region49
                $region54: #{local_critic_forward.6} parent=46 // loop_exit
                  _
                loop: start=0, step=1, limit=1
                $region55: #{local_critic_forward.6} parent=46 // loop_pre_header
                  _
                $region56: #{local_critic_forward.6} parent=46 // loop_header
                  %s212 = sphi 0, %s216
                  %p213 = scmp.ge.s32.totalorder %s212, 1
                  %s217 = sphi %s176, %s176
                  %s218 = sphi %s171, %s171
                $region57: #{local_critic_forward.6} parent=46 // loop_header_branch
                  %215 = sbr.rel (%p213) target = $region61
                $region58: #{local_critic_forward.6} parent=46 // loop_body
                  %v219 = vld [vmem:[%s217] sm:$0xf]
                  %220 = vst [vmem:[%s218] sm:$0xf] %v219
                  %v221 = vld [vmem:[%s217 + $0x64] sm:$0xf]
                  %222 = vst [vmem:[%s218 + $0x4] sm:$0xf] %v221
                  %v223 = vld [vmem:[%s217 + $0xc8] sm:$0xf]
                  %224 = vst [vmem:[%s218 + $0x8] sm:$0xf] %v223
                  %v225 = vld [vmem:[%s217 + $0x12c] sm:$0xf]
                  %226 = vst [vmem:[%s218 + $0xc] sm:$0xf] %v225
                $region59: #{local_critic_forward.6} parent=46 // loop_footer
                  %s216 = sadd.s32 1, %s212
                $region60: #{local_critic_forward.6} parent=46 // loop_footer_branch
                  %211 = sbr.rel target = $region56
                $region61: #{local_critic_forward.6} parent=46 // loop_exit
                  _
              $region47: #{local_critic_forward.6} parent=31 // pred_fallthru
                _
            $region32: #{local_critic_forward.6} parent=27 // pred_fallthru
              _
            // Predicated region
            $region33: #{local_critic_forward.6} parent=27 // pred_check
              _
            $region34: #{local_critic_forward.6} parent=27 // pred_check_branch
              %182 = sbr.rel (0) target = $region36
            $region35: #{local_critic_forward.6} parent=27 // pred_region
              loop: start=0, step=1, limit=1
              $region37: #{local_critic_forward.6} parent=35 // loop_pre_header
                _
              $region38: #{local_critic_forward.6} parent=35 // loop_header
                %s185 = sphi 0, %s189
                %p186 = scmp.ge.s32.totalorder %s185, 1
                %s190 = sphi %s176, %s176
                %s191 = sphi %s171, %s171
              $region39: #{local_critic_forward.6} parent=35 // loop_header_branch
                %188 = sbr.rel (%p186) target = $region43
              $region40: #{local_critic_forward.6} parent=35 // loop_body
                %v192 = vld [vmem:[%s190] sm:$0xf]
                %193 = vst [vmem:[%s191] sm:$0xf] %v192
                %v194 = vld [vmem:[%s190 + $0x64] sm:$0xf]
                %195 = vst [vmem:[%s191 + $0x4] sm:$0xf] %v194
                %v196 = vld [vmem:[%s190 + $0xc8] sm:$0xf]
                %197 = vst [vmem:[%s191 + $0x8] sm:$0xf] %v196
                %v198 = vld [vmem:[%s190 + $0x12c] sm:$0xf]
                %199 = vst [vmem:[%s191 + $0xc] sm:$0xf] %v198
              $region41: #{local_critic_forward.6} parent=35 // loop_footer
                %s189 = sadd.s32 1, %s185
              $region42: #{local_critic_forward.6} parent=35 // loop_footer_branch
                %184 = sbr.rel target = $region38
              $region43: #{local_critic_forward.6} parent=35 // loop_exit
                _
            $region36: #{local_critic_forward.6} parent=27 // pred_fallthru
              _
          $region28: #{local_critic_forward.6} parent=23 // pred_fallthru
            _
          %227 = vnop
        $region24: #{local_critic_forward.6} parent=19 // pred_fallthru
          _
        // Predicated region
        $region62: #{local_critic_forward.6} parent=19 // pred_check
          %p228 = pneg %p78
        $region63: #{local_critic_forward.6} parent=19 // pred_check_branch
          %230 = sbr.rel (%p228) target = $region65
        $region64: #{local_critic_forward.6} parent=19 // pred_region
          %s231 = smul.u32 16, %s18
          %s232 = smul.u32 2, %s17
          %p233 = scmp.lt.s32.totalorder %s231, 399
          %s234 = scalar_select %p233, %s231, 399
          %p235 = scmp.lt.s32.totalorder %s232, 1
          %s236 = scalar_select %p235, %s232, 1
          %s237 = smul.addr %s234, 2
          %s238 = sadd.s32 %s236, %s237
          %s239 = smul.addr %s238, 4
          %s240 = scalar_lea.vmem %s1, %s239
          %s241 = smul.u32 16, %s18
          %s242 = smul.u32 2, %s17
        $region65: #{local_critic_forward.6} parent=19 // pred_fallthru
          _
      $region20: #{local_critic_forward.6} parent=5 // pred_fallthru
        _
      %p243 = scmp.le.s32.totalorder 1, %s9
      %p244 = scmp.lt.s32.totalorder %s9, 26
      %p245 = pnand %p243, %p244
      %p246 = pneg %p245
      // Predicated region
      $region66: #{local_critic_forward.6} parent=5 // pred_check
        _
      $region67: #{local_critic_forward.6} parent=5 // pred_check_branch
        %248 = sbr.rel (%p245) target = $region69
      $region68: #{local_critic_forward.6} parent=5 // pred_region
        %s249 = ssub.s32 %s9, 1
        %s250 = sand.u32 %s43, 1
        %s251 = sand.u32 %s43, 1
        %s252 = smul.addr %s251, 16
        %s253 = scalar_lea.vmem [#allocation3], %s252
        // Predicated region
        $region70: #{local_critic_forward.6} parent=68 // pred_check
          %p254 = pneg %p56
        $region71: #{local_critic_forward.6} parent=68 // pred_check_branch
          %256 = sbr.rel (%p254) target = $region73
        $region72: #{local_critic_forward.6} parent=68 // pred_region
          _
        $region73: #{local_critic_forward.6} parent=68 // pred_fallthru
          _
        %s257 = sand.u32 %s43, 1
        %s258 = sand.u32 %s43, 1
        %s259 = smul.addr %s258, 16
        %s260 = scalar_lea.vmem [#allocation3], %s259
        %p261 = pneg %p56
        %p262 = pneg %p53
        %s263 = smul.u32 16, %s21
        %s264 = smul.u32 2, %s20
        %p265 = scmp.lt.s32.totalorder %s263, 399
        %s266 = scalar_select %p265, %s263, 399
        %p267 = scmp.lt.s32.totalorder %s264, 1
        %s268 = scalar_select %p267, %s264, 1
        %s269 = smul.addr %s266, 2
        %s270 = sadd.s32 %s268, %s269
        %s271 = smul.addr %s270, 4
        %s272 = scalar_lea.vmem %s1, %s271
        %p273 = pneg %p84
        %p274 = pneg %p81
        %s275 = smul.u32 2, %s20
        %p276 = scmp.lt.s32.totalorder %s275, 1
        %s277 = scalar_select %p276, %s275, 1
        %s278 = scalar_lea.vmem %s2, %s277
        %p279 = pneg %p110
        %p280 = pneg %p107
        %p281 = pneg %p138
        %p282 = pneg %p135
        %s283 = smul.u32 4, %s19
        %s284 = smul.u32 2, %s20
        %p285 = scmp.lt.s32.totalorder %s283, 3
        %s286 = scalar_select %p285, %s283, 3
        %p287 = scmp.lt.s32.totalorder %s284, 1
        %s288 = scalar_select %p287, %s284, 1
        %s289 = smul.addr %s286, 2
        %s290 = sadd.s32 %s288, %s289
        %s291 = smul.addr %s290, 4
        %s292 = scalar_lea.vmem %s3, %s291
        %s293 = smul.u32 4, %s19
        %s294 = smul.u32 16, %s21
        %s295 = smul.u32 2, %s20
        %p296 = scmp.lt.s32.totalorder %s294, 399
        %s297 = scalar_select %p296, %s294, 399
        %p298 = scmp.lt.s32.totalorder %s295, 1
        %s299 = scalar_select %p298, %s295, 1
        %s300 = smul.addr %s297, 2
        %s301 = sadd.s32 %s299, %s300
        %s302 = smul.addr %s301, 4
        %s303 = scalar_lea.vmem %s1, %s302
        %s304 = smul.u32 16, %s21
        %s305 = smul.u32 2, %s20
        %s306 = smul.u32 2, %s20
        %p307 = scmp.lt.s32.totalorder %s306, 1
        %s308 = scalar_select %p307, %s306, 1
        %s309 = scalar_lea.vmem %s2, %s308
        %s310 = smul.u32 2, %s20
        %s311 = smul.u32 4, %s19
        %s312 = smul.u32 2, %s20
        %p313 = scmp.lt.s32.totalorder %s311, 3
        %s314 = scalar_select %p313, %s311, 3
        %p315 = scmp.lt.s32.totalorder %s312, 1
        %s316 = scalar_select %p315, %s312, 1
        %s317 = smul.addr %s314, 2
        %s318 = sadd.s32 %s316, %s317
        %s319 = smul.addr %s318, 4
        %s320 = scalar_lea.vmem %s3, %s319
        %s321 = smul.u32 4, %s19
        %s322 = smul.u32 2, %s20
        %p324 = scmp.eq.s32.totalorder %s21, 0
        // Predicated region
        $region74: #{local_critic_forward.6} parent=68 // pred_check
          %p325 = pneg %p324
        $region75: #{local_critic_forward.6} parent=68 // pred_check_branch
          %327 = sbr.rel (%p325) target = $region77
        $region76: #{local_critic_forward.6} parent=68 // pred_region
          %328 = vst [vmem:[#allocation2] sm:$0xff] 0.0
          %329 = vst [vmem:[#allocation2 + $0x8] sm:$0xff] 0.0
          %330 = vst [vmem:[#allocation2 + $0x10] sm:$0xff] 0.0
          %331 = vst [vmem:[#allocation2 + $0x18] sm:$0xff] 0.0
          %332 = vst [vmem:[#allocation2 + $0x20] sm:$0xff] 0.0
          %333 = vst [vmem:[#allocation2 + $0x28] sm:$0xff] 0.0
          %334 = vst [vmem:[#allocation2 + $0x30] sm:$0xff] 0.0
          %335 = vst [vmem:[#allocation2 + $0x38] sm:$0xff] 0.0
        $region77: #{local_critic_forward.6} parent=68 // pred_fallthru
          _
        %v336 = vld [vmem:[#allocation2] sm:$0xff]
        %v337 = vld [vmem:[#allocation2 + $0x8] sm:$0xff]
        %v338 = vld [vmem:[#allocation2 + $0x10] sm:$0xff]
        %v339 = vld [vmem:[#allocation2 + $0x18] sm:$0xff]
        %v340 = vld [vmem:[#allocation2 + $0x20] sm:$0xff]
        %v341 = vld [vmem:[#allocation2 + $0x28] sm:$0xff]
        %v342 = vld [vmem:[#allocation2 + $0x30] sm:$0xff]
        %v343 = vld [vmem:[#allocation2 + $0x38] sm:$0xff]
        %v344 = vld [vmem:[%s253] sm:$0xf]
        %v345 = vld [vmem:[%s253 + $0x4] sm:$0xf]
        %v346 = vld [vmem:[%s253 + $0x8] sm:$0xf]
        %v347 = vld [vmem:[%s253 + $0xc] sm:$0xf]
        %v348 = vld [vmem:[%s303] sm:$0xff]
        %v349 = vld [vmem:[%s303 + $0x8] sm:$0xff]
        %v350 = vld [vmem:[%s303 + $0x10] sm:$0xff]
        %v351 = vld [vmem:[%s303 + $0x18] sm:$0xff]
        %v352 = vld [vmem:[%s303 + $0x20] sm:$0xff]
        %v353 = vld [vmem:[%s303 + $0x28] sm:$0xff]
        %v354 = vld [vmem:[%s303 + $0x30] sm:$0xff]
        %v355 = vld [vmem:[%s303 + $0x38] sm:$0xff]
        %v356 = vld [vmem:[%s303 + $0x40] sm:$0xff]
        %v357 = vld [vmem:[%s303 + $0x48] sm:$0xff]
        %v358 = vld [vmem:[%s303 + $0x50] sm:$0xff]
        %v359 = vld [vmem:[%s303 + $0x58] sm:$0xff]
        %v360 = vld [vmem:[%s303 + $0x60] sm:$0xff]
        %v361 = vld [vmem:[%s303 + $0x68] sm:$0xff]
        %v362 = vld [vmem:[%s303 + $0x70] sm:$0xff]
        %v363 = vld [vmem:[%s303 + $0x78] sm:$0xff]
        %v368 = vunpack.c.l.b16 %v344
        %v369 = vunpack.c.l.b16 %v345
        %v370 = vunpack.c.l.b16 %v346
        %v371 = vunpack.c.l.b16 %v347
        %v372 = vpack.c.b16 %v369, %v368
        %v373 = vpack.c.b16 %v371, %v370
        %v392 = vunpack.c.l.b16 %v348
        %v393 = vunpack.c.h.b16 %v348
        %v394 = vunpack.c.l.b16 %v349
        %v395 = vunpack.c.h.b16 %v349
        %v396 = vunpack.c.l.b16 %v350
        %v397 = vunpack.c.h.b16 %v350
        %v398 = vunpack.c.l.b16 %v351
        %v399 = vunpack.c.h.b16 %v351
        %v400 = vunpack.c.l.b16 %v352
        %v401 = vunpack.c.h.b16 %v352
        %v402 = vunpack.c.l.b16 %v353
        %v403 = vunpack.c.h.b16 %v353
        %v404 = vunpack.c.l.b16 %v354
        %v405 = vunpack.c.h.b16 %v354
        %v406 = vunpack.c.l.b16 %v355
        %v407 = vunpack.c.h.b16 %v355
        %v408 = vunpack.c.l.b16 %v356
        %v409 = vunpack.c.h.b16 %v356
        %v410 = vunpack.c.l.b16 %v357
        %v411 = vunpack.c.h.b16 %v357
        %v412 = vunpack.c.l.b16 %v358
        %v413 = vunpack.c.h.b16 %v358
        %v414 = vunpack.c.l.b16 %v359
        %v415 = vunpack.c.h.b16 %v359
        %v416 = vunpack.c.l.b16 %v360
        %v417 = vunpack.c.h.b16 %v360
        %v418 = vunpack.c.l.b16 %v361
        %v419 = vunpack.c.h.b16 %v361
        %v420 = vunpack.c.l.b16 %v362
        %v421 = vunpack.c.h.b16 %v362
        %v422 = vunpack.c.l.b16 %v363
        %v423 = vunpack.c.h.b16 %v363
        %v424 = vpack.c.b16 %v394, %v392
        %v425 = vpack.c.b16 %v395, %v393
        %v426 = vpack.c.b16 %v398, %v396
        %v427 = vpack.c.b16 %v399, %v397
        %v428 = vpack.c.b16 %v402, %v400
        %v429 = vpack.c.b16 %v403, %v401
        %v430 = vpack.c.b16 %v406, %v404
        %v431 = vpack.c.b16 %v407, %v405
        %v432 = vpack.c.b16 %v410, %v408
        %v433 = vpack.c.b16 %v411, %v409
        %v434 = vpack.c.b16 %v414, %v412
        %v435 = vpack.c.b16 %v415, %v413
        %v436 = vpack.c.b16 %v418, %v416
        %v437 = vpack.c.b16 %v419, %v417
        %v438 = vpack.c.b16 %v422, %v420
        %v439 = vpack.c.b16 %v423, %v421
        %456 = vmatprep.subr.bf16.mxu0 %v425
        %457 = vmatpush1.bf16.msra.mxu0 %v424
        %458 = vmatprep.subr.bf16.mxu0 %v427
        %459 = vmatpush1.bf16.msra.mxu0 %v426
        %460 = vmatprep.subr.bf16.mxu0 %v429
        %461 = vmatpush1.bf16.msra.mxu0 %v428
        %462 = vmatprep.subr.bf16.mxu0 %v431
        %463 = vmatpush1.bf16.msra.mxu0 %v430
        %464 = vmatprep.subr.bf16.mxu0 %v433
        %465 = vmatpush1.bf16.msra.mxu0 %v432
        %466 = vmatprep.subr.bf16.mxu0 %v435
        %467 = vmatpush1.bf16.msra.mxu0 %v434
        %468 = vmatprep.subr.bf16.mxu0 %v437
        %469 = vmatpush1.bf16.msra.mxu0 %v436
        %470 = vmatprep.subr.bf16.mxu0 %v439
        %471 = vmatpush1.bf16.msra.mxu0 %v438
        %472 = vmatprep.subr.bf16.mxu0 0
        %473 = vmatpush1.bf16.msra.mxu0 0
        %474 = vmatprep.subr.bf16.mxu0 0
        %475 = vmatpush1.bf16.msra.mxu0 0
        %476 = vmatprep.subr.bf16.mxu0 0
        %477 = vmatpush1.bf16.msra.mxu0 0
        %478 = vmatprep.subr.bf16.mxu0 0
        %479 = vmatpush1.bf16.msra.mxu0 0
        %480 = vmatprep.subr.bf16.mxu0 0
        %481 = vmatpush1.bf16.msra.mxu0 0
        %482 = vmatprep.subr.bf16.mxu0 0
        %483 = vmatpush1.bf16.msra.mxu0 0
        %484 = vmatprep.subr.bf16.mxu0 0
        %485 = vmatpush1.bf16.msra.mxu0 0
        %486 = vmatprep.subr.bf16.mxu0 0
        %487 = vmatpush1.bf16.msra.mxu0 0
        %488 = vmatprep.mubr.bf16.mxu0 0
        %489 = vmatmul.mubr.bf16.gmra.mrb[0].mxu0 %v372
        %v490 = vpop.f32.mrb[0].mxu0
        %v491 = vadd.f32 0.0, %v490
        %v492 = vpop.f32.mrb[0].mxu0
        %v493 = vadd.f32 0.0, %v492
        %v494 = vpop.f32.mrb[0].mxu0
        %v495 = vadd.f32 0.0, %v494
        %v496 = vpop.f32.mrb[0].mxu0
        %v497 = vadd.f32 0.0, %v496
        %498 = vmatprep.mubr.bf16.mxu0 0
        %499 = vmatmul.mubr.bf16.gmra.mrb[0].mxu0 %v373
        %v500 = vpop.f32.mrb[0].mxu0
        %v501 = vadd.f32 0.0, %v500
        %v502 = vpop.f32.mrb[0].mxu0
        %v503 = vadd.f32 0.0, %v502
        %v504 = vpop.f32.mrb[0].mxu0
        %v505 = vadd.f32 0.0, %v504
        %v506 = vpop.f32.mrb[0].mxu0
        %v507 = vadd.f32 0.0, %v506
        %508 = vdwg.mxu0
        %v509 = vadd.f32 %v336, %v491
        %v510 = vadd.f32 %v337, %v493
        %v511 = vadd.f32 %v338, %v495
        %v512 = vadd.f32 %v339, %v497
        %v513 = vadd.f32 %v340, %v501
        %v514 = vadd.f32 %v341, %v503
        %v515 = vadd.f32 %v342, %v505
        %v516 = vadd.f32 %v343, %v507
        %517 = vst [vmem:[#allocation2] sm:$0xff] %v509
        %518 = vst [vmem:[#allocation2 + $0x8] sm:$0xff] %v510
        %519 = vst [vmem:[#allocation2 + $0x10] sm:$0xff] %v511
        %520 = vst [vmem:[#allocation2 + $0x18] sm:$0xff] %v512
        %521 = vst [vmem:[#allocation2 + $0x20] sm:$0xff] %v513
        %522 = vst [vmem:[#allocation2 + $0x28] sm:$0xff] %v514
        %523 = vst [vmem:[#allocation2 + $0x30] sm:$0xff] %v515
        %524 = vst [vmem:[#allocation2 + $0x38] sm:$0xff] %v516
        %p525 = scmp.eq.s32.totalorder %s21, 24
        // Predicated region
        $region78: #{local_critic_forward.6} parent=68 // pred_check
          %p526 = pneg %p525
        $region79: #{local_critic_forward.6} parent=68 // pred_check_branch
          %528 = sbr.rel (%p526) target = $region81
        $region80: #{local_critic_forward.6} parent=68 // pred_region
          %v529 = vld [vmem:[#allocation2] sm:$0xff]
          %v530 = vld [vmem:[#allocation2 + $0x8] sm:$0xff]
          %v531 = vld [vmem:[#allocation2 + $0x10] sm:$0xff]
          %v532 = vld [vmem:[#allocation2 + $0x18] sm:$0xff]
          %v533 = vld [vmem:[#allocation2 + $0x20] sm:$0xff]
          %v534 = vld [vmem:[#allocation2 + $0x28] sm:$0xff]
          %v535 = vld [vmem:[#allocation2 + $0x30] sm:$0xff]
          %v536 = vld [vmem:[#allocation2 + $0x38] sm:$0xff]
          %v537 = vld [vmem:[%s309] sm:$0x3]
          %v539 = vlaneseq
          %v540 = vshrl.u32 %v539, 7
          %v541 = vsub.s32 0, %v540
          %v542 = vrot.slane %v537, %v541
          %v543 = vlaneseq
          %v544 = vshrl.u32 %v543, 7
          %v545 = vsub.s32 1, %v544
          %v546 = vrot.slane %v537, %v545
          %v549 = vadd.f32 %v529, %v542
          %v550 = vadd.f32 %v530, %v546
          %v551 = vadd.f32 %v531, %v542
          %v552 = vadd.f32 %v532, %v546
          %v553 = vadd.f32 %v533, %v542
          %v554 = vadd.f32 %v534, %v546
          %v555 = vadd.f32 %v535, %v542
          %v556 = vadd.f32 %v536, %v546
          %vm557 = vcmp.ge.f32.partialorder %v549, 0.0
          %vm558 = vcmp.ge.f32.partialorder %v550, 0.0
          %vm559 = vcmp.ge.f32.partialorder %v551, 0.0
          %vm560 = vcmp.ge.f32.partialorder %v552, 0.0
          %vm561 = vcmp.ge.f32.partialorder %v553, 0.0
          %vm562 = vcmp.ge.f32.partialorder %v554, 0.0
          %vm563 = vcmp.ge.f32.partialorder %v555, 0.0
          %vm564 = vcmp.ge.f32.partialorder %v556, 0.0
          %v565 = vmul.f32 %v549, 0.2
          %v566 = vmul.f32 %v550, 0.2
          %v567 = vmul.f32 %v551, 0.2
          %v568 = vmul.f32 %v552, 0.2
          %v569 = vmul.f32 %v553, 0.2
          %v570 = vmul.f32 %v554, 0.2
          %v571 = vmul.f32 %v555, 0.2
          %v572 = vmul.f32 %v556, 0.2
          %v573 = vsel %vm557, %v549, %v565
          %v574 = vsel %vm558, %v550, %v566
          %v575 = vsel %vm559, %v551, %v567
          %v576 = vsel %vm560, %v552, %v568
          %v577 = vsel %vm561, %v553, %v569
          %v578 = vsel %vm562, %v554, %v570
          %v579 = vsel %vm563, %v555, %v571
          %v580 = vsel %vm564, %v556, %v572
          %v581 = vpack.c.bf16 %v575, %v573
          %v582 = vpack.c.bf16 %v576, %v574
          %v583 = vpack.c.bf16 %v579, %v577
          %v584 = vpack.c.bf16 %v580, %v578
          %v589 = vunpack.c.l.b16 %v581
          %v590 = vunpack.c.l.b16 %v582
          %v591 = vunpack.c.h.b16 %v581
          %v592 = vunpack.c.h.b16 %v582
          %v593 = vunpack.c.l.b16 %v583
          %v594 = vunpack.c.l.b16 %v584
          %v595 = vunpack.c.h.b16 %v583
          %v596 = vunpack.c.h.b16 %v584
          %v597 = vpack.c.b16 %v590, %v589
          %v598 = vpack.c.b16 %v592, %v591
          %v599 = vpack.c.b16 %v594, %v593
          %v600 = vpack.c.b16 %v596, %v595
          %605 = vst [vmem:[%s320] sm:$0xff] %v597
          %606 = vst [vmem:[%s320 + $0x8] sm:$0xff] %v598
          %607 = vst [vmem:[%s320 + $0x10] sm:$0xff] %v599
          %608 = vst [vmem:[%s320 + $0x18] sm:$0xff] %v600
        $region81: #{local_critic_forward.6} parent=68 // pred_fallthru
          _
        %s609 = smul.u32 4, %s19
        %s610 = smul.u32 2, %s20
        %p611 = scmp.lt.s32.totalorder %s609, 3
        %s612 = scalar_select %p611, %s609, 3
        %p613 = scmp.lt.s32.totalorder %s610, 1
        %s614 = scalar_select %p613, %s610, 1
        %s615 = smul.addr %s612, 2
        %s616 = sadd.s32 %s614, %s615
        %s617 = smul.addr %s616, 4
        %s618 = scalar_lea.vmem %s3, %s617
        // Predicated region
        $region82: #{local_critic_forward.6} parent=68 // pred_check
          %p619 = pneg %p135
        $region83: #{local_critic_forward.6} parent=68 // pred_check_branch
          %621 = sbr.rel (%p619) target = $region85
        $region84: #{local_critic_forward.6} parent=68 // pred_region
          %s622 = smul.u32 4, %s19
          %s623 = smul.u32 2, %s20
        $region85: #{local_critic_forward.6} parent=68 // pred_fallthru
          _
        // Predicated region
        $region86: #{local_critic_forward.6} parent=68 // pred_check
          %p624 = pneg %p135
        $region87: #{local_critic_forward.6} parent=68 // pred_check_branch
          %626 = sbr.rel (%p624) target = $region89
        $region88: #{local_critic_forward.6} parent=68 // pred_region
          %s627 = smul.u32 4, %s19
          %s628 = smul.u32 2, %s20
          %p629 = scmp.lt.s32.totalorder %s627, 3
          %s630 = scalar_select %p629, %s627, 3
          %p631 = scmp.lt.s32.totalorder %s628, 1
          %s632 = scalar_select %p631, %s628, 1
          %s633 = smul.addr %s630, 2
          %s634 = sadd.s32 %s632, %s633
          %s635 = smul.addr %s634, 4
          %s636 = scalar_lea.vmem %s3, %s635
        $region89: #{local_critic_forward.6} parent=68 // pred_fallthru
          _
      $region69: #{local_critic_forward.6} parent=5 // pred_fallthru
        _
      %p637 = scmp.le.s32.totalorder 2, %s9
      // Predicated region
      $region90: #{local_critic_forward.6} parent=5 // pred_check
        %p638 = pneg %p637
      $region91: #{local_critic_forward.6} parent=5 // pred_check_branch
        %640 = sbr.rel (%p638) target = $region93
      $region92: #{local_critic_forward.6} parent=5 // pred_region
        %s641 = ssub.s32 %s9, 2
      $region93: #{local_critic_forward.6} parent=5 // pred_fallthru
        _
    $region6: #{local_critic_forward.6} parent=1 // loop_footer
      %s13 = sadd.s32 1, %s9
    $region7: #{local_critic_forward.6} parent=1 // loop_footer_branch
      %8 = sbr.rel target = $region3
    $region8: #{local_critic_forward.6} parent=1 // loop_exit
      _

// kernel: local_critic_forward.7
$region0: #{local_critic_forward.7}
  #allocation0 [shape = 'u32[]', space=smem, size = 0x4, offset = 0x4, fixed_abs, tag = 'smem constant byte address 0x4 - core index']
  #allocation1 [shape = 'u32[144,128]{1,0:T(1,128)}', space=vmem, size = 0x12000, scoped, tag = 'internal scratch']
  #allocation2 [shape = 'f32[8,512]{1,0:T(8,128)}', space=vmem, size = 0x4000, scoped, tag = 'scratch operand']
  %s0 = inlined_call_operand.vmem [shape: bf16[8,6400], index: 0, kind: input, shape index: {}]
  %s1 = inlined_call_operand.vmem [shape: bf16[6400,512], index: 1, kind: input, shape index: {}]
  %s2 = inlined_call_operand.vmem [shape: f32[1,512], index: 2, kind: input, shape index: {}]
  %s3 = inlined_call_operand.vmem [shape: bf16[512,128], index: 3, kind: input, shape index: {}]
  %s4 = inlined_call_operand.vmem [shape: f32[1,128], index: 4, kind: input, shape index: {}]
  %s5 = inlined_call_operand.vmem [shape: f32[8,128], index: 5, kind: output, shape index: {}]
  %s6 = sld [smem:[#allocation0]]
  $region61: #{local_critic_forward.7} parent=0
    _
  %s8 = ssub.s32 1, %s6
  %s9 = scalar_select 0, %s8, %s6
  loop: start=0, step=1, limit=27
  $region2: #{local_critic_forward.7} parent=0 // loop_pre_header
    _
  $region3: #{local_critic_forward.7} parent=0 // loop_header
    %s11 = sphi 0, %s15
    %p12 = scmp.ge.s32.totalorder %s11, 27
    %s18 = sphi 0, %s30
    %s19 = sphi 0, %s26
    %s20 = sphi 0, %s18
    %s21 = sphi 0, %s19
    %s22 = sphi 0, %s20
    %s23 = sphi 0, %s21
    %s35 = sphi 0, %s37
    %s38 = sphi 0, %s35
    %s39 = sphi 0, %s38
    %s55 = sphi 0, %s39
    %s61 = sphi 0, %s63
    %s64 = sphi 0, %s61
    %s65 = sphi 0, %s64
    %s81 = sphi 0, %s65
    %s85 = sphi 0, %s85
    %s87 = sphi 0, %s85
    %s88 = sphi 0, %s87
    %s102 = sphi 0, %s88
    %s106 = sphi 0, %s106
    %s108 = sphi 0, %s106
    %s109 = sphi 0, %s108
    %s123 = sphi 0, %s109
    %s127 = sphi 0, %s127
    %s129 = sphi 0, %s127
    %s130 = sphi 0, %s129
    %s144 = sphi 0, %s130
    %s150 = sphi 0, %s152
    %s153 = sphi 0, %s150
    %s154 = sphi 0, %s153
    %s170 = sphi 0, %s154
  $region4: #{local_critic_forward.7} parent=0 // loop_header_branch
    %14 = sbr.rel (%p12) target = $region8
  $region5: #{local_critic_forward.7} parent=0 // loop_body
    %s16 = ssub.s32 %s11, 1
    %s17 = ssub.s32 %s11, 2
    %s24 = sadd.s32 1, %s19
    %p25 = scmp.ge.s32.totalorder %s24, 25
    %s26 = scalar_select %p25, 0, %s24
    %s27 = sadd.s32 1, %s18
    %s28 = scalar_select %p25, %s27, %s18
    %p29 = scmp.ge.s32.totalorder %s28, 1
    %s30 = scalar_select %p29, 0, %s28
    %s31 = ssub.s32 %s18, %s30
    %s32 = ssub.s32 %s19, %s26
    %s33 = sor.u32 %s31, %s32
    %p34 = scmp.eq.s32.totalorder %s33, 0
    %s36 = sadd.s32 %s35, 1
    %s37 = scalar_select %p34, %s35, %s36
    %p40 = pneg %p34
    %p41 = scmp.eq.s32.totalorder %s11, 24
    %p42 = por %p40, %p41
    %p43 = scmp.ne.s32.totalorder %s35, %s38
    %p44 = scmp.eq.s32.totalorder %s11, 0
    %p45 = por %p43, %p44
    %p46 = scmp.ne.s32.totalorder %s35, %s38
    %p47 = scmp.eq.s32.totalorder %s16, 24
    %p48 = por %p46, %p47
    %p49 = scmp.ne.s32.totalorder %s38, %s39
    %p50 = scmp.eq.s32.totalorder %s16, 0
    %p51 = por %p49, %p50
    %p52 = scmp.ne.s32.totalorder %s38, %s39
    %p53 = scmp.eq.s32.totalorder %s17, 24
    %p54 = por %p52, %p53
    %p56 = scmp.ne.s32.totalorder %s39, %s55
    %p57 = scmp.eq.s32.totalorder %s17, 0
    %p58 = por %p56, %p57
    %s59 = ssub.s32 %s19, %s26
    %p60 = scmp.eq.s32.totalorder %s59, 0
    %s62 = sadd.s32 %s61, 1
    %s63 = scalar_select %p60, %s61, %s62
    %p66 = pneg %p60
    %p67 = scmp.eq.s32.totalorder %s11, 24
    %p68 = por %p66, %p67
    %p69 = scmp.ne.s32.totalorder %s61, %s64
    %p70 = scmp.eq.s32.totalorder %s11, 0
    %p71 = por %p69, %p70
    %p72 = scmp.ne.s32.totalorder %s61, %s64
    %p73 = scmp.eq.s32.totalorder %s16, 24
    %p74 = por %p72, %p73
    %p75 = scmp.ne.s32.totalorder %s64, %s65
    %p76 = scmp.eq.s32.totalorder %s16, 0
    %p77 = por %p75, %p76
    %p78 = scmp.ne.s32.totalorder %s64, %s65
    %p79 = scmp.eq.s32.totalorder %s17, 24
    %p80 = por %p78, %p79
    %p82 = scmp.ne.s32.totalorder %s65, %s81
    %p83 = scmp.eq.s32.totalorder %s17, 0
    %p84 = por %p82, %p83
    %s86 = sadd.s32 %s85, 1
    %p89 = scmp.eq.s32.totalorder %s11, 24
    %p90 = scmp.ne.s32.totalorder %s85, %s87
    %p91 = scmp.eq.s32.totalorder %s11, 0
    %p92 = por %p90, %p91
    %p93 = scmp.ne.s32.totalorder %s85, %s87
    %p94 = scmp.eq.s32.totalorder %s16, 24
    %p95 = por %p93, %p94
    %p96 = scmp.ne.s32.totalorder %s87, %s88
    %p97 = scmp.eq.s32.totalorder %s16, 0
    %p98 = por %p96, %p97
    %p99 = scmp.ne.s32.totalorder %s87, %s88
    %p100 = scmp.eq.s32.totalorder %s17, 24
    %p101 = por %p99, %p100
    %p103 = scmp.ne.s32.totalorder %s88, %s102
    %p104 = scmp.eq.s32.totalorder %s17, 0
    %p105 = por %p103, %p104
    %s107 = sadd.s32 %s106, 1
    %p110 = scmp.eq.s32.totalorder %s11, 24
    %p111 = scmp.ne.s32.totalorder %s106, %s108
    %p112 = scmp.eq.s32.totalorder %s11, 0
    %p113 = por %p111, %p112
    %p114 = scmp.ne.s32.totalorder %s106, %s108
    %p115 = scmp.eq.s32.totalorder %s16, 24
    %p116 = por %p114, %p115
    %p117 = scmp.ne.s32.totalorder %s108, %s109
    %p118 = scmp.eq.s32.totalorder %s16, 0
    %p119 = por %p117, %p118
    %p120 = scmp.ne.s32.totalorder %s108, %s109
    %p121 = scmp.eq.s32.totalorder %s17, 24
    %p122 = por %p120, %p121
    %p124 = scmp.ne.s32.totalorder %s109, %s123
    %p125 = scmp.eq.s32.totalorder %s17, 0
    %p126 = por %p124, %p125
    %s128 = sadd.s32 %s127, 1
    %p131 = scmp.eq.s32.totalorder %s11, 24
    %p132 = scmp.ne.s32.totalorder %s127, %s129
    %p133 = scmp.eq.s32.totalorder %s11, 0
    %p134 = por %p132, %p133
    %p135 = scmp.ne.s32.totalorder %s127, %s129
    %p136 = scmp.eq.s32.totalorder %s16, 24
    %p137 = por %p135, %p136
    %p138 = scmp.ne.s32.totalorder %s129, %s130
    %p139 = scmp.eq.s32.totalorder %s16, 0
    %p140 = por %p138, %p139
    %p141 = scmp.ne.s32.totalorder %s129, %s130
    %p142 = scmp.eq.s32.totalorder %s17, 24
    %p143 = por %p141, %p142
    %p145 = scmp.ne.s32.totalorder %s130, %s144
    %p146 = scmp.eq.s32.totalorder %s17, 0
    %p147 = por %p145, %p146
    %s148 = ssub.s32 %s18, %s30
    %p149 = scmp.eq.s32.totalorder %s148, 0
    %s151 = sadd.s32 %s150, 1
    %s152 = scalar_select %p149, %s150, %s151
    %p155 = pneg %p149
    %p156 = scmp.eq.s32.totalorder %s11, 24
    %p157 = por %p155, %p156
    %p158 = scmp.ne.s32.totalorder %s150, %s153
    %p159 = scmp.eq.s32.totalorder %s11, 0
    %p160 = por %p158, %p159
    %p161 = scmp.ne.s32.totalorder %s150, %s153
    %p162 = scmp.eq.s32.totalorder %s16, 24
    %p163 = por %p161, %p162
    %p164 = scmp.ne.s32.totalorder %s153, %s154
    %p165 = scmp.eq.s32.totalorder %s16, 0
    %p166 = por %p164, %p165
    %p167 = scmp.ne.s32.totalorder %s153, %s154
    %p168 = scmp.eq.s32.totalorder %s17, 24
    %p169 = por %p167, %p168
    %p171 = scmp.ne.s32.totalorder %s154, %s170
    %p172 = scmp.eq.s32.totalorder %s17, 0
    %p173 = por %p171, %p172
    %p174 = scmp.le.s32.totalorder 1, %s11
    %p175 = scmp.lt.s32.totalorder %s11, 26
    %p176 = pnand %p174, %p175
    %p177 = pneg %p176
    // Predicated region
    $region9: #{local_critic_forward.7} parent=5 // pred_check
      _
    $region10: #{local_critic_forward.7} parent=5 // pred_check_branch
      %179 = sbr.rel (%p176) target = $region12
    $region11: #{local_critic_forward.7} parent=5 // pred_region
      %s180 = ssub.s32 %s11, 1
      // Predicated region
      $region13: #{local_critic_forward.7} parent=11 // pred_check
        %p181 = pneg %p98
      $region14: #{local_critic_forward.7} parent=11 // pred_check_branch
        %183 = sbr.rel (%p181) target = $region16
      $region15: #{local_critic_forward.7} parent=11 // pred_region
        _
      $region16: #{local_critic_forward.7} parent=11 // pred_fallthru
        _
      // Predicated region
      $region17: #{local_critic_forward.7} parent=11 // pred_check
        %p184 = pneg %p119
      $region18: #{local_critic_forward.7} parent=11 // pred_check_branch
        %186 = sbr.rel (%p184) target = $region20
      $region19: #{local_critic_forward.7} parent=11 // pred_region
        _
      $region20: #{local_critic_forward.7} parent=11 // pred_fallthru
        _
      // Predicated region
      $region21: #{local_critic_forward.7} parent=11 // pred_check
        %p187 = pneg %p140
      $region22: #{local_critic_forward.7} parent=11 // pred_check_branch
        %189 = sbr.rel (%p187) target = $region24
      $region23: #{local_critic_forward.7} parent=11 // pred_region
        _
      $region24: #{local_critic_forward.7} parent=11 // pred_fallthru
        _
    $region12: #{local_critic_forward.7} parent=5 // pred_fallthru
      _
    %p190 = scmp.lt.s32.totalorder %s11, 25
    // Predicated region
    $region25: #{local_critic_forward.7} parent=5 // pred_check
      %p191 = pneg %p190
    $region26: #{local_critic_forward.7} parent=5 // pred_check_branch
      %193 = sbr.rel (%p191) target = $region28
    $region27: #{local_critic_forward.7} parent=5 // pred_region
      // Predicated region
      $region29: #{local_critic_forward.7} parent=27 // pred_check
        %p194 = pneg %p45
      $region30: #{local_critic_forward.7} parent=27 // pred_check_branch
        %196 = sbr.rel (%p194) target = $region32
      $region31: #{local_critic_forward.7} parent=27 // pred_region
        %s197 = smul.u32 2, %s19
        %p198 = scmp.lt.s32.totalorder %s18, 0
        %s199 = scalar_select %p198, %s18, 0
        %p200 = scmp.lt.s32.totalorder %s197, 49
        %s201 = scalar_select %p200, %s197, 49
        %s202 = smul.addr %s199, 50
        %s203 = sadd.s32 %s201, %s202
        %s204 = smul.addr %s203, 4
        %s205 = scalar_lea.vmem %s0, %s204
        %s206 = smul.u32 2, %s19
      $region32: #{local_critic_forward.7} parent=27 // pred_fallthru
        _
      // Predicated region
      $region33: #{local_critic_forward.7} parent=27 // pred_check
        %p207 = pneg %p71
      $region34: #{local_critic_forward.7} parent=27 // pred_check_branch
        %209 = sbr.rel (%p207) target = $region36
      $region35: #{local_critic_forward.7} parent=27 // pred_region
        %s210 = smul.u32 32, %s19
        %p211 = scmp.lt.s32.totalorder %s210, 799
        %s212 = scalar_select %p211, %s210, 799
        %s213 = smul.addr %s212, 4
        %s214 = smul.addr %s213, 4
        %s215 = scalar_lea.vmem %s1, %s214
        %s216 = smul.u32 32, %s19
      $region36: #{local_critic_forward.7} parent=27 // pred_fallthru
        _
    $region28: #{local_critic_forward.7} parent=5 // pred_fallthru
      _
    %p217 = scmp.le.s32.totalorder 1, %s11
    %p218 = scmp.lt.s32.totalorder %s11, 26
    %p219 = pnand %p217, %p218
    %p220 = pneg %p219
    // Predicated region
    $region37: #{local_critic_forward.7} parent=5 // pred_check
      _
    $region38: #{local_critic_forward.7} parent=5 // pred_check_branch
      %222 = sbr.rel (%p219) target = $region40
    $region39: #{local_critic_forward.7} parent=5 // pred_region
      %s223 = ssub.s32 %s11, 1
      %s224 = smul.u32 2, %s21
      %p225 = scmp.lt.s32.totalorder %s20, 0
      %s226 = scalar_select %p225, %s20, 0
      %p227 = scmp.lt.s32.totalorder %s224, 49
      %s228 = scalar_select %p227, %s224, 49
      %s229 = smul.addr %s226, 50
      %s230 = sadd.s32 %s228, %s229
      %s231 = smul.addr %s230, 4
      %s232 = scalar_lea.vmem %s0, %s231
      %p233 = pneg %p51
      %p234 = pneg %p48
      %s235 = smul.u32 32, %s21
      %p236 = scmp.lt.s32.totalorder %s235, 799
      %s237 = scalar_select %p236, %s235, 799
      %s238 = smul.addr %s237, 4
      %s239 = smul.addr %s238, 4
      %s240 = scalar_lea.vmem %s1, %s239
      %p241 = pneg %p77
      %p242 = pneg %p74
      %p243 = pneg %p98
      %p244 = pneg %p95
      %p245 = pneg %p119
      %p246 = pneg %p116
      %p247 = pneg %p140
      %p248 = pneg %p137
      %p249 = pneg %p166
      %p250 = pneg %p163
      %p251 = scmp.lt.s32.totalorder %s20, 0
      %s252 = scalar_select %p251, %s20, 0
      %s253 = smul.addr %s252, 8
      %s254 = scalar_lea.vmem %s5, %s253
      %s255 = smul.u32 2, %s21
      %p256 = scmp.lt.s32.totalorder %s20, 0
      %s257 = scalar_select %p256, %s20, 0
      %p258 = scmp.lt.s32.totalorder %s255, 49
      %s259 = scalar_select %p258, %s255, 49
      %s260 = smul.addr %s257, 50
      %s261 = sadd.s32 %s259, %s260
      %s262 = smul.addr %s261, 4
      %s263 = scalar_lea.vmem %s0, %s262
      %s264 = smul.u32 2, %s21
      %s265 = smul.u32 32, %s21
      %p266 = scmp.lt.s32.totalorder %s265, 799
      %s267 = scalar_select %p266, %s265, 799
      %s268 = smul.addr %s267, 4
      %s269 = smul.addr %s268, 4
      %s270 = scalar_lea.vmem %s1, %s269
      %s271 = smul.u32 32, %s21
      %p272 = scmp.lt.s32.totalorder %s20, 0
      %s273 = scalar_select %p272, %s20, 0
      %s274 = smul.addr %s273, 8
      %s275 = scalar_lea.vmem %s5, %s274
      %p277 = scmp.eq.s32.totalorder %s21, 0
      // Predicated region
      $region41: #{local_critic_forward.7} parent=39 // pred_check
        %p278 = pneg %p277
      $region42: #{local_critic_forward.7} parent=39 // pred_check_branch
        %280 = sbr.rel (%p278) target = $region44
      $region43: #{local_critic_forward.7} parent=39 // pred_region
        %281 = vst [vmem:[#allocation2] sm:$0xff] 0.0
        %282 = vst [vmem:[#allocation2 + $0x8] sm:$0xff] 0.0
        %283 = vst [vmem:[#allocation2 + $0x10] sm:$0xff] 0.0
        %284 = vst [vmem:[#allocation2 + $0x18] sm:$0xff] 0.0
      $region44: #{local_critic_forward.7} parent=39 // pred_fallthru
        _
      %v285 = vld [vmem:[#allocation2] sm:$0xff]
      %v286 = vld [vmem:[#allocation2 + $0x8] sm:$0xff]
      %v287 = vld [vmem:[#allocation2 + $0x10] sm:$0xff]
      %v288 = vld [vmem:[#allocation2 + $0x18] sm:$0xff]
      %v289 = vld [vmem:[%s263] sm:$0xff]
      %v290 = vld [vmem:[%s270] sm:$0xff]
      %v291 = vld [vmem:[%s270 + $0x8] sm:$0xff]
      %v292 = vld [vmem:[%s270 + $0x10] sm:$0xff]
      %v293 = vld [vmem:[%s270 + $0x18] sm:$0xff]
      %v294 = vld [vmem:[%s270 + $0x20] sm:$0xff]
      %v295 = vld [vmem:[%s270 + $0x28] sm:$0xff]
      %v296 = vld [vmem:[%s270 + $0x30] sm:$0xff]
      %v297 = vld [vmem:[%s270 + $0x38] sm:$0xff]
      %v298 = vld [vmem:[%s270 + $0x40] sm:$0xff]
      %v299 = vld [vmem:[%s270 + $0x48] sm:$0xff]
      %v300 = vld [vmem:[%s270 + $0x50] sm:$0xff]
      %v301 = vld [vmem:[%s270 + $0x58] sm:$0xff]
      %v302 = vld [vmem:[%s270 + $0x60] sm:$0xff]
      %v303 = vld [vmem:[%s270 + $0x68] sm:$0xff]
      %v304 = vld [vmem:[%s270 + $0x70] sm:$0xff]
      %v305 = vld [vmem:[%s270 + $0x78] sm:$0xff]
      %v306 = vld [vmem:[%s270 + $0x80] sm:$0xff]
      %v307 = vld [vmem:[%s270 + $0x88] sm:$0xff]
      %v308 = vld [vmem:[%s270 + $0x90] sm:$0xff]
      %v309 = vld [vmem:[%s270 + $0x98] sm:$0xff]
      %v310 = vld [vmem:[%s270 + $0xa0] sm:$0xff]
      %v311 = vld [vmem:[%s270 + $0xa8] sm:$0xff]
      %v312 = vld [vmem:[%s270 + $0xb0] sm:$0xff]
      %v313 = vld [vmem:[%s270 + $0xb8] sm:$0xff]
      %v314 = vld [vmem:[%s270 + $0xc0] sm:$0xff]
      %v315 = vld [vmem:[%s270 + $0xc8] sm:$0xff]
      %v316 = vld [vmem:[%s270 + $0xd0] sm:$0xff]
      %v317 = vld [vmem:[%s270 + $0xd8] sm:$0xff]
      %v318 = vld [vmem:[%s270 + $0xe0] sm:$0xff]
      %v319 = vld [vmem:[%s270 + $0xe8] sm:$0xff]
      %v320 = vld [vmem:[%s270 + $0xf0] sm:$0xff]
      %v321 = vld [vmem:[%s270 + $0xf8] sm:$0xff]
      %v322 = vld [vmem:[%s270 + $0x100] sm:$0xff]
      %v323 = vld [vmem:[%s270 + $0x108] sm:$0xff]
      %v324 = vld [vmem:[%s270 + $0x110] sm:$0xff]
      %v325 = vld [vmem:[%s270 + $0x118] sm:$0xff]
      %v326 = vld [vmem:[%s270 + $0x120] sm:$0xff]
      %v327 = vld [vmem:[%s270 + $0x128] sm:$0xff]
      %v328 = vld [vmem:[%s270 + $0x130] sm:$0xff]
      %v329 = vld [vmem:[%s270 + $0x138] sm:$0xff]
      %v330 = vld [vmem:[%s270 + $0x140] sm:$0xff]
      %v331 = vld [vmem:[%s270 + $0x148] sm:$0xff]
      %v332 = vld [vmem:[%s270 + $0x150] sm:$0xff]
      %v333 = vld [vmem:[%s270 + $0x158] sm:$0xff]
      %v334 = vld [vmem:[%s270 + $0x160] sm:$0xff]
      %v335 = vld [vmem:[%s270 + $0x168] sm:$0xff]
      %v336 = vld [vmem:[%s270 + $0x170] sm:$0xff]
      %v337 = vld [vmem:[%s270 + $0x178] sm:$0xff]
      %v338 = vld [vmem:[%s270 + $0x180] sm:$0xff]
      %v339 = vld [vmem:[%s270 + $0x188] sm:$0xff]
      %v340 = vld [vmem:[%s270 + $0x190] sm:$0xff]
      %v341 = vld [vmem:[%s270 + $0x198] sm:$0xff]
      %v342 = vld [vmem:[%s270 + $0x1a0] sm:$0xff]
      %v343 = vld [vmem:[%s270 + $0x1a8] sm:$0xff]
      %v344 = vld [vmem:[%s270 + $0x1b0] sm:$0xff]
      %v345 = vld [vmem:[%s270 + $0x1b8] sm:$0xff]
      %v346 = vld [vmem:[%s270 + $0x1c0] sm:$0xff]
      %v347 = vld [vmem:[%s270 + $0x1c8] sm:$0xff]
      %v348 = vld [vmem:[%s270 + $0x1d0] sm:$0xff]
      %v349 = vld [vmem:[%s270 + $0x1d8] sm:$0xff]
      %v350 = vld [vmem:[%s270 + $0x1e0] sm:$0xff]
      %v351 = vld [vmem:[%s270 + $0x1e8] sm:$0xff]
      %v352 = vld [vmem:[%s270 + $0x1f0] sm:$0xff]
      %v353 = vld [vmem:[%s270 + $0x1f8] sm:$0xff]
      %v355 = vunpack.c.l.b16 %v289
      %v356 = vunpack.c.h.b16 %v289
      %v357 = vpack.c.b16 %v355, %v355
      %v358 = vpack.c.b16 %v356, %v356
      %v425 = vunpack.c.l.b16 %v290
      %v426 = vunpack.c.h.b16 %v290
      %v427 = vunpack.c.l.b16 %v291
      %v428 = vunpack.c.h.b16 %v291
      %v429 = vunpack.c.l.b16 %v292
      %v430 = vunpack.c.h.b16 %v292
      %v431 = vunpack.c.l.b16 %v293
      %v432 = vunpack.c.h.b16 %v293
      %v433 = vunpack.c.l.b16 %v294
      %v434 = vunpack.c.h.b16 %v294
      %v435 = vunpack.c.l.b16 %v295
      %v436 = vunpack.c.h.b16 %v295
      %v437 = vunpack.c.l.b16 %v296
      %v438 = vunpack.c.h.b16 %v296
      %v439 = vunpack.c.l.b16 %v297
      %v440 = vunpack.c.h.b16 %v297
      %v441 = vunpack.c.l.b16 %v298
      %v442 = vunpack.c.h.b16 %v298
      %v443 = vunpack.c.l.b16 %v299
      %v444 = vunpack.c.h.b16 %v299
      %v445 = vunpack.c.l.b16 %v300
      %v446 = vunpack.c.h.b16 %v300
      %v447 = vunpack.c.l.b16 %v301
      %v448 = vunpack.c.h.b16 %v301
      %v449 = vunpack.c.l.b16 %v302
      %v450 = vunpack.c.h.b16 %v302
      %v451 = vunpack.c.l.b16 %v303
      %v452 = vunpack.c.h.b16 %v303
      %v453 = vunpack.c.l.b16 %v304
      %v454 = vunpack.c.h.b16 %v304
      %v455 = vunpack.c.l.b16 %v305
      %v456 = vunpack.c.h.b16 %v305
      %v457 = vunpack.c.l.b16 %v306
      %v458 = vunpack.c.h.b16 %v306
      %v459 = vunpack.c.l.b16 %v307
      %v460 = vunpack.c.h.b16 %v307
      %v461 = vunpack.c.l.b16 %v308
      %v462 = vunpack.c.h.b16 %v308
      %v463 = vunpack.c.l.b16 %v309
      %v464 = vunpack.c.h.b16 %v309
      %v465 = vunpack.c.l.b16 %v310
      %v466 = vunpack.c.h.b16 %v310
      %v467 = vunpack.c.l.b16 %v311
      %v468 = vunpack.c.h.b16 %v311
      %v469 = vunpack.c.l.b16 %v312
      %v470 = vunpack.c.h.b16 %v312
      %v471 = vunpack.c.l.b16 %v313
      %v472 = vunpack.c.h.b16 %v313
      %v473 = vunpack.c.l.b16 %v314
      %v474 = vunpack.c.h.b16 %v314
      %v475 = vunpack.c.l.b16 %v315
      %v476 = vunpack.c.h.b16 %v315
      %v477 = vunpack.c.l.b16 %v316
      %v478 = vunpack.c.h.b16 %v316
      %v479 = vunpack.c.l.b16 %v317
      %v480 = vunpack.c.h.b16 %v317
      %v481 = vunpack.c.l.b16 %v318
      %v482 = vunpack.c.h.b16 %v318
      %v483 = vunpack.c.l.b16 %v319
      %v484 = vunpack.c.h.b16 %v319
      %v485 = vunpack.c.l.b16 %v320
      %v486 = vunpack.c.h.b16 %v320
      %v487 = vunpack.c.l.b16 %v321
      %v488 = vunpack.c.h.b16 %v321
      %v489 = vunpack.c.l.b16 %v322
      %v490 = vunpack.c.h.b16 %v322
      %v491 = vunpack.c.l.b16 %v323
      %v492 = vunpack.c.h.b16 %v323
      %v493 = vunpack.c.l.b16 %v324
      %v494 = vunpack.c.h.b16 %v324
      %v495 = vunpack.c.l.b16 %v325
      %v496 = vunpack.c.h.b16 %v325
      %v497 = vunpack.c.l.b16 %v326
      %v498 = vunpack.c.h.b16 %v326
      %v499 = vunpack.c.l.b16 %v327
      %v500 = vunpack.c.h.b16 %v327
      %v501 = vunpack.c.l.b16 %v328
      %v502 = vunpack.c.h.b16 %v328
      %v503 = vunpack.c.l.b16 %v329
      %v504 = vunpack.c.h.b16 %v329
      %v505 = vunpack.c.l.b16 %v330
      %v506 = vunpack.c.h.b16 %v330
      %v507 = vunpack.c.l.b16 %v331
      %v508 = vunpack.c.h.b16 %v331
      %v509 = vunpack.c.l.b16 %v332
      %v510 = vunpack.c.h.b16 %v332
      %v511 = vunpack.c.l.b16 %v333
      %v512 = vunpack.c.h.b16 %v333
      %v513 = vunpack.c.l.b16 %v334
      %v514 = vunpack.c.h.b16 %v334
      %v515 = vunpack.c.l.b16 %v335
      %v516 = vunpack.c.h.b16 %v335
      %v517 = vunpack.c.l.b16 %v336
      %v518 = vunpack.c.h.b16 %v336
      %v519 = vunpack.c.l.b16 %v337
      %v520 = vunpack.c.h.b16 %v337
      %v521 = vunpack.c.l.b16 %v338
      %v522 = vunpack.c.h.b16 %v338
      %v523 = vunpack.c.l.b16 %v339
      %v524 = vunpack.c.h.b16 %v339
      %v525 = vunpack.c.l.b16 %v340
      %v526 = vunpack.c.h.b16 %v340
      %v527 = vunpack.c.l.b16 %v341
      %v528 = vunpack.c.h.b16 %v341
      %v529 = vunpack.c.l.b16 %v342
      %v530 = vunpack.c.h.b16 %v342
      %v531 = vunpack.c.l.b16 %v343
      %v532 = vunpack.c.h.b16 %v343
      %v533 = vunpack.c.l.b16 %v344
      %v534 = vunpack.c.h.b16 %v344
      %v535 = vunpack.c.l.b16 %v345
      %v536 = vunpack.c.h.b16 %v345
      %v537 = vunpack.c.l.b16 %v346
      %v538 = vunpack.c.h.b16 %v346
      %v539 = vunpack.c.l.b16 %v347
      %v540 = vunpack.c.h.b16 %v347
      %v541 = vunpack.c.l.b16 %v348
      %v542 = vunpack.c.h.b16 %v348
      %v543 = vunpack.c.l.b16 %v349
      %v544 = vunpack.c.h.b16 %v349
      %v545 = vunpack.c.l.b16 %v350
      %v546 = vunpack.c.h.b16 %v350
      %v547 = vunpack.c.l.b16 %v351
      %v548 = vunpack.c.h.b16 %v351
      %v549 = vunpack.c.l.b16 %v352
      %v550 = vunpack.c.h.b16 %v352
      %v551 = vunpack.c.l.b16 %v353
      %v552 = vunpack.c.h.b16 %v353
      %v553 = vpack.c.b16 %v429, %v425
      %v554 = vpack.c.b16 %v430, %v426
      %v555 = vpack.c.b16 %v431, %v427
      %v556 = vpack.c.b16 %v432, %v428
      %v557 = vpack.c.b16 %v437, %v433
      %v558 = vpack.c.b16 %v438, %v434
      %v559 = vpack.c.b16 %v439, %v435
      %v560 = vpack.c.b16 %v440, %v436
      %v561 = vpack.c.b16 %v445, %v441
      %v562 = vpack.c.b16 %v446, %v442
      %v563 = vpack.c.b16 %v447, %v443
      %v564 = vpack.c.b16 %v448, %v444
      %v565 = vpack.c.b16 %v453, %v449
      %v566 = vpack.c.b16 %v454, %v450
      %v567 = vpack.c.b16 %v455, %v451
      %v568 = vpack.c.b16 %v456, %v452
      %v569 = vpack.c.b16 %v461, %v457
      %v570 = vpack.c.b16 %v462, %v458
      %v571 = vpack.c.b16 %v463, %v459
      %v572 = vpack.c.b16 %v464, %v460
      %v573 = vpack.c.b16 %v469, %v465
      %v574 = vpack.c.b16 %v470, %v466
      %v575 = vpack.c.b16 %v471, %v467
      %v576 = vpack.c.b16 %v472, %v468
      %v577 = vpack.c.b16 %v477, %v473
      %v578 = vpack.c.b16 %v478, %v474
      %v579 = vpack.c.b16 %v479, %v475
      %v580 = vpack.c.b16 %v480, %v476
      %v581 = vpack.c.b16 %v485, %v481
      %v582 = vpack.c.b16 %v486, %v482
      %v583 = vpack.c.b16 %v487, %v483
      %v584 = vpack.c.b16 %v488, %v484
      %v585 = vpack.c.b16 %v493, %v489
      %v586 = vpack.c.b16 %v494, %v490
      %v587 = vpack.c.b16 %v495, %v491
      %v588 = vpack.c.b16 %v496, %v492
      %v589 = vpack.c.b16 %v501, %v497
      %v590 = vpack.c.b16 %v502, %v498
      %v591 = vpack.c.b16 %v503, %v499
      %v592 = vpack.c.b16 %v504, %v500
      %v593 = vpack.c.b16 %v509, %v505
      %v594 = vpack.c.b16 %v510, %v506
      %v595 = vpack.c.b16 %v511, %v507
      %v596 = vpack.c.b16 %v512, %v508
      %v597 = vpack.c.b16 %v517, %v513
      %v598 = vpack.c.b16 %v518, %v514
      %v599 = vpack.c.b16 %v519, %v515
      %v600 = vpack.c.b16 %v520, %v516
      %v601 = vpack.c.b16 %v525, %v521
      %v602 = vpack.c.b16 %v526, %v522
      %v603 = vpack.c.b16 %v527, %v523
      %v604 = vpack.c.b16 %v528, %v524
      %v605 = vpack.c.b16 %v533, %v529
      %v606 = vpack.c.b16 %v534, %v530
      %v607 = vpack.c.b16 %v535, %v531
      %v608 = vpack.c.b16 %v536, %v532
      %v609 = vpack.c.b16 %v541, %v537
      %v610 = vpack.c.b16 %v542, %v538
      %v611 = vpack.c.b16 %v543, %v539
      %v612 = vpack.c.b16 %v544, %v540
      %v613 = vpack.c.b16 %v549, %v545
      %v614 = vpack.c.b16 %v550, %v546
      %v615 = vpack.c.b16 %v551, %v547
      %v616 = vpack.c.b16 %v552, %v548
      %681 = vmatprep.subr.bf16.mxu0 %v554
      %682 = vmatpush1.bf16.msra.mxu0 %v553
      %683 = vmatprep.subr.bf16.mxu0 %v558
      %684 = vmatpush1.bf16.msra.mxu0 %v557
      %685 = vmatprep.subr.bf16.mxu0 %v562
      %686 = vmatpush1.bf16.msra.mxu0 %v561
      %687 = vmatprep.subr.bf16.mxu0 %v566
      %688 = vmatpush1.bf16.msra.mxu0 %v565
      %689 = vmatprep.subr.bf16.mxu0 %v570
      %690 = vmatpush1.bf16.msra.mxu0 %v569
      %691 = vmatprep.subr.bf16.mxu0 %v574
      %692 = vmatpush1.bf16.msra.mxu0 %v573
      %693 = vmatprep.subr.bf16.mxu0 %v578
      %694 = vmatpush1.bf16.msra.mxu0 %v577
      %695 = vmatprep.subr.bf16.mxu0 %v582
      %696 = vmatpush1.bf16.msra.mxu0 %v581
      %697 = vmatprep.subr.bf16.mxu0 %v586
      %698 = vmatpush1.bf16.msra.mxu0 %v585
      %699 = vmatprep.subr.bf16.mxu0 %v590
      %700 = vmatpush1.bf16.msra.mxu0 %v589
      %701 = vmatprep.subr.bf16.mxu0 %v594
      %702 = vmatpush1.bf16.msra.mxu0 %v593
      %703 = vmatprep.subr.bf16.mxu0 %v598
      %704 = vmatpush1.bf16.msra.mxu0 %v597
      %705 = vmatprep.subr.bf16.mxu0 %v602
      %706 = vmatpush1.bf16.msra.mxu0 %v601
      %707 = vmatprep.subr.bf16.mxu0 %v606
      %708 = vmatpush1.bf16.msra.mxu0 %v605
      %709 = vmatprep.subr.bf16.mxu0 %v610
      %710 = vmatpush1.bf16.msra.mxu0 %v609
      %711 = vmatprep.subr.bf16.mxu0 %v614
      %712 = vmatpush1.bf16.msra.mxu0 %v613
      %713 = vmatprep.mubr.bf16.mxu0 %v358
      %714 = vmatmul.mubr.bf16.gmra.mrb[0].mxu0 %v357
      %v715 = vpop.f32.mrb[0].mxu0
      %v716 = vadd.f32 0.0, %v715
      %v717 = vpop.f32.mrb[0].mxu0
      %v718 = vadd.f32 0.0, %v717
      %v719 = vpop.f32.mrb[0].mxu0
      %v720 = vpop.f32.mrb[0].mxu0
      %721 = vdwg.mxu0
      %722 = vmatprep.subr.bf16.mxu0 %v556
      %723 = vmatpush1.bf16.msra.mxu0 %v555
      %724 = vmatprep.subr.bf16.mxu0 %v560
      %725 = vmatpush1.bf16.msra.mxu0 %v559
      %726 = vmatprep.subr.bf16.mxu0 %v564
      %727 = vmatpush1.bf16.msra.mxu0 %v563
      %728 = vmatprep.subr.bf16.mxu0 %v568
      %729 = vmatpush1.bf16.msra.mxu0 %v567
      %730 = vmatprep.subr.bf16.mxu0 %v572
      %731 = vmatpush1.bf16.msra.mxu0 %v571
      %732 = vmatprep.subr.bf16.mxu0 %v576
      %733 = vmatpush1.bf16.msra.mxu0 %v575
      %734 = vmatprep.subr.bf16.mxu0 %v580
      %735 = vmatpush1.bf16.msra.mxu0 %v579
      %736 = vmatprep.subr.bf16.mxu0 %v584
      %737 = vmatpush1.bf16.msra.mxu0 %v583
      %738 = vmatprep.subr.bf16.mxu0 %v588
      %739 = vmatpush1.bf16.msra.mxu0 %v587
      %740 = vmatprep.subr.bf16.mxu0 %v592
      %741 = vmatpush1.bf16.msra.mxu0 %v591
      %742 = vmatprep.subr.bf16.mxu0 %v596
      %743 = vmatpush1.bf16.msra.mxu0 %v595
      %744 = vmatprep.subr.bf16.mxu0 %v600
      %745 = vmatpush1.bf16.msra.mxu0 %v599
      %746 = vmatprep.subr.bf16.mxu0 %v604
      %747 = vmatpush1.bf16.msra.mxu0 %v603
      %748 = vmatprep.subr.bf16.mxu0 %v608
      %749 = vmatpush1.bf16.msra.mxu0 %v607
      %750 = vmatprep.subr.bf16.mxu0 %v612
      %751 = vmatpush1.bf16.msra.mxu0 %v611
      %752 = vmatprep.subr.bf16.mxu0 %v616
      %753 = vmatpush1.bf16.msra.mxu0 %v615
      %754 = vmatprep.mubr.bf16.mxu0 %v358
      %755 = vmatmul.mubr.bf16.gmra.mrb[0].mxu0 %v357
      %v756 = vpop.f32.mrb[0].mxu0
      %v757 = vadd.f32 0.0, %v756
      %v758 = vpop.f32.mrb[0].mxu0
      %v759 = vadd.f32 0.0, %v758
      %v760 = vpop.f32.mrb[0].mxu0
      %v761 = vpop.f32.mrb[0].mxu0
      %762 = vdwg.mxu0
      %v763 = vadd.f32 %v285, %v716
      %v764 = vadd.f32 %v286, %v718
      %v765 = vadd.f32 %v287, %v757
      %v766 = vadd.f32 %v288, %v759
      %767 = vst [vmem:[#allocation2] sm:$0xff] %v763
      %768 = vst [vmem:[#allocation2 + $0x8] sm:$0xff] %v764
      %769 = vst [vmem:[#allocation2 + $0x10] sm:$0xff] %v765
      %770 = vst [vmem:[#allocation2 + $0x18] sm:$0xff] %v766
      %p771 = scmp.eq.s32.totalorder %s21, 24
      // Predicated region
      $region45: #{local_critic_forward.7} parent=39 // pred_check
        %p772 = pneg %p771
      $region46: #{local_critic_forward.7} parent=39 // pred_check_branch
        %774 = sbr.rel (%p772) target = $region48
      $region47: #{local_critic_forward.7} parent=39 // pred_region
        %v775 = vld [vmem:[#allocation2] sm:$0xff]
        %v776 = vld [vmem:[#allocation2 + $0x8] sm:$0xff]
        %v777 = vld [vmem:[#allocation2 + $0x10] sm:$0xff]
        %v778 = vld [vmem:[#allocation2 + $0x18] sm:$0xff]
        %v779 = vld [vmem:[%s2] sm:$0xf]
        %v781 = vlaneseq
        %v782 = vshrl.u32 %v781, 7
        %v783 = vsub.s32 0, %v782
        %v784 = vrot.slane %v779, %v783
        %v785 = vlaneseq
        %v786 = vshrl.u32 %v785, 7
        %v787 = vsub.s32 1, %v786
        %v788 = vrot.slane %v779, %v787
        %v789 = vlaneseq
        %v790 = vshrl.u32 %v789, 7
        %v791 = vsub.s32 2, %v790
        %v792 = vrot.slane %v779, %v791
        %v793 = vlaneseq
        %v794 = vshrl.u32 %v793, 7
        %v795 = vsub.s32 3, %v794
        %v796 = vrot.slane %v779, %v795
        %v801 = vadd.f32 %v775, %v784
        %v802 = vadd.f32 %v776, %v788
        %v803 = vadd.f32 %v777, %v792
        %v804 = vadd.f32 %v778, %v796
        %vm805 = vcmp.ge.f32.partialorder %v801, 0.0
        %vm806 = vcmp.ge.f32.partialorder %v802, 0.0
        %vm807 = vcmp.ge.f32.partialorder %v803, 0.0
        %vm808 = vcmp.ge.f32.partialorder %v804, 0.0
        %v809 = vmul.f32 %v801, 0.2
        %v810 = vmul.f32 %v802, 0.2
        %v811 = vmul.f32 %v803, 0.2
        %v812 = vmul.f32 %v804, 0.2
        %v813 = vsel %vm805, %v801, %v809
        %v814 = vsel %vm806, %v802, %v810
        %v815 = vsel %vm807, %v803, %v811
        %v816 = vsel %vm808, %v804, %v812
        %v817 = vpack.c.bf16 %v813, %v813
        %v818 = vpack.c.bf16 %v814, %v814
        %v819 = vpack.c.bf16 %v815, %v815
        %v820 = vpack.c.bf16 %v816, %v816
        %v821 = vld [vmem:[%s3] sm:$0xf]
        %v822 = vld [vmem:[%s3 + $0x4] sm:$0xf]
        %v823 = vld [vmem:[%s3 + $0x8] sm:$0xf]
        %v824 = vld [vmem:[%s3 + $0xc] sm:$0xf]
        %v825 = vld [vmem:[%s3 + $0x10] sm:$0xf]
        %v826 = vld [vmem:[%s3 + $0x14] sm:$0xf]
        %v827 = vld [vmem:[%s3 + $0x18] sm:$0xf]
        %v828 = vld [vmem:[%s3 + $0x1c] sm:$0xf]
        %v829 = vld [vmem:[%s3 + $0x20] sm:$0xf]
        %v830 = vld [vmem:[%s3 + $0x24] sm:$0xf]
        %v831 = vld [vmem:[%s3 + $0x28] sm:$0xf]
        %v832 = vld [vmem:[%s3 + $0x2c] sm:$0xf]
        %v833 = vld [vmem:[%s3 + $0x30] sm:$0xf]
        %v834 = vld [vmem:[%s3 + $0x34] sm:$0xf]
        %v835 = vld [vmem:[%s3 + $0x38] sm:$0xf]
        %v836 = vld [vmem:[%s3 + $0x3c] sm:$0xf]
        %v837 = vld [vmem:[%s3 + $0x40] sm:$0xf]
        %v838 = vld [vmem:[%s3 + $0x44] sm:$0xf]
        %v839 = vld [vmem:[%s3 + $0x48] sm:$0xf]
        %v840 = vld [vmem:[%s3 + $0x4c] sm:$0xf]
        %v841 = vld [vmem:[%s3 + $0x50] sm:$0xf]
        %v842 = vld [vmem:[%s3 + $0x54] sm:$0xf]
        %v843 = vld [vmem:[%s3 + $0x58] sm:$0xf]
        %v844 = vld [vmem:[%s3 + $0x5c] sm:$0xf]
        %v845 = vld [vmem:[%s3 + $0x60] sm:$0xf]
        %v846 = vld [vmem:[%s3 + $0x64] sm:$0xf]
        %v847 = vld [vmem:[%s3 + $0x68] sm:$0xf]
        %v848 = vld [vmem:[%s3 + $0x6c] sm:$0xf]
        %v849 = vld [vmem:[%s3 + $0x70] sm:$0xf]
        %v850 = vld [vmem:[%s3 + $0x74] sm:$0xf]
        %v851 = vld [vmem:[%s3 + $0x78] sm:$0xf]
        %v852 = vld [vmem:[%s3 + $0x7c] sm:$0xf]
        %v853 = vld [vmem:[%s3 + $0x80] sm:$0xf]
        %v854 = vld [vmem:[%s3 + $0x84] sm:$0xf]
        %v855 = vld [vmem:[%s3 + $0x88] sm:$0xf]
        %v856 = vld [vmem:[%s3 + $0x8c] sm:$0xf]
        %v857 = vld [vmem:[%s3 + $0x90] sm:$0xf]
        %v858 = vld [vmem:[%s3 + $0x94] sm:$0xf]
        %v859 = vld [vmem:[%s3 + $0x98] sm:$0xf]
        %v860 = vld [vmem:[%s3 + $0x9c] sm:$0xf]
        %v861 = vld [vmem:[%s3 + $0xa0] sm:$0xf]
        %v862 = vld [vmem:[%s3 + $0xa4] sm:$0xf]
        %v863 = vld [vmem:[%s3 + $0xa8] sm:$0xf]
        %v864 = vld [vmem:[%s3 + $0xac] sm:$0xf]
        %v865 = vld [vmem:[%s3 + $0xb0] sm:$0xf]
        %v866 = vld [vmem:[%s3 + $0xb4] sm:$0xf]
        %v867 = vld [vmem:[%s3 + $0xb8] sm:$0xf]
        %v868 = vld [vmem:[%s3 + $0xbc] sm:$0xf]
        %v869 = vld [vmem:[%s3 + $0xc0] sm:$0xf]
        %v870 = vld [vmem:[%s3 + $0xc4] sm:$0xf]
        %v871 = vld [vmem:[%s3 + $0xc8] sm:$0xf]
        %v872 = vld [vmem:[%s3 + $0xcc] sm:$0xf]
        %v873 = vld [vmem:[%s3 + $0xd0] sm:$0xf]
        %v874 = vld [vmem:[%s3 + $0xd4] sm:$0xf]
        %v875 = vld [vmem:[%s3 + $0xd8] sm:$0xf]
        %v876 = vld [vmem:[%s3 + $0xdc] sm:$0xf]
        %v877 = vld [vmem:[%s3 + $0xe0] sm:$0xf]
        %v878 = vld [vmem:[%s3 + $0xe4] sm:$0xf]
        %v879 = vld [vmem:[%s3 + $0xe8] sm:$0xf]
        %v880 = vld [vmem:[%s3 + $0xec] sm:$0xf]
        %v881 = vld [vmem:[%s3 + $0xf0] sm:$0xf]
        %v882 = vld [vmem:[%s3 + $0xf4] sm:$0xf]
        %v883 = vld [vmem:[%s3 + $0xf8] sm:$0xf]
        %v884 = vld [vmem:[%s3 + $0xfc] sm:$0xf]
        %v885 = vld [vmem:[%s4] sm:$0x1]
        %v887 = vlaneseq
        %v888 = vshrl.u32 %v887, 7
        %v889 = vsub.s32 0, %v888
        %v890 = vrot.slane %v885, %v889
        %v956 = vunpack.c.l.b16 %v821
        %v957 = vunpack.c.l.b16 %v822
        %v958 = vunpack.c.l.b16 %v823
        %v959 = vunpack.c.l.b16 %v824
        %v960 = vunpack.c.l.b16 %v825
        %v961 = vunpack.c.l.b16 %v826
        %v962 = vunpack.c.l.b16 %v827
        %v963 = vunpack.c.l.b16 %v828
        %v964 = vunpack.c.l.b16 %v829
        %v965 = vunpack.c.l.b16 %v830
        %v966 = vunpack.c.l.b16 %v831
        %v967 = vunpack.c.l.b16 %v832
        %v968 = vunpack.c.l.b16 %v833
        %v969 = vunpack.c.l.b16 %v834
        %v970 = vunpack.c.l.b16 %v835
        %v971 = vunpack.c.l.b16 %v836
        %v972 = vunpack.c.l.b16 %v837
        %v973 = vunpack.c.l.b16 %v838
        %v974 = vunpack.c.l.b16 %v839
        %v975 = vunpack.c.l.b16 %v840
        %v976 = vunpack.c.l.b16 %v841
        %v977 = vunpack.c.l.b16 %v842
        %v978 = vunpack.c.l.b16 %v843
        %v979 = vunpack.c.l.b16 %v844
        %v980 = vunpack.c.l.b16 %v845
        %v981 = vunpack.c.l.b16 %v846
        %v982 = vunpack.c.l.b16 %v847
        %v983 = vunpack.c.l.b16 %v848
        %v984 = vunpack.c.l.b16 %v849
        %v985 = vunpack.c.l.b16 %v850
        %v986 = vunpack.c.l.b16 %v851
        %v987 = vunpack.c.l.b16 %v852
        %v988 = vunpack.c.l.b16 %v853
        %v989 = vunpack.c.l.b16 %v854
        %v990 = vunpack.c.l.b16 %v855
        %v991 = vunpack.c.l.b16 %v856
        %v992 = vunpack.c.l.b16 %v857
        %v993 = vunpack.c.l.b16 %v858
        %v994 = vunpack.c.l.b16 %v859
        %v995 = vunpack.c.l.b16 %v860
        %v996 = vunpack.c.l.b16 %v861
        %v997 = vunpack.c.l.b16 %v862
        %v998 = vunpack.c.l.b16 %v863
        %v999 = vunpack.c.l.b16 %v864
        %v1000 = vunpack.c.l.b16 %v865
        %v1001 = vunpack.c.l.b16 %v866
        %v1002 = vunpack.c.l.b16 %v867
        %v1003 = vunpack.c.l.b16 %v868
        %v1004 = vunpack.c.l.b16 %v869
        %v1005 = vunpack.c.l.b16 %v870
        %v1006 = vunpack.c.l.b16 %v871
        %v1007 = vunpack.c.l.b16 %v872
        %v1008 = vunpack.c.l.b16 %v873
        %v1009 = vunpack.c.l.b16 %v874
        %v1010 = vunpack.c.l.b16 %v875
        %v1011 = vunpack.c.l.b16 %v876
        %v1012 = vunpack.c.l.b16 %v877
        %v1013 = vunpack.c.l.b16 %v878
        %v1014 = vunpack.c.l.b16 %v879
        %v1015 = vunpack.c.l.b16 %v880
        %v1016 = vunpack.c.l.b16 %v881
        %v1017 = vunpack.c.l.b16 %v882
        %v1018 = vunpack.c.l.b16 %v883
        %v1019 = vunpack.c.l.b16 %v884
        %v1020 = vpack.c.b16 %v957, %v956
        %v1021 = vpack.c.b16 %v959, %v958
        %v1022 = vpack.c.b16 %v961, %v960
        %v1023 = vpack.c.b16 %v963, %v962
        %v1024 = vpack.c.b16 %v965, %v964
        %v1025 = vpack.c.b16 %v967, %v966
        %v1026 = vpack.c.b16 %v969, %v968
        %v1027 = vpack.c.b16 %v971, %v970
        %v1028 = vpack.c.b16 %v973, %v972
        %v1029 = vpack.c.b16 %v975, %v974
        %v1030 = vpack.c.b16 %v977, %v976
        %v1031 = vpack.c.b16 %v979, %v978
        %v1032 = vpack.c.b16 %v981, %v980
        %v1033 = vpack.c.b16 %v983, %v982
        %v1034 = vpack.c.b16 %v985, %v984
        %v1035 = vpack.c.b16 %v987, %v986
        %v1036 = vpack.c.b16 %v989, %v988
        %v1037 = vpack.c.b16 %v991, %v990
        %v1038 = vpack.c.b16 %v993, %v992
        %v1039 = vpack.c.b16 %v995, %v994
        %v1040 = vpack.c.b16 %v997, %v996
        %v1041 = vpack.c.b16 %v999, %v998
        %v1042 = vpack.c.b16 %v1001, %v1000
        %v1043 = vpack.c.b16 %v1003, %v1002
        %v1044 = vpack.c.b16 %v1005, %v1004
        %v1045 = vpack.c.b16 %v1007, %v1006
        %v1046 = vpack.c.b16 %v1009, %v1008
        %v1047 = vpack.c.b16 %v1011, %v1010
        %v1048 = vpack.c.b16 %v1013, %v1012
        %v1049 = vpack.c.b16 %v1015, %v1014
        %v1050 = vpack.c.b16 %v1017, %v1016
        %v1051 = vpack.c.b16 %v1019, %v1018
        %1084 = vmatprep.subr.bf16.mxu0 0
        %1085 = vmatpush1.bf16.msra.mxu0 %v1020
        %1086 = vmatprep.subr.bf16.mxu0 0
        %1087 = vmatpush1.bf16.msra.mxu0 %v1021
        %1088 = vmatprep.subr.bf16.mxu0 0
        %1089 = vmatpush1.bf16.msra.mxu0 %v1022
        %1090 = vmatprep.subr.bf16.mxu0 0
        %1091 = vmatpush1.bf16.msra.mxu0 %v1023
        %1092 = vmatprep.subr.bf16.mxu0 0
        %1093 = vmatpush1.bf16.msra.mxu0 %v1024
        %1094 = vmatprep.subr.bf16.mxu0 0
        %1095 = vmatpush1.bf16.msra.mxu0 %v1025
        %1096 = vmatprep.subr.bf16.mxu0 0
        %1097 = vmatpush1.bf16.msra.mxu0 %v1026
        %1098 = vmatprep.subr.bf16.mxu0 0
        %1099 = vmatpush1.bf16.msra.mxu0 %v1027
        %1100 = vmatprep.subr.bf16.mxu0 0
        %1101 = vmatpush1.bf16.msra.mxu0 %v1028
        %1102 = vmatprep.subr.bf16.mxu0 0
        %1103 = vmatpush1.bf16.msra.mxu0 %v1029
        %1104 = vmatprep.subr.bf16.mxu0 0
        %1105 = vmatpush1.bf16.msra.mxu0 %v1030
        %1106 = vmatprep.subr.bf16.mxu0 0
        %1107 = vmatpush1.bf16.msra.mxu0 %v1031
        %1108 = vmatprep.subr.bf16.mxu0 0
        %1109 = vmatpush1.bf16.msra.mxu0 %v1032
        %1110 = vmatprep.subr.bf16.mxu0 0
        %1111 = vmatpush1.bf16.msra.mxu0 %v1033
        %1112 = vmatprep.subr.bf16.mxu0 0
        %1113 = vmatpush1.bf16.msra.mxu0 %v1034
        %1114 = vmatprep.subr.bf16.mxu0 0
        %1115 = vmatpush1.bf16.msra.mxu0 %v1035
        %1116 = vmatprep.mubr.bf16.mxu0 %v818
        %1117 = vmatmul.mubr.bf16.gmra.mrb[0].mxu0 %v817
        %v1118 = vpop.f32.mrb[0].mxu0
        %v1119 = vadd.f32 %v890, %v1118
        %v1120 = vpop.f32.mrb[0].mxu0
        %v1121 = vpop.f32.mrb[0].mxu0
        %v1122 = vpop.f32.mrb[0].mxu0
        %1123 = vdwg.mxu0
        %1124 = vmatprep.subr.bf16.mxu0 0
        %1125 = vmatpush1.bf16.msra.mxu0 %v1036
        %1126 = vmatprep.subr.bf16.mxu0 0
        %1127 = vmatpush1.bf16.msra.mxu0 %v1037
        %1128 = vmatprep.subr.bf16.mxu0 0
        %1129 = vmatpush1.bf16.msra.mxu0 %v1038
        %1130 = vmatprep.subr.bf16.mxu0 0
        %1131 = vmatpush1.bf16.msra.mxu0 %v1039
        %1132 = vmatprep.subr.bf16.mxu0 0
        %1133 = vmatpush1.bf16.msra.mxu0 %v1040
        %1134 = vmatprep.subr.bf16.mxu0 0
        %1135 = vmatpush1.bf16.msra.mxu0 %v1041
        %1136 = vmatprep.subr.bf16.mxu0 0
        %1137 = vmatpush1.bf16.msra.mxu0 %v1042
        %1138 = vmatprep.subr.bf16.mxu0 0
        %1139 = vmatpush1.bf16.msra.mxu0 %v1043
        %1140 = vmatprep.subr.bf16.mxu0 0
        %1141 = vmatpush1.bf16.msra.mxu0 %v1044
        %1142 = vmatprep.subr.bf16.mxu0 0
        %1143 = vmatpush1.bf16.msra.mxu0 %v1045
        %1144 = vmatprep.subr.bf16.mxu0 0
        %1145 = vmatpush1.bf16.msra.mxu0 %v1046
        %1146 = vmatprep.subr.bf16.mxu0 0
        %1147 = vmatpush1.bf16.msra.mxu0 %v1047
        %1148 = vmatprep.subr.bf16.mxu0 0
        %1149 = vmatpush1.bf16.msra.mxu0 %v1048
        %1150 = vmatprep.subr.bf16.mxu0 0
        %1151 = vmatpush1.bf16.msra.mxu0 %v1049
        %1152 = vmatprep.subr.bf16.mxu0 0
        %1153 = vmatpush1.bf16.msra.mxu0 %v1050
        %1154 = vmatprep.subr.bf16.mxu0 0
        %1155 = vmatpush1.bf16.msra.mxu0 %v1051
        %1156 = vmatprep.mubr.bf16.mxu0 %v820
        %1157 = vmatmul.mubr.bf16.gmra.mrb[0].mxu0 %v819
        %v1158 = vpop.f32.mrb[0].mxu0
        %v1159 = vadd.f32 %v1119, %v1158
        %v1160 = vpop.f32.mrb[0].mxu0
        %v1161 = vpop.f32.mrb[0].mxu0
        %v1162 = vpop.f32.mrb[0].mxu0
        %1163 = vdwg.mxu0
        %1164 = vst [vmem:[%s275] sm:$0xff] %v1159
      $region48: #{local_critic_forward.7} parent=39 // pred_fallthru
        _
      %p1165 = scmp.lt.s32.totalorder %s20, 0
      %s1166 = scalar_select %p1165, %s20, 0
      %s1167 = smul.addr %s1166, 8
      %s1168 = scalar_lea.vmem %s5, %s1167
      // Predicated region
      $region49: #{local_critic_forward.7} parent=39 // pred_check
        %p1169 = pneg %p163
      $region50: #{local_critic_forward.7} parent=39 // pred_check_branch
        %1171 = sbr.rel (%p1169) target = $region52
      $region51: #{local_critic_forward.7} parent=39 // pred_region
        _
      $region52: #{local_critic_forward.7} parent=39 // pred_fallthru
        _
      // Predicated region
      $region53: #{local_critic_forward.7} parent=39 // pred_check
        %p1172 = pneg %p163
      $region54: #{local_critic_forward.7} parent=39 // pred_check_branch
        %1174 = sbr.rel (%p1172) target = $region56
      $region55: #{local_critic_forward.7} parent=39 // pred_region
        %p1175 = scmp.lt.s32.totalorder %s20, 0
        %s1176 = scalar_select %p1175, %s20, 0
        %s1177 = smul.addr %s1176, 8
        %s1178 = scalar_lea.vmem %s5, %s1177
      $region56: #{local_critic_forward.7} parent=39 // pred_fallthru
        _
    $region40: #{local_critic_forward.7} parent=5 // pred_fallthru
      _
    %p1179 = scmp.le.s32.totalorder 2, %s11
    // Predicated region
    $region57: #{local_critic_forward.7} parent=5 // pred_check
      %p1180 = pneg %p1179
    $region58: #{local_critic_forward.7} parent=5 // pred_check_branch
      %1182 = sbr.rel (%p1180) target = $region60
    $region59: #{local_critic_forward.7} parent=5 // pred_region
      %s1183 = ssub.s32 %s11, 2
    $region60: #{local_critic_forward.7} parent=5 // pred_fallthru
      _
  $region6: #{local_critic_forward.7} parent=0 // loop_footer
    %s15 = sadd.s32 1, %s11
  $region7: #{local_critic_forward.7} parent=0 // loop_footer_branch
    %10 = sbr.rel target = $region3
  $region8: #{local_critic_forward.7} parent=0 // loop_exit
    _

</llo_original>
